<compile_context>
chip_gen: v7x
topology: tpu7x:2x2x1
jax: 0.10.0
libtpu: 0.0.40
codegen_flags: <defaults>
</compile_context>

<pallas_src>
import math
import functools

import numpy as np
import jax
import jax.numpy as jnp
from jax.experimental import pallas as pl
from jax.experimental.pallas import tpu as pltpu


def _sine_half_kernel(embed_ref, inv_ref, phase_ref, pos_ref):
    # embed_ref : (1, 1, 1, L) f32  -- y_embed (half 0) or x_embed (half 1), one batch
    # inv_ref   : (tile_feats, 1)   f32, 1 / dim_t for this channel tile
    # phase_ref : (tile_feats, 1)   f32, 0 (even channel) or pi/2 (odd channel)
    # pos_ref   : (1, tile_feats, L) output block (full H*W on the lane axis)
    e = embed_ref[0, 0]                                           # (1, L)
    pos_ref[0] = jnp.sin(e * inv_ref[...] + phase_ref[...]).astype(pos_ref.dtype)


def _sine_full_kernel(embed_ref, inv_ref, phase_ref, pos_ref, *, num_feats):
    # Fallback path (num_feats has no 8/16-aligned divisor): one batch per step,
    # output block covers the full (C, L) extent (always a legal block shape).
    # embed_ref: (1, 2, 1, L); inv/phase: (num_feats, 1); pos_ref: (1, 2*num_feats, L)
    inv = inv_ref[...]
    ph = phase_ref[...]
    y = embed_ref[0, 0]                                           # (1, L)
    x = embed_ref[0, 1]                                           # (1, L)
    # y half first, then x half — never both intermediates live at once.
    pos_ref[0, :num_feats, :] = jnp.sin(y * inv + ph).astype(pos_ref.dtype)
    pos_ref[0, num_feats:, :] = jnp.sin(x * inv + ph).astype(pos_ref.dtype)


def _pick_tile_feats(num_feats, L, out_itemsize, align, target_bytes=4 << 20):
    """Largest `align`-aligned divisor of num_feats whose (tile_feats, L) output
    block stays under ~target_bytes (comfortable with double buffering on every
    generation, including v7x's 64 MiB VMEM).  Returns None if no aligned
    divisor exists (caller falls back to a full-(C, L) block per batch)."""
    cands = [d for d in range(num_feats, 0, -1)
             if num_feats % d == 0 and d % align == 0]
    if not cands:
        return None
    for d in cands:                                # descending: biggest that fits
        if d * L * out_itemsize <= target_bytes:
            return d
    return cands[-1]                               # smallest aligned divisor


def position_embedding_sine(mask, *, num_feats=128, temperature=10000,
                            normalize=True, scale=2 * math.pi, eps=1e-6,
                            offset=-0.5, out_dtype=jnp.float32):
    """mask: (B, H, W) bool, True = padding.  Returns (B, 2*num_feats, H, W)."""
    # `offset` accepted for API parity; the reference forward never applies it.
    B, H, W = mask.shape
    L = H * W
    C = 2 * num_feats

    # ---- Cheap O(B*H*W) prep in plain XLA: cumulative sums + normalization.
    # Adds only 2*B*L*4 bytes of kernel input reads (~1/C of the output write)
    # while removing every matmul / reduction from the kernel. ----
    nm = jnp.logical_not(mask).astype(jnp.float32)
    y_embed = jnp.cumsum(nm, axis=1)
    x_embed = jnp.cumsum(nm, axis=2)
    if normalize:
        y_embed = y_embed / (y_embed[:, -1:, :] + eps) * scale
        x_embed = x_embed / (x_embed[:, :, -1:] + eps) * scale
    # (B, 2, 1, L): [:, 0] = flattened y_embed, [:, 1] = flattened x_embed.
    embed = jnp.stack([y_embed, x_embed], axis=1).reshape(B, 2, 1, L)

    # ---- Trace-time constants: 1/dim_t and the parity phase.
    # sin(x + pi/2) == cos(x) reproduces torch's interleaved sin/cos with a
    # single transcendental per element, no selects, no in-kernel pow/divide.
    j = np.arange(num_feats, dtype=np.int64)
    inv_np = 1.0 / np.power(float(temperature),
                            2.0 * (j // 2).astype(np.float64) / float(num_feats))
    phase_np = (j % 2).astype(np.float64) * (np.pi / 2.0)
    inv_dim_t = jnp.asarray(inv_np.reshape(num_feats, 1).astype(np.float32))
    phase = jnp.asarray(phase_np.reshape(num_feats, 1).astype(np.float32))

    out_itemsize = jnp.dtype(out_dtype).itemsize
    align = 16 if out_itemsize < 4 else 8          # packed (16,128) tiling for bf16
    tile_feats = _pick_tile_feats(num_feats, L, out_itemsize, align)

    cost = pl.CostEstimate(
        flops=int(2 * B * C * L),                  # one mul + one add per element
        transcendentals=int(B * C * L),            # one sin per output element
        bytes_accessed=int(4 * B * 2 * L + B * C * L * out_itemsize))

    if tile_feats is not None:
        n_ct = num_feats // tile_feats
        pos_flat = pl.pallas_call(
            _sine_half_kernel,
            out_shape=jax.ShapeDtypeStruct((B, C, L), out_dtype),
            grid=(B, 2, n_ct),                     # >= 2 parallel steps (v7x: 2 TCs)
            in_specs=[
                pl.BlockSpec((1, 1, 1, L), lambda b, h, c: (b, h, 0, 0)),
                pl.BlockSpec((tile_feats, 1), lambda b, h, c: (c, 0)),
                pl.BlockSpec((tile_feats, 1), lambda b, h, c: (c, 0)),
            ],
            out_specs=pl.BlockSpec((1, tile_feats, L),
                                   lambda b, h, c: (b, h * n_ct + c, 0)),
            compiler_params=pltpu.CompilerParams(
                dimension_semantics=("parallel", "parallel", "parallel"),
                vmem_limit_bytes=32 << 20),
            cost_estimate=cost,
        )(embed, inv_dim_t, phase)
    else:
        # Fallback for num_feats with no 8/16-aligned divisor.
        kernel = functools.partial(_sine_full_kernel, num_feats=num_feats)
        pos_flat = pl.pallas_call(
            kernel,
            out_shape=jax.ShapeDtypeStruct((B, C, L), out_dtype),
            grid=(B,),
            in_specs=[
                pl.BlockSpec((1, 2, 1, L), lambda b: (b, 0, 0, 0)),
                pl.BlockSpec((num_feats, 1), lambda b: (0, 0)),
                pl.BlockSpec((num_feats, 1), lambda b: (0, 0)),
            ],
            out_specs=pl.BlockSpec((1, C, L), lambda b: (b, 0, 0)),
            compiler_params=pltpu.CompilerParams(
                dimension_semantics=("parallel",),
                vmem_limit_bytes=32 << 20),
            cost_estimate=cost,
        )(embed, inv_dim_t, phase)

    return pos_flat.reshape(B, C, H, W)            # free metadata reshape to NCHW


def _reference(mask, num_feats, temperature, normalize, scale, eps):
    """Pure-JAX transliteration of the torch forward, for verification."""
    nm = (~mask).astype(jnp.float32)
    y_embed = jnp.cumsum(nm, axis=1)
    x_embed = jnp.cumsum(nm, axis=2)
    if normalize:
        y_embed = y_embed / (y_embed[:, -1:, :] + eps) * scale
        x_embed = x_embed / (x_embed[:, :, -1:] + eps) * scale
    dim_t = jnp.arange(num_feats, dtype=jnp.float32)
    dim_t = temperature ** (2 * (dim_t // 2) / num_feats)
    pos_x = x_embed[:, :, :, None] / dim_t
    pos_y = y_embed[:, :, :, None] / dim_t
    B, H, W = mask.shape
    pos_x = jnp.stack((jnp.sin(pos_x[..., 0::2]), jnp.cos(pos_x[..., 1::2])),
                      axis=4).reshape(B, H, W, -1)
    pos_y = jnp.stack((jnp.sin(pos_y[..., 0::2]), jnp.cos(pos_y[..., 1::2])),
                      axis=4).reshape(B, H, W, -1)
    return jnp.concatenate((pos_y, pos_x), axis=3).transpose(0, 3, 1, 2)


def _make_mask(key, B, H, W):
    kh, kw = jax.random.split(key)
    valid_h = jax.random.randint(kh, (B,), max(1, H // 2), H + 1)
    valid_w = jax.random.randint(kw, (B,), max(1, W // 2), W + 1)
    hh = jnp.arange(H)[None, :, None]
    ww = jnp.arange(W)[None, None, :]
    return (hh >= valid_h[:, None, None]) | (ww >= valid_w[:, None, None])


if __name__ == "__main__":
    key = jax.random.PRNGKey(0)

    cases = [
        dict(B=2, H=16, W=16, num_feats=128),   # module-default channels, L = 256
        dict(B=1, H=10, W=12, num_feats=64),    # L < 128, B=1 (still >= 2 grid steps)
        dict(B=1, H=8,  W=8,  num_feats=20),    # fallback path (no aligned divisor)
    ]
    for i, c in enumerate(cases):
        k = jax.random.fold_in(key, i)
        mask = _make_mask(k, c["B"], c["H"], c["W"])
        pos = jax.block_until_ready(
            position_embedding_sine(mask, num_feats=c["num_feats"]))
        ref = _reference(mask, c["num_feats"], 10000, True, 2 * math.pi, 1e-6)
        assert pos.shape == (c["B"], 2 * c["num_feats"], c["H"], c["W"]), pos.shape
        err = float(jnp.max(jnp.abs(pos - ref)))
        assert err < 1e-4, err

    # bf16 output path (16-aligned channel tiles, halves HBM write traffic).
    mask = _make_mask(jax.random.fold_in(key, 100), 2, 16, 16)
    pos_bf16 = jax.block_until_ready(
        position_embedding_sine(mask, num_feats=128, out_dtype=jnp.bfloat16))
    ref = _reference(mask, 128, 10000, True, 2 * math.pi, 1e-6)
    err = float(jnp.max(jnp.abs(pos_bf16.astype(jnp.float32) - ref)))
    assert err < 2e-2, err

    print("KERNEL_OK")
</pallas_src>

<mosaic_0001>
module attributes {stable_mosaic.version = 11 : i64} {
  func.func @_sine_half_kernel(%arg0: i32, %arg1: i32, %arg2: i32, %arg3: memref<1x1x1x256xf32, #tpu.memory_space<vmem>>, %arg4: memref<128x1xf32, #tpu.memory_space<vmem>>, %arg5: memref<128x1xf32, #tpu.memory_space<vmem>>, %arg6: memref<1x128x256xf32, #tpu.memory_space<vmem>>) attributes {dimension_semantics = [#tpu.dimension_semantics<parallel>, #tpu.dimension_semantics<parallel>, #tpu.dimension_semantics<parallel>], iteration_bounds = array<i64: 2, 2, 1>, scalar_prefetch = 0 : i64, scratch_operands = 0 : i64, tpu.core_type = #tpu.core_type<tc>, window_params = [{transform_indices = @transform_0, window_bounds = array<i64: 1, 1, 1, 256>}, {transform_indices = @transform_1, window_bounds = array<i64: 128, 1>}, {transform_indices = @transform_2, window_bounds = array<i64: 128, 1>}, {transform_indices = @transform_3, window_bounds = array<i64: 1, 128, 256>}]} {
    %c0 = arith.constant 0 : index
    %c0_0 = arith.constant 0 : index
    %c0_1 = arith.constant 0 : index
    %c0_2 = arith.constant 0 : index
    %0 = vector.load %arg3[%c0, %c0_0, %c0_1, %c0_2] : memref<1x1x1x256xf32, #tpu.memory_space<vmem>>, vector<1x1x1x256xf32>
    %1 = vector.shape_cast %0 : vector<1x1x1x256xf32> to vector<1x256xf32>
    %c0_3 = arith.constant 0 : index
    %c0_4 = arith.constant 0 : index
    %2 = vector.load %arg4[%c0_3, %c0_4] : memref<128x1xf32, #tpu.memory_space<vmem>>, vector<128x1xf32>
    %3 = vector.broadcast %1 : vector<1x256xf32> to vector<128x256xf32>
    %4 = vector.broadcast %2 : vector<128x1xf32> to vector<128x256xf32>
    %5 = arith.mulf %3, %4 : vector<128x256xf32>
    %c0_5 = arith.constant 0 : index
    %c0_6 = arith.constant 0 : index
    %6 = vector.load %arg5[%c0_5, %c0_6] : memref<128x1xf32, #tpu.memory_space<vmem>>, vector<128x1xf32>
    %7 = vector.broadcast %6 : vector<128x1xf32> to vector<128x256xf32>
    %8 = arith.addf %5, %7 : vector<128x256xf32>
    %9 = math.sin %8 : vector<128x256xf32>
    %c0_7 = arith.constant 0 : index
    %c0_8 = arith.constant 0 : index
    %c0_9 = arith.constant 0 : index
    %10 = vector.load %arg6[%c0_7, %c0_8, %c0_9] : memref<1x128x256xf32, #tpu.memory_space<vmem>>, vector<1x128x256xf32>
    %11 = vector.shape_cast %10 : vector<1x128x256xf32> to vector<128x256xf32>
    %12 = vector.shape_cast %9 : vector<128x256xf32> to vector<1x128x256xf32>
    tpu.vector_store %arg6[%c0_7, %c0_8, %c0_9], %12 {strides = array<i32>} : memref<1x128x256xf32, #tpu.memory_space<vmem>>, vector<1x128x256xf32>,
    return
  }
  func.func @transform_0(%arg0: i32, %arg1: i32, %arg2: i32) -> (i32, i32, i32, i32) {
    %c0_i32 = arith.constant 0 : i32
    %c0_i32_0 = arith.constant 0 : i32
    %c0_i32_1 = arith.constant 0 : i32
    return %arg0, %arg1, %c0_i32, %c0_i32_0 : i32, i32, i32, i32
  }
  func.func @transform_1(%arg0: i32, %arg1: i32, %arg2: i32) -> (i32, i32) {
    %c0_i32 = arith.constant 0 : i32
    %c0_i32_0 = arith.constant 0 : i32
    return %arg2, %c0_i32 : i32, i32
  }
  func.func @transform_2(%arg0: i32, %arg1: i32, %arg2: i32) -> (i32, i32) {
    %c0_i32 = arith.constant 0 : i32
    %c0_i32_0 = arith.constant 0 : i32
    return %arg2, %c0_i32 : i32, i32
  }
  func.func @transform_3(%arg0: i32, %arg1: i32, %arg2: i32) -> (i32, i32, i32) {
    %c1_i32 = arith.constant 1 : i32
    %0 = arith.muli %arg1, %c1_i32 : i32
    %1 = arith.addi %0, %arg2 : i32
    %c0_i32 = arith.constant 0 : i32
    %c0_i32_0 = arith.constant 0 : i32
    return %arg0, %1, %c0_i32 : i32, i32, i32
  }
}

</mosaic_0001>

<llo_original>
// kernel: tpu_custom_call.1
$region0: #{tpu_custom_call.1}
  #allocation0 [shape = 'u32[]', space=smem, size = 0x4, offset = 0x4, fixed_abs, tag = 'smem constant byte address 0x4 - core index']
  #allocation1 [shape = 'u32[144,128]{1,0:T(1,128)}', space=vmem, size = 0x12000, scoped, tag = 'internal scratch']
  %s0 = inlined_call_operand.vmem [shape: f32[2,2,1,256], index: 0, kind: input, shape index: {}]
  %s1 = inlined_call_operand.vmem [shape: f32[128,1], index: 1, kind: input, shape index: {}]
  %s2 = inlined_call_operand.vmem [shape: f32[128,1], index: 2, kind: input, shape index: {}]
  %s3 = inlined_call_operand.hbm [shape: f32[2,256,256], index: 3, kind: output, shape index: {}]
  %s4 = sld [smem:[#allocation0]]
  $region45: #{tpu_custom_call.1} parent=0
    _
  %s6 = ssub.s32 1, %s4
  %s7 = scalar_select 0, %s6, %s4
  $region1: #{tpu_custom_call.1} parent=0
    #allocation2 [shape = 'u8[262144]{0}', space=vmem, size = 0x40000, scoped, tag = 'output window, operand 0']
    #allocation3 [shape = 's32[2]{0}', space=sflag, size = 0x8, scoped, tag = 'scoped memory for tpu_custom_call.1']
    %8 = vsyncpa [#allocation3], 0
    %s9 = scalar_lea.sflag [#allocation3], 1
    %10 = vsyncpa %s9, 0
    loop: start=0, step=1, limit=6
    $region2: #{tpu_custom_call.1} parent=1 // loop_pre_header
      _
    $region3: #{tpu_custom_call.1} parent=1 // loop_header
      %s12 = sphi 0, %s16
      %p13 = scmp.ge.s32.totalorder %s12, 6
      %s19 = sphi 0, %s38
      %s20 = sphi 0, %s34
      %s21 = sphi 0, %s30
      %s22 = sphi 0, %s19
      %s23 = sphi 0, %s20
      %s24 = sphi 0, %s21
      %s25 = sphi 0, %s22
      %s26 = sphi 0, %s23
      %s27 = sphi 0, %s24
      %s43 = sphi 0, %s45
      %s46 = sphi 0, %s43
      %s47 = sphi 0, %s46
      %s63 = sphi 0, %s47
      %s69 = sphi 0, %s71
      %s72 = sphi 0, %s69
      %s73 = sphi 0, %s72
      %s89 = sphi 0, %s73
      %s95 = sphi 0, %s97
      %s98 = sphi 0, %s95
      %s99 = sphi 0, %s98
      %s115 = sphi 0, %s99
      %s125 = sphi 0, %s127
      %s128 = sphi 0, %s125
      %s129 = sphi 0, %s128
      %s145 = sphi 0, %s129
    $region4: #{tpu_custom_call.1} parent=1 // loop_header_branch
      %15 = sbr.rel (%p13) target = $region8
    $region5: #{tpu_custom_call.1} parent=1 // loop_body
      %s17 = ssub.s32 %s12, 1
      %s18 = ssub.s32 %s12, 2
      %s28 = sadd.s32 1, %s21
      %p29 = scmp.ge.s32.totalorder %s28, 1
      %s30 = scalar_select %p29, 0, %s28
      %s31 = sadd.s32 1, %s20
      %s32 = scalar_select %p29, %s31, %s20
      %p33 = scmp.ge.s32.totalorder %s32, 2
      %s34 = scalar_select %p33, 0, %s32
      %s35 = sadd.s32 1, %s19
      %s36 = scalar_select %p33, %s35, %s19
      %p37 = scmp.ge.s32.totalorder %s36, 2
      %s38 = scalar_select %p37, 0, %s36
      %s39 = ssub.s32 %s19, %s38
      %s40 = ssub.s32 %s20, %s34
      %s41 = sor.u32 %s39, %s40
      %p42 = scmp.eq.s32.totalorder %s41, 0
      %s44 = sadd.s32 %s43, 1
      %s45 = scalar_select %p42, %s43, %s44
      %p48 = pneg %p42
      %p49 = scmp.eq.s32.totalorder %s12, 3
      %p50 = por %p48, %p49
      %p51 = scmp.ne.s32.totalorder %s43, %s46
      %p52 = scmp.eq.s32.totalorder %s12, 0
      %p53 = por %p51, %p52
      %p54 = scmp.ne.s32.totalorder %s43, %s46
      %p55 = scmp.eq.s32.totalorder %s17, 3
      %p56 = por %p54, %p55
      %p57 = scmp.ne.s32.totalorder %s46, %s47
      %p58 = scmp.eq.s32.totalorder %s17, 0
      %p59 = por %p57, %p58
      %p60 = scmp.ne.s32.totalorder %s46, %s47
      %p61 = scmp.eq.s32.totalorder %s18, 3
      %p62 = por %p60, %p61
      %p64 = scmp.ne.s32.totalorder %s47, %s63
      %p65 = scmp.eq.s32.totalorder %s18, 0
      %p66 = por %p64, %p65
      %s67 = ssub.s32 %s21, %s30
      %p68 = scmp.eq.s32.totalorder %s67, 0
      %s70 = sadd.s32 %s69, 1
      %s71 = scalar_select %p68, %s69, %s70
      %p74 = pneg %p68
      %p75 = scmp.eq.s32.totalorder %s12, 3
      %p76 = por %p74, %p75
      %p77 = scmp.ne.s32.totalorder %s69, %s72
      %p78 = scmp.eq.s32.totalorder %s12, 0
      %p79 = por %p77, %p78
      %p80 = scmp.ne.s32.totalorder %s69, %s72
      %p81 = scmp.eq.s32.totalorder %s17, 3
      %p82 = por %p80, %p81
      %p83 = scmp.ne.s32.totalorder %s72, %s73
      %p84 = scmp.eq.s32.totalorder %s17, 0
      %p85 = por %p83, %p84
      %p86 = scmp.ne.s32.totalorder %s72, %s73
      %p87 = scmp.eq.s32.totalorder %s18, 3
      %p88 = por %p86, %p87
      %p90 = scmp.ne.s32.totalorder %s73, %s89
      %p91 = scmp.eq.s32.totalorder %s18, 0
      %p92 = por %p90, %p91
      %s93 = ssub.s32 %s21, %s30
      %p94 = scmp.eq.s32.totalorder %s93, 0
      %s96 = sadd.s32 %s95, 1
      %s97 = scalar_select %p94, %s95, %s96
      %p100 = pneg %p94
      %p101 = scmp.eq.s32.totalorder %s12, 3
      %p102 = por %p100, %p101
      %p103 = scmp.ne.s32.totalorder %s95, %s98
      %p104 = scmp.eq.s32.totalorder %s12, 0
      %p105 = por %p103, %p104
      %p106 = scmp.ne.s32.totalorder %s95, %s98
      %p107 = scmp.eq.s32.totalorder %s17, 3
      %p108 = por %p106, %p107
      %p109 = scmp.ne.s32.totalorder %s98, %s99
      %p110 = scmp.eq.s32.totalorder %s17, 0
      %p111 = por %p109, %p110
      %p112 = scmp.ne.s32.totalorder %s98, %s99
      %p113 = scmp.eq.s32.totalorder %s18, 3
      %p114 = por %p112, %p113
      %p116 = scmp.ne.s32.totalorder %s99, %s115
      %p117 = scmp.eq.s32.totalorder %s18, 0
      %p118 = por %p116, %p117
      %s119 = sadd.s32 %s20, %s21
      %s120 = sadd.s32 %s34, %s30
      %s121 = ssub.s32 %s19, %s38
      %s122 = ssub.s32 %s119, %s120
      %s123 = sor.u32 %s121, %s122
      %p124 = scmp.eq.s32.totalorder %s123, 0
      %s126 = sadd.s32 %s125, 1
      %s127 = scalar_select %p124, %s125, %s126
      %p130 = pneg %p124
      %p131 = scmp.eq.s32.totalorder %s12, 3
      %p132 = por %p130, %p131
      %p133 = scmp.ne.s32.totalorder %s125, %s128
      %p134 = scmp.eq.s32.totalorder %s12, 0
      %p135 = por %p133, %p134
      %p136 = scmp.ne.s32.totalorder %s125, %s128
      %p137 = scmp.eq.s32.totalorder %s17, 3
      %p138 = por %p136, %p137
      %p139 = scmp.ne.s32.totalorder %s128, %s129
      %p140 = scmp.eq.s32.totalorder %s17, 0
      %p141 = por %p139, %p140
      %p142 = scmp.ne.s32.totalorder %s128, %s129
      %p143 = scmp.eq.s32.totalorder %s18, 3
      %p144 = por %p142, %p143
      %p146 = scmp.ne.s32.totalorder %s129, %s145
      %p147 = scmp.eq.s32.totalorder %s18, 0
      %p148 = por %p146, %p147
      %p149 = scmp.le.s32.totalorder 1, %s12
      %p150 = scmp.lt.s32.totalorder %s12, 5
      %p151 = pnand %p149, %p150
      %p152 = pneg %p151
      // Predicated region
      $region9: #{tpu_custom_call.1} parent=5 // pred_check
        _
      $region10: #{tpu_custom_call.1} parent=5 // pred_check_branch
        %154 = sbr.rel (%p151) target = $region12
      $region11: #{tpu_custom_call.1} parent=5 // pred_region
        %s155 = ssub.s32 %s12, 1
        // Predicated region
        $region13: #{tpu_custom_call.1} parent=11 // pred_check
          %p156 = pneg %p85
        $region14: #{tpu_custom_call.1} parent=11 // pred_check_branch
          %158 = sbr.rel (%p156) target = $region16
        $region15: #{tpu_custom_call.1} parent=11 // pred_region
          %s159 = smul.u32 16, %s24
          %p160 = scmp.lt.s32.totalorder %s159, 15
          %s161 = scalar_select %p160, %s159, 15
          %s162 = smul.addr %s161, 8
          %s163 = scalar_lea.vmem %s1, %s162
          %s164 = smul.u32 16, %s24
        $region16: #{tpu_custom_call.1} parent=11 // pred_fallthru
          _
        // Predicated region
        $region17: #{tpu_custom_call.1} parent=11 // pred_check
          %p165 = pneg %p111
        $region18: #{tpu_custom_call.1} parent=11 // pred_check_branch
          %167 = sbr.rel (%p165) target = $region20
        $region19: #{tpu_custom_call.1} parent=11 // pred_region
          %s168 = smul.u32 16, %s24
          %p169 = scmp.lt.s32.totalorder %s168, 15
          %s170 = scalar_select %p169, %s168, 15
          %s171 = smul.addr %s170, 8
          %s172 = scalar_lea.vmem %s2, %s171
          %s173 = smul.u32 16, %s24
        $region20: #{tpu_custom_call.1} parent=11 // pred_fallthru
          _
      $region12: #{tpu_custom_call.1} parent=5 // pred_fallthru
        _
      %p174 = scmp.lt.s32.totalorder %s12, 4
      // Predicated region
      $region21: #{tpu_custom_call.1} parent=5 // pred_check
        %p175 = pneg %p174
      $region22: #{tpu_custom_call.1} parent=5 // pred_check_branch
        %177 = sbr.rel (%p175) target = $region24
      $region23: #{tpu_custom_call.1} parent=5 // pred_region
        // Predicated region
        $region25: #{tpu_custom_call.1} parent=23 // pred_check
          %p178 = pneg %p53
        $region26: #{tpu_custom_call.1} parent=23 // pred_check_branch
          %180 = sbr.rel (%p178) target = $region28
        $region27: #{tpu_custom_call.1} parent=23 // pred_region
          %p181 = scmp.lt.s32.totalorder %s19, 1
          %s182 = scalar_select %p181, %s19, 1
          %p183 = scmp.lt.s32.totalorder %s20, 1
          %s184 = scalar_select %p183, %s20, 1
          %s185 = smul.addr %s184, 2
          %s186 = smul.addr %s182, 4
          %s187 = sadd.s32 %s185, %s186
          %s188 = scalar_lea.vmem %s0, %s187
        $region28: #{tpu_custom_call.1} parent=23 // pred_fallthru
          _
      $region24: #{tpu_custom_call.1} parent=5 // pred_fallthru
        _
      %p189 = scmp.le.s32.totalorder 1, %s12
      %p190 = scmp.lt.s32.totalorder %s12, 5
      %p191 = pnand %p189, %p190
      %p192 = pneg %p191
      // Predicated region
      $region29: #{tpu_custom_call.1} parent=5 // pred_check
        _
      $region30: #{tpu_custom_call.1} parent=5 // pred_check_branch
        %194 = sbr.rel (%p191) target = $region32
      $region31: #{tpu_custom_call.1} parent=5 // pred_region
        %s195 = ssub.s32 %s12, 1
        %p196 = scmp.lt.s32.totalorder %s22, 1
        %s197 = scalar_select %p196, %s22, 1
        %p198 = scmp.lt.s32.totalorder %s23, 1
        %s199 = scalar_select %p198, %s23, 1
        %s200 = smul.addr %s199, 2
        %s201 = smul.addr %s197, 4
        %s202 = sadd.s32 %s200, %s201
        %s203 = scalar_lea.vmem %s0, %s202
        %p204 = pneg %p59
        %p205 = pneg %p56
        %s206 = smul.u32 16, %s24
        %p207 = scmp.lt.s32.totalorder %s206, 15
        %s208 = scalar_select %p207, %s206, 15
        %s209 = smul.addr %s208, 8
        %s210 = scalar_lea.vmem %s1, %s209
        %p211 = pneg %p85
        %p212 = pneg %p82
        %s213 = smul.u32 16, %s24
        %p214 = scmp.lt.s32.totalorder %s213, 15
        %s215 = scalar_select %p214, %s213, 15
        %s216 = smul.addr %s215, 8
        %s217 = scalar_lea.vmem %s2, %s216
        %p218 = pneg %p111
        %p219 = pneg %p108
        %p220 = pneg %p141
        %p221 = pneg %p138
        %s222 = sand.u32 %s128, 1
        %s223 = scalar_lea.sflag [#allocation3], %s222
        %s224 = sand.u32 %s128, 1
        %s225 = smul.addr %s224, 256
        %s226 = scalar_lea.vmem [#allocation2], %s225
        %p227 = scmp.lt.s32.totalorder %s22, 1
        %s228 = scalar_select %p227, %s22, 1
        %p229 = scmp.lt.s32.totalorder %s23, 1
        %s230 = scalar_select %p229, %s23, 1
        %s231 = smul.addr %s230, 2
        %s232 = smul.addr %s228, 4
        %s233 = sadd.s32 %s231, %s232
        %s234 = scalar_lea.vmem %s0, %s233
        %s235 = smul.u32 16, %s24
        %p236 = scmp.lt.s32.totalorder %s235, 15
        %s237 = scalar_select %p236, %s235, 15
        %s238 = smul.addr %s237, 8
        %s239 = scalar_lea.vmem %s1, %s238
        %s240 = smul.u32 16, %s24
        %s241 = smul.u32 16, %s24
        %p242 = scmp.lt.s32.totalorder %s241, 15
        %s243 = scalar_select %p242, %s241, 15
        %s244 = smul.addr %s243, 8
        %s245 = scalar_lea.vmem %s2, %s244
        %s246 = smul.u32 16, %s24
        %s247 = sadd.s32 %s23, %s24
        %s248 = smul.u32 16, %s247
        %v249 = vld [vmem:[%s234] sm:$0x3]
        %v250 = vld [vmem:[%s239] sm:$0xff]
        %v251 = vld [vmem:[%s239 + $0x8] sm:$0xff]
        %v252 = vld [vmem:[%s239 + $0x10] sm:$0xff]
        %v253 = vld [vmem:[%s239 + $0x18] sm:$0xff]
        %v254 = vld [vmem:[%s239 + $0x20] sm:$0xff]
        %v255 = vld [vmem:[%s239 + $0x28] sm:$0xff]
        %v256 = vld [vmem:[%s239 + $0x30] sm:$0xff]
        %v257 = vld [vmem:[%s239 + $0x38] sm:$0xff]
        %v258 = vld [vmem:[%s239 + $0x40] sm:$0xff]
        %v259 = vld [vmem:[%s239 + $0x48] sm:$0xff]
        %v260 = vld [vmem:[%s239 + $0x50] sm:$0xff]
        %v261 = vld [vmem:[%s239 + $0x58] sm:$0xff]
        %v262 = vld [vmem:[%s239 + $0x60] sm:$0xff]
        %v263 = vld [vmem:[%s239 + $0x68] sm:$0xff]
        %v264 = vld [vmem:[%s239 + $0x70] sm:$0xff]
        %v265 = vld [vmem:[%s239 + $0x78] sm:$0xff]
        %v267 = vlaneseq
        %v268 = vshrl.u32 %v267, 7
        %v269 = vsub.s32 0, %v268
        %v270 = vrot.slane %v249, %v269
        %v271 = vlaneseq
        %v272 = vshrl.u32 %v271, 7
        %v273 = vsub.s32 1, %v272
        %v274 = vrot.slane %v249, %v273
        %278 = vset.pattern.permute.xlu0 0
        %279 = vperm.xlu0 %278, %v250
        %v280 = vpop.permute.xlu0 %279
        %283 = vset.pattern.permute.xlu0 0
        %284 = vperm.xlu0 %283, %v251
        %v285 = vpop.permute.xlu0 %284
        %288 = vset.pattern.permute.xlu0 0
        %289 = vperm.xlu0 %288, %v252
        %v290 = vpop.permute.xlu0 %289
        %293 = vset.pattern.permute.xlu0 0
        %294 = vperm.xlu0 %293, %v253
        %v295 = vpop.permute.xlu0 %294
        %298 = vset.pattern.permute.xlu0 0
        %299 = vperm.xlu0 %298, %v254
        %v300 = vpop.permute.xlu0 %299
        %303 = vset.pattern.permute.xlu0 0
        %304 = vperm.xlu0 %303, %v255
        %v305 = vpop.permute.xlu0 %304
        %308 = vset.pattern.permute.xlu0 0
        %309 = vperm.xlu0 %308, %v256
        %v310 = vpop.permute.xlu0 %309
        %313 = vset.pattern.permute.xlu0 0
        %314 = vperm.xlu0 %313, %v257
        %v315 = vpop.permute.xlu0 %314
        %318 = vset.pattern.permute.xlu0 0
        %319 = vperm.xlu0 %318, %v258
        %v320 = vpop.permute.xlu0 %319
        %323 = vset.pattern.permute.xlu0 0
        %324 = vperm.xlu0 %323, %v259
        %v325 = vpop.permute.xlu0 %324
        %328 = vset.pattern.permute.xlu0 0
        %329 = vperm.xlu0 %328, %v260
        %v330 = vpop.permute.xlu0 %329
        %333 = vset.pattern.permute.xlu0 0
        %334 = vperm.xlu0 %333, %v261
        %v335 = vpop.permute.xlu0 %334
        %338 = vset.pattern.permute.xlu0 0
        %339 = vperm.xlu0 %338, %v262
        %v340 = vpop.permute.xlu0 %339
        %343 = vset.pattern.permute.xlu0 0
        %344 = vperm.xlu0 %343, %v263
        %v345 = vpop.permute.xlu0 %344
        %348 = vset.pattern.permute.xlu0 0
        %349 = vperm.xlu0 %348, %v264
        %v350 = vpop.permute.xlu0 %349
        %353 = vset.pattern.permute.xlu0 0
        %354 = vperm.xlu0 %353, %v265
        %v355 = vpop.permute.xlu0 %354
        %v357 = vmul.f32 %v270, %v280
        %v358 = vmul.f32 %v274, %v280
        %v359 = vmul.f32 %v270, %v285
        %v360 = vmul.f32 %v274, %v285
        %v361 = vmul.f32 %v270, %v290
        %v362 = vmul.f32 %v274, %v290
        %v363 = vmul.f32 %v270, %v295
        %v364 = vmul.f32 %v274, %v295
        %v365 = vmul.f32 %v270, %v300
        %v366 = vmul.f32 %v274, %v300
        %v367 = vmul.f32 %v270, %v305
        %v368 = vmul.f32 %v274, %v305
        %v369 = vmul.f32 %v270, %v310
        %v370 = vmul.f32 %v274, %v310
        %v371 = vmul.f32 %v270, %v315
        %v372 = vmul.f32 %v274, %v315
        %v373 = vmul.f32 %v270, %v320
        %v374 = vmul.f32 %v274, %v320
        %v375 = vmul.f32 %v270, %v325
        %v376 = vmul.f32 %v274, %v325
        %v377 = vmul.f32 %v270, %v330
        %v378 = vmul.f32 %v274, %v330
        %v379 = vmul.f32 %v270, %v335
        %v380 = vmul.f32 %v274, %v335
        %v381 = vmul.f32 %v270, %v340
        %v382 = vmul.f32 %v274, %v340
        %v383 = vmul.f32 %v270, %v345
        %v384 = vmul.f32 %v274, %v345
        %v385 = vmul.f32 %v270, %v350
        %v386 = vmul.f32 %v274, %v350
        %v387 = vmul.f32 %v270, %v355
        %v388 = vmul.f32 %v274, %v355
        %v389 = vld [vmem:[%s245] sm:$0xff]
        %v390 = vld [vmem:[%s245 + $0x8] sm:$0xff]
        %v391 = vld [vmem:[%s245 + $0x10] sm:$0xff]
        %v392 = vld [vmem:[%s245 + $0x18] sm:$0xff]
        %v393 = vld [vmem:[%s245 + $0x20] sm:$0xff]
        %v394 = vld [vmem:[%s245 + $0x28] sm:$0xff]
        %v395 = vld [vmem:[%s245 + $0x30] sm:$0xff]
        %v396 = vld [vmem:[%s245 + $0x38] sm:$0xff]
        %v397 = vld [vmem:[%s245 + $0x40] sm:$0xff]
        %v398 = vld [vmem:[%s245 + $0x48] sm:$0xff]
        %v399 = vld [vmem:[%s245 + $0x50] sm:$0xff]
        %v400 = vld [vmem:[%s245 + $0x58] sm:$0xff]
        %v401 = vld [vmem:[%s245 + $0x60] sm:$0xff]
        %v402 = vld [vmem:[%s245 + $0x68] sm:$0xff]
        %v403 = vld [vmem:[%s245 + $0x70] sm:$0xff]
        %v404 = vld [vmem:[%s245 + $0x78] sm:$0xff]
        %406 = vset.pattern.permute.xlu0 0
        %407 = vperm.xlu0 %406, %v389
        %v408 = vpop.permute.xlu0 %407
        %411 = vset.pattern.permute.xlu0 0
        %412 = vperm.xlu0 %411, %v390
        %v413 = vpop.permute.xlu0 %412
        %416 = vset.pattern.permute.xlu0 0
        %417 = vperm.xlu0 %416, %v391
        %v418 = vpop.permute.xlu0 %417
        %421 = vset.pattern.permute.xlu0 0
        %422 = vperm.xlu0 %421, %v392
        %v423 = vpop.permute.xlu0 %422
        %426 = vset.pattern.permute.xlu0 0
        %427 = vperm.xlu0 %426, %v393
        %v428 = vpop.permute.xlu0 %427
        %431 = vset.pattern.permute.xlu0 0
        %432 = vperm.xlu0 %431, %v394
        %v433 = vpop.permute.xlu0 %432
        %436 = vset.pattern.permute.xlu0 0
        %437 = vperm.xlu0 %436, %v395
        %v438 = vpop.permute.xlu0 %437
        %441 = vset.pattern.permute.xlu0 0
        %442 = vperm.xlu0 %441, %v396
        %v443 = vpop.permute.xlu0 %442
        %446 = vset.pattern.permute.xlu0 0
        %447 = vperm.xlu0 %446, %v397
        %v448 = vpop.permute.xlu0 %447
        %451 = vset.pattern.permute.xlu0 0
        %452 = vperm.xlu0 %451, %v398
        %v453 = vpop.permute.xlu0 %452
        %456 = vset.pattern.permute.xlu0 0
        %457 = vperm.xlu0 %456, %v399
        %v458 = vpop.permute.xlu0 %457
        %461 = vset.pattern.permute.xlu0 0
        %462 = vperm.xlu0 %461, %v400
        %v463 = vpop.permute.xlu0 %462
        %466 = vset.pattern.permute.xlu0 0
        %467 = vperm.xlu0 %466, %v401
        %v468 = vpop.permute.xlu0 %467
        %471 = vset.pattern.permute.xlu0 0
        %472 = vperm.xlu0 %471, %v402
        %v473 = vpop.permute.xlu0 %472
        %476 = vset.pattern.permute.xlu0 0
        %477 = vperm.xlu0 %476, %v403
        %v478 = vpop.permute.xlu0 %477
        %481 = vset.pattern.permute.xlu0 0
        %482 = vperm.xlu0 %481, %v404
        %v483 = vpop.permute.xlu0 %482
        %v485 = vadd.f32 %v357, %v408
        %v486 = vadd.f32 %v358, %v408
        %v487 = vadd.f32 %v359, %v413
        %v488 = vadd.f32 %v360, %v413
        %v489 = vadd.f32 %v361, %v418
        %v490 = vadd.f32 %v362, %v418
        %v491 = vadd.f32 %v363, %v423
        %v492 = vadd.f32 %v364, %v423
        %v493 = vadd.f32 %v365, %v428
        %v494 = vadd.f32 %v366, %v428
        %v495 = vadd.f32 %v367, %v433
        %v496 = vadd.f32 %v368, %v433
        %v497 = vadd.f32 %v369, %v438
        %v498 = vadd.f32 %v370, %v438
        %v499 = vadd.f32 %v371, %v443
        %v500 = vadd.f32 %v372, %v443
        %v501 = vadd.f32 %v373, %v448
        %v502 = vadd.f32 %v374, %v448
        %v503 = vadd.f32 %v375, %v453
        %v504 = vadd.f32 %v376, %v453
        %v505 = vadd.f32 %v377, %v458
        %v506 = vadd.f32 %v378, %v458
        %v507 = vadd.f32 %v379, %v463
        %v508 = vadd.f32 %v380, %v463
        %v509 = vadd.f32 %v381, %v468
        %v510 = vadd.f32 %v382, %v468
        %v511 = vadd.f32 %v383, %v473
        %v512 = vadd.f32 %v384, %v473
        %v513 = vadd.f32 %v385, %v478
        %v514 = vadd.f32 %v386, %v478
        %v515 = vadd.f32 %v387, %v483
        %v516 = vadd.f32 %v388, %v483
        %v517 = vand.u32 2147483647, %v485
        %vm518 = vcmp.le.f32.partialorder %v517, 0.7853982
        %vm519 = vcmp.lt.s32.totalorder %v485, 0
        %v520 = vand.u32 %v485, 2139095040
        %v521 = vshrl.u32 %v520, 23
        %v522 = vsub.s32 %v521, 127
        %v523 = vand.u32 2147483647, %v485
        %v524 = vand.u32 %v523, 8388607
        %v525 = vor.u32 %v524, 8388608
        %v526 = vsub.s32 0, %v525
        %v527 = vadd.s32 %v522, 1
        %vm528 = vcmp.gt.s32.totalorder %v527, 0
        %v529 = vsel %vm528, %v527, 0
        %v530 = vshrl.u32 %v529, 5
        %v531 = vand.u32 %v529, 31
        %v532 = vsub.s32 32, %v531
        %v533 = vshrl.u32 683565275, %v532
        %v534 = vshll.u32 683565275, %v531
        %v535 = vshrl.u32 2475754826, %v532
        %v536 = vor.u32 %v534, %v535
        %v537 = vshll.u32 2475754826, %v531
        %v538 = vshrl.u32 2131351028, %v532
        %v539 = vor.u32 %v537, %v538
        %v540 = vshll.u32 2131351028, %v531
        %v541 = vshrl.u32 2102212464, %v532
        %v542 = vor.u32 %v540, %v541
        %v543 = vshll.u32 2102212464, %v531
        %v544 = vshrl.u32 920167782, %v532
        %v545 = vor.u32 %v543, %v544
        %v546 = vshll.u32 920167782, %v531
        %v547 = vshrl.u32 1326507024, %v532
        %v548 = vor.u32 %v546, %v547
        %vm549 = vcmp.lt.s32.totalorder %v530, 1
        %vm550 = vcmp.lt.s32.totalorder %v530, 2
        %vm551 = vcmp.lt.s32.totalorder %v530, 3
        %vm552 = vcmp.lt.s32.totalorder %v530, 4
        %v553 = vsel %vm549, %v533, %v536
        %v554 = vsel %vm552, %v542, 2102212464
        %v555 = vsel %vm551, %v539, %v554
        %v556 = vsel %vm550, %v553, %v555
        %v557 = vsel %vm549, %v536, %v539
        %v558 = vsel %vm552, %v545, 920167782
        %v559 = vsel %vm551, %v542, %v558
        %v560 = vsel %vm550, %v557, %v559
        %v561 = vsel %vm549, %v539, %v542
        %v562 = vsel %vm552, %v548, 1326507024
        %v563 = vsel %vm551, %v545, %v562
        %v564 = vsel %vm550, %v561, %v563
        %v565 = vshll.u32 %v525, 8
        %v566 = vmul.u32.u64.compose %v565, %v564
        %v567 = vextract.low.u32 %v566
        %v568 = vextract.high.u32 %v566
        %v569 = vmul.u32.u64.compose %v565, %v560
        %v570 = vextract.low.u32 %v569
        %v571 = vextract.high.u32 %v569
        %v572 = vmul.u32 %v565, %v556
        %v573 = vadd.s32 %v568, %v570
        %vm574 = vc.u32 %v568, %v570
        %v575 = vadd.s32 %v571, 1
        %v576 = vsel %vm574, %v575, %v571
        %v577 = vadd.s32 %v572, %v576
        %v578 = vadd.s32 %v577, 536870912
        %v579 = vshrl.u32 %v578, 30
        %v580 = vshll.u32 %v579, 30
        %v581 = vsub.s32 %v577, %v580
        %vm582 = vcmp.lt.s32.totalorder %v581, 0
        %v583 = vsub.s32 0, %v581
        %v584 = vsel %vm582, %v583, %v581
        %v585 = vclz %v584
        %v586 = vsub.s32 %v585, 2
        %vm587 = vcmp.gt.s32.totalorder 0, %v586
        %v588 = vsel %vm587, 0, %v586
        %v589 = vsub.s32 32, %v588
        %v590 = vshll.u32 %v581, %v588
        %v591 = vshrl.u32 %v573, %v589
        %v592 = vor.u32 %v590, %v591
        %v593 = vsub.s32 4294967266, %v588
        %v594 = vadd.s32 %v593, 127
        %v595 = vshll.u32 %v594, 23
        %v596 = vor.u32 4788187, %v595
        %v597 = vand.u32 2147483647, %v596
        %v599 = vcvt.s32.f32 %v592
        %v600 = vmul.f32 %v599, %v597
        %v601 = vxor.u32 %v600, 2147483648
        %v602 = vsel %vm519, %v601, %v600
        %v603 = vsub.s32 4, %v579
        %v604 = vsel %vm519, %v603, %v579
        %v605 = vsel %vm518, %v485, %v602
        %v606 = vsel %vm518, 0, %v604
        %v607 = vcosq.f32.pop %v605
        %v608 = vsinq.f32.pop %v605
        %vm609 = vweird.f32 %v485
        %v610 = vadd.s32 %v606, 3
        %v611 = vand.u32 %v610, 3
        %vm612 = vcmp.lt.s32.totalorder %v611, 2
        %vm613 = vcmp.eq.s32.totalorder %v611, 0
        %v614 = vxor.u32 %v608, 2147483648
        %v615 = vsel %vm613, %v607, %v614
        %vm616 = vcmp.eq.s32.totalorder %v611, 2
        %v617 = vxor.u32 %v607, 2147483648
        %v618 = vsel %vm616, %v617, %v608
        %v619 = vsel %vm612, %v615, %v618
        %v620 = vsel %vm609, nan, %v619
        %v621 = vand.u32 2147483647, %v486
        %vm622 = vcmp.le.f32.partialorder %v621, 0.7853982
        %vm623 = vcmp.lt.s32.totalorder %v486, 0
        %v624 = vand.u32 %v486, 2139095040
        %v625 = vshrl.u32 %v624, 23
        %v626 = vsub.s32 %v625, 127
        %v627 = vand.u32 2147483647, %v486
        %v628 = vand.u32 %v627, 8388607
        %v629 = vor.u32 %v628, 8388608
        %v630 = vsub.s32 0, %v629
        %v631 = vadd.s32 %v626, 1
        %vm632 = vcmp.gt.s32.totalorder %v631, 0
        %v633 = vsel %vm632, %v631, 0
        %v634 = vshrl.u32 %v633, 5
        %v635 = vand.u32 %v633, 31
        %v636 = vsub.s32 32, %v635
        %v637 = vshrl.u32 683565275, %v636
        %v638 = vshll.u32 683565275, %v635
        %v639 = vshrl.u32 2475754826, %v636
        %v640 = vor.u32 %v638, %v639
        %v641 = vshll.u32 2475754826, %v635
        %v642 = vshrl.u32 2131351028, %v636
        %v643 = vor.u32 %v641, %v642
        %v644 = vshll.u32 2131351028, %v635
        %v645 = vshrl.u32 2102212464, %v636
        %v646 = vor.u32 %v644, %v645
        %v647 = vshll.u32 2102212464, %v635
        %v648 = vshrl.u32 920167782, %v636
        %v649 = vor.u32 %v647, %v648
        %v650 = vshll.u32 920167782, %v635
        %v651 = vshrl.u32 1326507024, %v636
        %v652 = vor.u32 %v650, %v651
        %vm653 = vcmp.lt.s32.totalorder %v634, 1
        %vm654 = vcmp.lt.s32.totalorder %v634, 2
        %vm655 = vcmp.lt.s32.totalorder %v634, 3
        %vm656 = vcmp.lt.s32.totalorder %v634, 4
        %v657 = vsel %vm653, %v637, %v640
        %v658 = vsel %vm656, %v646, 2102212464
        %v659 = vsel %vm655, %v643, %v658
        %v660 = vsel %vm654, %v657, %v659
        %v661 = vsel %vm653, %v640, %v643
        %v662 = vsel %vm656, %v649, 920167782
        %v663 = vsel %vm655, %v646, %v662
        %v664 = vsel %vm654, %v661, %v663
        %v665 = vsel %vm653, %v643, %v646
        %v666 = vsel %vm656, %v652, 1326507024
        %v667 = vsel %vm655, %v649, %v666
        %v668 = vsel %vm654, %v665, %v667
        %v669 = vshll.u32 %v629, 8
        %v670 = vmul.u32.u64.compose %v669, %v668
        %v671 = vextract.low.u32 %v670
        %v672 = vextract.high.u32 %v670
        %v673 = vmul.u32.u64.compose %v669, %v664
        %v674 = vextract.low.u32 %v673
        %v675 = vextract.high.u32 %v673
        %v676 = vmul.u32 %v669, %v660
        %v677 = vadd.s32 %v672, %v674
        %vm678 = vc.u32 %v672, %v674
        %v679 = vadd.s32 %v675, 1
        %v680 = vsel %vm678, %v679, %v675
        %v681 = vadd.s32 %v676, %v680
        %v682 = vadd.s32 %v681, 536870912
        %v683 = vshrl.u32 %v682, 30
        %v684 = vshll.u32 %v683, 30
        %v685 = vsub.s32 %v681, %v684
        %vm686 = vcmp.lt.s32.totalorder %v685, 0
        %v687 = vsub.s32 0, %v685
        %v688 = vsel %vm686, %v687, %v685
        %v689 = vclz %v688
        %v690 = vsub.s32 %v689, 2
        %vm691 = vcmp.gt.s32.totalorder 0, %v690
        %v692 = vsel %vm691, 0, %v690
        %v693 = vsub.s32 32, %v692
        %v694 = vshll.u32 %v685, %v692
        %v695 = vshrl.u32 %v677, %v693
        %v696 = vor.u32 %v694, %v695
        %v697 = vsub.s32 4294967266, %v692
        %v698 = vadd.s32 %v697, 127
        %v699 = vshll.u32 %v698, 23
        %v700 = vor.u32 4788187, %v699
        %v701 = vand.u32 2147483647, %v700
        %v703 = vcvt.s32.f32 %v696
        %v704 = vmul.f32 %v703, %v701
        %v705 = vxor.u32 %v704, 2147483648
        %v706 = vsel %vm623, %v705, %v704
        %v707 = vsub.s32 4, %v683
        %v708 = vsel %vm623, %v707, %v683
        %v709 = vsel %vm622, %v486, %v706
        %v710 = vsel %vm622, 0, %v708
        %v711 = vcosq.f32.pop %v709
        %v712 = vsinq.f32.pop %v709
        %vm713 = vweird.f32 %v486
        %v714 = vadd.s32 %v710, 3
        %v715 = vand.u32 %v714, 3
        %vm716 = vcmp.lt.s32.totalorder %v715, 2
        %vm717 = vcmp.eq.s32.totalorder %v715, 0
        %v718 = vxor.u32 %v712, 2147483648
        %v719 = vsel %vm717, %v711, %v718
        %vm720 = vcmp.eq.s32.totalorder %v715, 2
        %v721 = vxor.u32 %v711, 2147483648
        %v722 = vsel %vm720, %v721, %v712
        %v723 = vsel %vm716, %v719, %v722
        %v724 = vsel %vm713, nan, %v723
        %v725 = vand.u32 2147483647, %v487
        %vm726 = vcmp.le.f32.partialorder %v725, 0.7853982
        %vm727 = vcmp.lt.s32.totalorder %v487, 0
        %v728 = vand.u32 %v487, 2139095040
        %v729 = vshrl.u32 %v728, 23
        %v730 = vsub.s32 %v729, 127
        %v731 = vand.u32 2147483647, %v487
        %v732 = vand.u32 %v731, 8388607
        %v733 = vor.u32 %v732, 8388608
        %v734 = vsub.s32 0, %v733
        %v735 = vadd.s32 %v730, 1
        %vm736 = vcmp.gt.s32.totalorder %v735, 0
        %v737 = vsel %vm736, %v735, 0
        %v738 = vshrl.u32 %v737, 5
        %v739 = vand.u32 %v737, 31
        %v740 = vsub.s32 32, %v739
        %v741 = vshrl.u32 683565275, %v740
        %v742 = vshll.u32 683565275, %v739
        %v743 = vshrl.u32 2475754826, %v740
        %v744 = vor.u32 %v742, %v743
        %v745 = vshll.u32 2475754826, %v739
        %v746 = vshrl.u32 2131351028, %v740
        %v747 = vor.u32 %v745, %v746
        %v748 = vshll.u32 2131351028, %v739
        %v749 = vshrl.u32 2102212464, %v740
        %v750 = vor.u32 %v748, %v749
        %v751 = vshll.u32 2102212464, %v739
        %v752 = vshrl.u32 920167782, %v740
        %v753 = vor.u32 %v751, %v752
        %v754 = vshll.u32 920167782, %v739
        %v755 = vshrl.u32 1326507024, %v740
        %v756 = vor.u32 %v754, %v755
        %vm757 = vcmp.lt.s32.totalorder %v738, 1
        %vm758 = vcmp.lt.s32.totalorder %v738, 2
        %vm759 = vcmp.lt.s32.totalorder %v738, 3
        %vm760 = vcmp.lt.s32.totalorder %v738, 4
        %v761 = vsel %vm757, %v741, %v744
        %v762 = vsel %vm760, %v750, 2102212464
        %v763 = vsel %vm759, %v747, %v762
        %v764 = vsel %vm758, %v761, %v763
        %v765 = vsel %vm757, %v744, %v747
        %v766 = vsel %vm760, %v753, 920167782
        %v767 = vsel %vm759, %v750, %v766
        %v768 = vsel %vm758, %v765, %v767
        %v769 = vsel %vm757, %v747, %v750
        %v770 = vsel %vm760, %v756, 1326507024
        %v771 = vsel %vm759, %v753, %v770
        %v772 = vsel %vm758, %v769, %v771
        %v773 = vshll.u32 %v733, 8
        %v774 = vmul.u32.u64.compose %v773, %v772
        %v775 = vextract.low.u32 %v774
        %v776 = vextract.high.u32 %v774
        %v777 = vmul.u32.u64.compose %v773, %v768
        %v778 = vextract.low.u32 %v777
        %v779 = vextract.high.u32 %v777
        %v780 = vmul.u32 %v773, %v764
        %v781 = vadd.s32 %v776, %v778
        %vm782 = vc.u32 %v776, %v778
        %v783 = vadd.s32 %v779, 1
        %v784 = vsel %vm782, %v783, %v779
        %v785 = vadd.s32 %v780, %v784
        %v786 = vadd.s32 %v785, 536870912
        %v787 = vshrl.u32 %v786, 30
        %v788 = vshll.u32 %v787, 30
        %v789 = vsub.s32 %v785, %v788
        %vm790 = vcmp.lt.s32.totalorder %v789, 0
        %v791 = vsub.s32 0, %v789
        %v792 = vsel %vm790, %v791, %v789
        %v793 = vclz %v792
        %v794 = vsub.s32 %v793, 2
        %vm795 = vcmp.gt.s32.totalorder 0, %v794
        %v796 = vsel %vm795, 0, %v794
        %v797 = vsub.s32 32, %v796
        %v798 = vshll.u32 %v789, %v796
        %v799 = vshrl.u32 %v781, %v797
        %v800 = vor.u32 %v798, %v799
        %v801 = vsub.s32 4294967266, %v796
        %v802 = vadd.s32 %v801, 127
        %v803 = vshll.u32 %v802, 23
        %v804 = vor.u32 4788187, %v803
        %v805 = vand.u32 2147483647, %v804
        %v807 = vcvt.s32.f32 %v800
        %v808 = vmul.f32 %v807, %v805
        %v809 = vxor.u32 %v808, 2147483648
        %v810 = vsel %vm727, %v809, %v808
        %v811 = vsub.s32 4, %v787
        %v812 = vsel %vm727, %v811, %v787
        %v813 = vsel %vm726, %v487, %v810
        %v814 = vsel %vm726, 0, %v812
        %v815 = vcosq.f32.pop %v813
        %v816 = vsinq.f32.pop %v813
        %vm817 = vweird.f32 %v487
        %v818 = vadd.s32 %v814, 3
        %v819 = vand.u32 %v818, 3
        %vm820 = vcmp.lt.s32.totalorder %v819, 2
        %vm821 = vcmp.eq.s32.totalorder %v819, 0
        %v822 = vxor.u32 %v816, 2147483648
        %v823 = vsel %vm821, %v815, %v822
        %vm824 = vcmp.eq.s32.totalorder %v819, 2
        %v825 = vxor.u32 %v815, 2147483648
        %v826 = vsel %vm824, %v825, %v816
        %v827 = vsel %vm820, %v823, %v826
        %v828 = vsel %vm817, nan, %v827
        %v829 = vand.u32 2147483647, %v488
        %vm830 = vcmp.le.f32.partialorder %v829, 0.7853982
        %vm831 = vcmp.lt.s32.totalorder %v488, 0
        %v832 = vand.u32 %v488, 2139095040
        %v833 = vshrl.u32 %v832, 23
        %v834 = vsub.s32 %v833, 127
        %v835 = vand.u32 2147483647, %v488
        %v836 = vand.u32 %v835, 8388607
        %v837 = vor.u32 %v836, 8388608
        %v838 = vsub.s32 0, %v837
        %v839 = vadd.s32 %v834, 1
        %vm840 = vcmp.gt.s32.totalorder %v839, 0
        %v841 = vsel %vm840, %v839, 0
        %v842 = vshrl.u32 %v841, 5
        %v843 = vand.u32 %v841, 31
        %v844 = vsub.s32 32, %v843
        %v845 = vshrl.u32 683565275, %v844
        %v846 = vshll.u32 683565275, %v843
        %v847 = vshrl.u32 2475754826, %v844
        %v848 = vor.u32 %v846, %v847
        %v849 = vshll.u32 2475754826, %v843
        %v850 = vshrl.u32 2131351028, %v844
        %v851 = vor.u32 %v849, %v850
        %v852 = vshll.u32 2131351028, %v843
        %v853 = vshrl.u32 2102212464, %v844
        %v854 = vor.u32 %v852, %v853
        %v855 = vshll.u32 2102212464, %v843
        %v856 = vshrl.u32 920167782, %v844
        %v857 = vor.u32 %v855, %v856
        %v858 = vshll.u32 920167782, %v843
        %v859 = vshrl.u32 1326507024, %v844
        %v860 = vor.u32 %v858, %v859
        %vm861 = vcmp.lt.s32.totalorder %v842, 1
        %vm862 = vcmp.lt.s32.totalorder %v842, 2
        %vm863 = vcmp.lt.s32.totalorder %v842, 3
        %vm864 = vcmp.lt.s32.totalorder %v842, 4
        %v865 = vsel %vm861, %v845, %v848
        %v866 = vsel %vm864, %v854, 2102212464
        %v867 = vsel %vm863, %v851, %v866
        %v868 = vsel %vm862, %v865, %v867
        %v869 = vsel %vm861, %v848, %v851
        %v870 = vsel %vm864, %v857, 920167782
        %v871 = vsel %vm863, %v854, %v870
        %v872 = vsel %vm862, %v869, %v871
        %v873 = vsel %vm861, %v851, %v854
        %v874 = vsel %vm864, %v860, 1326507024
        %v875 = vsel %vm863, %v857, %v874
        %v876 = vsel %vm862, %v873, %v875
        %v877 = vshll.u32 %v837, 8
        %v878 = vmul.u32.u64.compose %v877, %v876
        %v879 = vextract.low.u32 %v878
        %v880 = vextract.high.u32 %v878
        %v881 = vmul.u32.u64.compose %v877, %v872
        %v882 = vextract.low.u32 %v881
        %v883 = vextract.high.u32 %v881
        %v884 = vmul.u32 %v877, %v868
        %v885 = vadd.s32 %v880, %v882
        %vm886 = vc.u32 %v880, %v882
        %v887 = vadd.s32 %v883, 1
        %v888 = vsel %vm886, %v887, %v883
        %v889 = vadd.s32 %v884, %v888
        %v890 = vadd.s32 %v889, 536870912
        %v891 = vshrl.u32 %v890, 30
        %v892 = vshll.u32 %v891, 30
        %v893 = vsub.s32 %v889, %v892
        %vm894 = vcmp.lt.s32.totalorder %v893, 0
        %v895 = vsub.s32 0, %v893
        %v896 = vsel %vm894, %v895, %v893
        %v897 = vclz %v896
        %v898 = vsub.s32 %v897, 2
        %vm899 = vcmp.gt.s32.totalorder 0, %v898
        %v900 = vsel %vm899, 0, %v898
        %v901 = vsub.s32 32, %v900
        %v902 = vshll.u32 %v893, %v900
        %v903 = vshrl.u32 %v885, %v901
        %v904 = vor.u32 %v902, %v903
        %v905 = vsub.s32 4294967266, %v900
        %v906 = vadd.s32 %v905, 127
        %v907 = vshll.u32 %v906, 23
        %v908 = vor.u32 4788187, %v907
        %v909 = vand.u32 2147483647, %v908
        %v911 = vcvt.s32.f32 %v904
        %v912 = vmul.f32 %v911, %v909
        %v913 = vxor.u32 %v912, 2147483648
        %v914 = vsel %vm831, %v913, %v912
        %v915 = vsub.s32 4, %v891
        %v916 = vsel %vm831, %v915, %v891
        %v917 = vsel %vm830, %v488, %v914
        %v918 = vsel %vm830, 0, %v916
        %v919 = vcosq.f32.pop %v917
        %v920 = vsinq.f32.pop %v917
        %vm921 = vweird.f32 %v488
        %v922 = vadd.s32 %v918, 3
        %v923 = vand.u32 %v922, 3
        %vm924 = vcmp.lt.s32.totalorder %v923, 2
        %vm925 = vcmp.eq.s32.totalorder %v923, 0
        %v926 = vxor.u32 %v920, 2147483648
        %v927 = vsel %vm925, %v919, %v926
        %vm928 = vcmp.eq.s32.totalorder %v923, 2
        %v929 = vxor.u32 %v919, 2147483648
        %v930 = vsel %vm928, %v929, %v920
        %v931 = vsel %vm924, %v927, %v930
        %v932 = vsel %vm921, nan, %v931
        %v933 = vand.u32 2147483647, %v489
        %vm934 = vcmp.le.f32.partialorder %v933, 0.7853982
        %vm935 = vcmp.lt.s32.totalorder %v489, 0
        %v936 = vand.u32 %v489, 2139095040
        %v937 = vshrl.u32 %v936, 23
        %v938 = vsub.s32 %v937, 127
        %v939 = vand.u32 2147483647, %v489
        %v940 = vand.u32 %v939, 8388607
        %v941 = vor.u32 %v940, 8388608
        %v942 = vsub.s32 0, %v941
        %v943 = vadd.s32 %v938, 1
        %vm944 = vcmp.gt.s32.totalorder %v943, 0
        %v945 = vsel %vm944, %v943, 0
        %v946 = vshrl.u32 %v945, 5
        %v947 = vand.u32 %v945, 31
        %v948 = vsub.s32 32, %v947
        %v949 = vshrl.u32 683565275, %v948
        %v950 = vshll.u32 683565275, %v947
        %v951 = vshrl.u32 2475754826, %v948
        %v952 = vor.u32 %v950, %v951
        %v953 = vshll.u32 2475754826, %v947
        %v954 = vshrl.u32 2131351028, %v948
        %v955 = vor.u32 %v953, %v954
        %v956 = vshll.u32 2131351028, %v947
        %v957 = vshrl.u32 2102212464, %v948
        %v958 = vor.u32 %v956, %v957
        %v959 = vshll.u32 2102212464, %v947
        %v960 = vshrl.u32 920167782, %v948
        %v961 = vor.u32 %v959, %v960
        %v962 = vshll.u32 920167782, %v947
        %v963 = vshrl.u32 1326507024, %v948
        %v964 = vor.u32 %v962, %v963
        %vm965 = vcmp.lt.s32.totalorder %v946, 1
        %vm966 = vcmp.lt.s32.totalorder %v946, 2
        %vm967 = vcmp.lt.s32.totalorder %v946, 3
        %vm968 = vcmp.lt.s32.totalorder %v946, 4
        %v969 = vsel %vm965, %v949, %v952
        %v970 = vsel %vm968, %v958, 2102212464
        %v971 = vsel %vm967, %v955, %v970
        %v972 = vsel %vm966, %v969, %v971
        %v973 = vsel %vm965, %v952, %v955
        %v974 = vsel %vm968, %v961, 920167782
        %v975 = vsel %vm967, %v958, %v974
        %v976 = vsel %vm966, %v973, %v975
        %v977 = vsel %vm965, %v955, %v958
        %v978 = vsel %vm968, %v964, 1326507024
        %v979 = vsel %vm967, %v961, %v978
        %v980 = vsel %vm966, %v977, %v979
        %v981 = vshll.u32 %v941, 8
        %v982 = vmul.u32.u64.compose %v981, %v980
        %v983 = vextract.low.u32 %v982
        %v984 = vextract.high.u32 %v982
        %v985 = vmul.u32.u64.compose %v981, %v976
        %v986 = vextract.low.u32 %v985
        %v987 = vextract.high.u32 %v985
        %v988 = vmul.u32 %v981, %v972
        %v989 = vadd.s32 %v984, %v986
        %vm990 = vc.u32 %v984, %v986
        %v991 = vadd.s32 %v987, 1
        %v992 = vsel %vm990, %v991, %v987
        %v993 = vadd.s32 %v988, %v992
        %v994 = vadd.s32 %v993, 536870912
        %v995 = vshrl.u32 %v994, 30
        %v996 = vshll.u32 %v995, 30
        %v997 = vsub.s32 %v993, %v996
        %vm998 = vcmp.lt.s32.totalorder %v997, 0
        %v999 = vsub.s32 0, %v997
        %v1000 = vsel %vm998, %v999, %v997
        %v1001 = vclz %v1000
        %v1002 = vsub.s32 %v1001, 2
        %vm1003 = vcmp.gt.s32.totalorder 0, %v1002
        %v1004 = vsel %vm1003, 0, %v1002
        %v1005 = vsub.s32 32, %v1004
        %v1006 = vshll.u32 %v997, %v1004
        %v1007 = vshrl.u32 %v989, %v1005
        %v1008 = vor.u32 %v1006, %v1007
        %v1009 = vsub.s32 4294967266, %v1004
        %v1010 = vadd.s32 %v1009, 127
        %v1011 = vshll.u32 %v1010, 23
        %v1012 = vor.u32 4788187, %v1011
        %v1013 = vand.u32 2147483647, %v1012
        %v1015 = vcvt.s32.f32 %v1008
        %v1016 = vmul.f32 %v1015, %v1013
        %v1017 = vxor.u32 %v1016, 2147483648
        %v1018 = vsel %vm935, %v1017, %v1016
        %v1019 = vsub.s32 4, %v995
        %v1020 = vsel %vm935, %v1019, %v995
        %v1021 = vsel %vm934, %v489, %v1018
        %v1022 = vsel %vm934, 0, %v1020
        %v1023 = vcosq.f32.pop %v1021
        %v1024 = vsinq.f32.pop %v1021
        %vm1025 = vweird.f32 %v489
        %v1026 = vadd.s32 %v1022, 3
        %v1027 = vand.u32 %v1026, 3
        %vm1028 = vcmp.lt.s32.totalorder %v1027, 2
        %vm1029 = vcmp.eq.s32.totalorder %v1027, 0
        %v1030 = vxor.u32 %v1024, 2147483648
        %v1031 = vsel %vm1029, %v1023, %v1030
        %vm1032 = vcmp.eq.s32.totalorder %v1027, 2
        %v1033 = vxor.u32 %v1023, 2147483648
        %v1034 = vsel %vm1032, %v1033, %v1024
        %v1035 = vsel %vm1028, %v1031, %v1034
        %v1036 = vsel %vm1025, nan, %v1035
        %v1037 = vand.u32 2147483647, %v490
        %vm1038 = vcmp.le.f32.partialorder %v1037, 0.7853982
        %vm1039 = vcmp.lt.s32.totalorder %v490, 0
        %v1040 = vand.u32 %v490, 2139095040
        %v1041 = vshrl.u32 %v1040, 23
        %v1042 = vsub.s32 %v1041, 127
        %v1043 = vand.u32 2147483647, %v490
        %v1044 = vand.u32 %v1043, 8388607
        %v1045 = vor.u32 %v1044, 8388608
        %v1046 = vsub.s32 0, %v1045
        %v1047 = vadd.s32 %v1042, 1
        %vm1048 = vcmp.gt.s32.totalorder %v1047, 0
        %v1049 = vsel %vm1048, %v1047, 0
        %v1050 = vshrl.u32 %v1049, 5
        %v1051 = vand.u32 %v1049, 31
        %v1052 = vsub.s32 32, %v1051
        %v1053 = vshrl.u32 683565275, %v1052
        %v1054 = vshll.u32 683565275, %v1051
        %v1055 = vshrl.u32 2475754826, %v1052
        %v1056 = vor.u32 %v1054, %v1055
        %v1057 = vshll.u32 2475754826, %v1051
        %v1058 = vshrl.u32 2131351028, %v1052
        %v1059 = vor.u32 %v1057, %v1058
        %v1060 = vshll.u32 2131351028, %v1051
        %v1061 = vshrl.u32 2102212464, %v1052
        %v1062 = vor.u32 %v1060, %v1061
        %v1063 = vshll.u32 2102212464, %v1051
        %v1064 = vshrl.u32 920167782, %v1052
        %v1065 = vor.u32 %v1063, %v1064
        %v1066 = vshll.u32 920167782, %v1051
        %v1067 = vshrl.u32 1326507024, %v1052
        %v1068 = vor.u32 %v1066, %v1067
        %vm1069 = vcmp.lt.s32.totalorder %v1050, 1
        %vm1070 = vcmp.lt.s32.totalorder %v1050, 2
        %vm1071 = vcmp.lt.s32.totalorder %v1050, 3
        %vm1072 = vcmp.lt.s32.totalorder %v1050, 4
        %v1073 = vsel %vm1069, %v1053, %v1056
        %v1074 = vsel %vm1072, %v1062, 2102212464
        %v1075 = vsel %vm1071, %v1059, %v1074
        %v1076 = vsel %vm1070, %v1073, %v1075
        %v1077 = vsel %vm1069, %v1056, %v1059
        %v1078 = vsel %vm1072, %v1065, 920167782
        %v1079 = vsel %vm1071, %v1062, %v1078
        %v1080 = vsel %vm1070, %v1077, %v1079
        %v1081 = vsel %vm1069, %v1059, %v1062
        %v1082 = vsel %vm1072, %v1068, 1326507024
        %v1083 = vsel %vm1071, %v1065, %v1082
        %v1084 = vsel %vm1070, %v1081, %v1083
        %v1085 = vshll.u32 %v1045, 8
        %v1086 = vmul.u32.u64.compose %v1085, %v1084
        %v1087 = vextract.low.u32 %v1086
        %v1088 = vextract.high.u32 %v1086
        %v1089 = vmul.u32.u64.compose %v1085, %v1080
        %v1090 = vextract.low.u32 %v1089
        %v1091 = vextract.high.u32 %v1089
        %v1092 = vmul.u32 %v1085, %v1076
        %v1093 = vadd.s32 %v1088, %v1090
        %vm1094 = vc.u32 %v1088, %v1090
        %v1095 = vadd.s32 %v1091, 1
        %v1096 = vsel %vm1094, %v1095, %v1091
        %v1097 = vadd.s32 %v1092, %v1096
        %v1098 = vadd.s32 %v1097, 536870912
        %v1099 = vshrl.u32 %v1098, 30
        %v1100 = vshll.u32 %v1099, 30
        %v1101 = vsub.s32 %v1097, %v1100
        %vm1102 = vcmp.lt.s32.totalorder %v1101, 0
        %v1103 = vsub.s32 0, %v1101
        %v1104 = vsel %vm1102, %v1103, %v1101
        %v1105 = vclz %v1104
        %v1106 = vsub.s32 %v1105, 2
        %vm1107 = vcmp.gt.s32.totalorder 0, %v1106
        %v1108 = vsel %vm1107, 0, %v1106
        %v1109 = vsub.s32 32, %v1108
        %v1110 = vshll.u32 %v1101, %v1108
        %v1111 = vshrl.u32 %v1093, %v1109
        %v1112 = vor.u32 %v1110, %v1111
        %v1113 = vsub.s32 4294967266, %v1108
        %v1114 = vadd.s32 %v1113, 127
        %v1115 = vshll.u32 %v1114, 23
        %v1116 = vor.u32 4788187, %v1115
        %v1117 = vand.u32 2147483647, %v1116
        %v1119 = vcvt.s32.f32 %v1112
        %v1120 = vmul.f32 %v1119, %v1117
        %v1121 = vxor.u32 %v1120, 2147483648
        %v1122 = vsel %vm1039, %v1121, %v1120
        %v1123 = vsub.s32 4, %v1099
        %v1124 = vsel %vm1039, %v1123, %v1099
        %v1125 = vsel %vm1038, %v490, %v1122
        %v1126 = vsel %vm1038, 0, %v1124
        %v1127 = vcosq.f32.pop %v1125
        %v1128 = vsinq.f32.pop %v1125
        %vm1129 = vweird.f32 %v490
        %v1130 = vadd.s32 %v1126, 3
        %v1131 = vand.u32 %v1130, 3
        %vm1132 = vcmp.lt.s32.totalorder %v1131, 2
        %vm1133 = vcmp.eq.s32.totalorder %v1131, 0
        %v1134 = vxor.u32 %v1128, 2147483648
        %v1135 = vsel %vm1133, %v1127, %v1134
        %vm1136 = vcmp.eq.s32.totalorder %v1131, 2
        %v1137 = vxor.u32 %v1127, 2147483648
        %v1138 = vsel %vm1136, %v1137, %v1128
        %v1139 = vsel %vm1132, %v1135, %v1138
        %v1140 = vsel %vm1129, nan, %v1139
        %v1141 = vand.u32 2147483647, %v491
        %vm1142 = vcmp.le.f32.partialorder %v1141, 0.7853982
        %vm1143 = vcmp.lt.s32.totalorder %v491, 0
        %v1144 = vand.u32 %v491, 2139095040
        %v1145 = vshrl.u32 %v1144, 23
        %v1146 = vsub.s32 %v1145, 127
        %v1147 = vand.u32 2147483647, %v491
        %v1148 = vand.u32 %v1147, 8388607
        %v1149 = vor.u32 %v1148, 8388608
        %v1150 = vsub.s32 0, %v1149
        %v1151 = vadd.s32 %v1146, 1
        %vm1152 = vcmp.gt.s32.totalorder %v1151, 0
        %v1153 = vsel %vm1152, %v1151, 0
        %v1154 = vshrl.u32 %v1153, 5
        %v1155 = vand.u32 %v1153, 31
        %v1156 = vsub.s32 32, %v1155
        %v1157 = vshrl.u32 683565275, %v1156
        %v1158 = vshll.u32 683565275, %v1155
        %v1159 = vshrl.u32 2475754826, %v1156
        %v1160 = vor.u32 %v1158, %v1159
        %v1161 = vshll.u32 2475754826, %v1155
        %v1162 = vshrl.u32 2131351028, %v1156
        %v1163 = vor.u32 %v1161, %v1162
        %v1164 = vshll.u32 2131351028, %v1155
        %v1165 = vshrl.u32 2102212464, %v1156
        %v1166 = vor.u32 %v1164, %v1165
        %v1167 = vshll.u32 2102212464, %v1155
        %v1168 = vshrl.u32 920167782, %v1156
        %v1169 = vor.u32 %v1167, %v1168
        %v1170 = vshll.u32 920167782, %v1155
        %v1171 = vshrl.u32 1326507024, %v1156
        %v1172 = vor.u32 %v1170, %v1171
        %vm1173 = vcmp.lt.s32.totalorder %v1154, 1
        %vm1174 = vcmp.lt.s32.totalorder %v1154, 2
        %vm1175 = vcmp.lt.s32.totalorder %v1154, 3
        %vm1176 = vcmp.lt.s32.totalorder %v1154, 4
        %v1177 = vsel %vm1173, %v1157, %v1160
        %v1178 = vsel %vm1176, %v1166, 2102212464
        %v1179 = vsel %vm1175, %v1163, %v1178
        %v1180 = vsel %vm1174, %v1177, %v1179
        %v1181 = vsel %vm1173, %v1160, %v1163
        %v1182 = vsel %vm1176, %v1169, 920167782
        %v1183 = vsel %vm1175, %v1166, %v1182
        %v1184 = vsel %vm1174, %v1181, %v1183
        %v1185 = vsel %vm1173, %v1163, %v1166
        %v1186 = vsel %vm1176, %v1172, 1326507024
        %v1187 = vsel %vm1175, %v1169, %v1186
        %v1188 = vsel %vm1174, %v1185, %v1187
        %v1189 = vshll.u32 %v1149, 8
        %v1190 = vmul.u32.u64.compose %v1189, %v1188
        %v1191 = vextract.low.u32 %v1190
        %v1192 = vextract.high.u32 %v1190
        %v1193 = vmul.u32.u64.compose %v1189, %v1184
        %v1194 = vextract.low.u32 %v1193
        %v1195 = vextract.high.u32 %v1193
        %v1196 = vmul.u32 %v1189, %v1180
        %v1197 = vadd.s32 %v1192, %v1194
        %vm1198 = vc.u32 %v1192, %v1194
        %v1199 = vadd.s32 %v1195, 1
        %v1200 = vsel %vm1198, %v1199, %v1195
        %v1201 = vadd.s32 %v1196, %v1200
        %v1202 = vadd.s32 %v1201, 536870912
        %v1203 = vshrl.u32 %v1202, 30
        %v1204 = vshll.u32 %v1203, 30
        %v1205 = vsub.s32 %v1201, %v1204
        %vm1206 = vcmp.lt.s32.totalorder %v1205, 0
        %v1207 = vsub.s32 0, %v1205
        %v1208 = vsel %vm1206, %v1207, %v1205
        %v1209 = vclz %v1208
        %v1210 = vsub.s32 %v1209, 2
        %vm1211 = vcmp.gt.s32.totalorder 0, %v1210
        %v1212 = vsel %vm1211, 0, %v1210
        %v1213 = vsub.s32 32, %v1212
        %v1214 = vshll.u32 %v1205, %v1212
        %v1215 = vshrl.u32 %v1197, %v1213
        %v1216 = vor.u32 %v1214, %v1215
        %v1217 = vsub.s32 4294967266, %v1212
        %v1218 = vadd.s32 %v1217, 127
        %v1219 = vshll.u32 %v1218, 23
        %v1220 = vor.u32 4788187, %v1219
        %v1221 = vand.u32 2147483647, %v1220
        %v1223 = vcvt.s32.f32 %v1216
        %v1224 = vmul.f32 %v1223, %v1221
        %v1225 = vxor.u32 %v1224, 2147483648
        %v1226 = vsel %vm1143, %v1225, %v1224
        %v1227 = vsub.s32 4, %v1203
        %v1228 = vsel %vm1143, %v1227, %v1203
        %v1229 = vsel %vm1142, %v491, %v1226
        %v1230 = vsel %vm1142, 0, %v1228
        %v1231 = vcosq.f32.pop %v1229
        %v1232 = vsinq.f32.pop %v1229
        %vm1233 = vweird.f32 %v491
        %v1234 = vadd.s32 %v1230, 3
        %v1235 = vand.u32 %v1234, 3
        %vm1236 = vcmp.lt.s32.totalorder %v1235, 2
        %vm1237 = vcmp.eq.s32.totalorder %v1235, 0
        %v1238 = vxor.u32 %v1232, 2147483648
        %v1239 = vsel %vm1237, %v1231, %v1238
        %vm1240 = vcmp.eq.s32.totalorder %v1235, 2
        %v1241 = vxor.u32 %v1231, 2147483648
        %v1242 = vsel %vm1240, %v1241, %v1232
        %v1243 = vsel %vm1236, %v1239, %v1242
        %v1244 = vsel %vm1233, nan, %v1243
        %v1245 = vand.u32 2147483647, %v492
        %vm1246 = vcmp.le.f32.partialorder %v1245, 0.7853982
        %vm1247 = vcmp.lt.s32.totalorder %v492, 0
        %v1248 = vand.u32 %v492, 2139095040
        %v1249 = vshrl.u32 %v1248, 23
        %v1250 = vsub.s32 %v1249, 127
        %v1251 = vand.u32 2147483647, %v492
        %v1252 = vand.u32 %v1251, 8388607
        %v1253 = vor.u32 %v1252, 8388608
        %v1254 = vsub.s32 0, %v1253
        %v1255 = vadd.s32 %v1250, 1
        %vm1256 = vcmp.gt.s32.totalorder %v1255, 0
        %v1257 = vsel %vm1256, %v1255, 0
        %v1258 = vshrl.u32 %v1257, 5
        %v1259 = vand.u32 %v1257, 31
        %v1260 = vsub.s32 32, %v1259
        %v1261 = vshrl.u32 683565275, %v1260
        %v1262 = vshll.u32 683565275, %v1259
        %v1263 = vshrl.u32 2475754826, %v1260
        %v1264 = vor.u32 %v1262, %v1263
        %v1265 = vshll.u32 2475754826, %v1259
        %v1266 = vshrl.u32 2131351028, %v1260
        %v1267 = vor.u32 %v1265, %v1266
        %v1268 = vshll.u32 2131351028, %v1259
        %v1269 = vshrl.u32 2102212464, %v1260
        %v1270 = vor.u32 %v1268, %v1269
        %v1271 = vshll.u32 2102212464, %v1259
        %v1272 = vshrl.u32 920167782, %v1260
        %v1273 = vor.u32 %v1271, %v1272
        %v1274 = vshll.u32 920167782, %v1259
        %v1275 = vshrl.u32 1326507024, %v1260
        %v1276 = vor.u32 %v1274, %v1275
        %vm1277 = vcmp.lt.s32.totalorder %v1258, 1
        %vm1278 = vcmp.lt.s32.totalorder %v1258, 2
        %vm1279 = vcmp.lt.s32.totalorder %v1258, 3
        %vm1280 = vcmp.lt.s32.totalorder %v1258, 4
        %v1281 = vsel %vm1277, %v1261, %v1264
        %v1282 = vsel %vm1280, %v1270, 2102212464
        %v1283 = vsel %vm1279, %v1267, %v1282
        %v1284 = vsel %vm1278, %v1281, %v1283
        %v1285 = vsel %vm1277, %v1264, %v1267
        %v1286 = vsel %vm1280, %v1273, 920167782
        %v1287 = vsel %vm1279, %v1270, %v1286
        %v1288 = vsel %vm1278, %v1285, %v1287
        %v1289 = vsel %vm1277, %v1267, %v1270
        %v1290 = vsel %vm1280, %v1276, 1326507024
        %v1291 = vsel %vm1279, %v1273, %v1290
        %v1292 = vsel %vm1278, %v1289, %v1291
        %v1293 = vshll.u32 %v1253, 8
        %v1294 = vmul.u32.u64.compose %v1293, %v1292
        %v1295 = vextract.low.u32 %v1294
        %v1296 = vextract.high.u32 %v1294
        %v1297 = vmul.u32.u64.compose %v1293, %v1288
        %v1298 = vextract.low.u32 %v1297
        %v1299 = vextract.high.u32 %v1297
        %v1300 = vmul.u32 %v1293, %v1284
        %v1301 = vadd.s32 %v1296, %v1298
        %vm1302 = vc.u32 %v1296, %v1298
        %v1303 = vadd.s32 %v1299, 1
        %v1304 = vsel %vm1302, %v1303, %v1299
        %v1305 = vadd.s32 %v1300, %v1304
        %v1306 = vadd.s32 %v1305, 536870912
        %v1307 = vshrl.u32 %v1306, 30
        %v1308 = vshll.u32 %v1307, 30
        %v1309 = vsub.s32 %v1305, %v1308
        %vm1310 = vcmp.lt.s32.totalorder %v1309, 0
        %v1311 = vsub.s32 0, %v1309
        %v1312 = vsel %vm1310, %v1311, %v1309
        %v1313 = vclz %v1312
        %v1314 = vsub.s32 %v1313, 2
        %vm1315 = vcmp.gt.s32.totalorder 0, %v1314
        %v1316 = vsel %vm1315, 0, %v1314
        %v1317 = vsub.s32 32, %v1316
        %v1318 = vshll.u32 %v1309, %v1316
        %v1319 = vshrl.u32 %v1301, %v1317
        %v1320 = vor.u32 %v1318, %v1319
        %v1321 = vsub.s32 4294967266, %v1316
        %v1322 = vadd.s32 %v1321, 127
        %v1323 = vshll.u32 %v1322, 23
        %v1324 = vor.u32 4788187, %v1323
        %v1325 = vand.u32 2147483647, %v1324
        %v1327 = vcvt.s32.f32 %v1320
        %v1328 = vmul.f32 %v1327, %v1325
        %v1329 = vxor.u32 %v1328, 2147483648
        %v1330 = vsel %vm1247, %v1329, %v1328
        %v1331 = vsub.s32 4, %v1307
        %v1332 = vsel %vm1247, %v1331, %v1307
        %v1333 = vsel %vm1246, %v492, %v1330
        %v1334 = vsel %vm1246, 0, %v1332
        %v1335 = vcosq.f32.pop %v1333
        %v1336 = vsinq.f32.pop %v1333
        %vm1337 = vweird.f32 %v492
        %v1338 = vadd.s32 %v1334, 3
        %v1339 = vand.u32 %v1338, 3
        %vm1340 = vcmp.lt.s32.totalorder %v1339, 2
        %vm1341 = vcmp.eq.s32.totalorder %v1339, 0
        %v1342 = vxor.u32 %v1336, 2147483648
        %v1343 = vsel %vm1341, %v1335, %v1342
        %vm1344 = vcmp.eq.s32.totalorder %v1339, 2
        %v1345 = vxor.u32 %v1335, 2147483648
        %v1346 = vsel %vm1344, %v1345, %v1336
        %v1347 = vsel %vm1340, %v1343, %v1346
        %v1348 = vsel %vm1337, nan, %v1347
        %v1349 = vand.u32 2147483647, %v493
        %vm1350 = vcmp.le.f32.partialorder %v1349, 0.7853982
        %vm1351 = vcmp.lt.s32.totalorder %v493, 0
        %v1352 = vand.u32 %v493, 2139095040
        %v1353 = vshrl.u32 %v1352, 23
        %v1354 = vsub.s32 %v1353, 127
        %v1355 = vand.u32 2147483647, %v493
        %v1356 = vand.u32 %v1355, 8388607
        %v1357 = vor.u32 %v1356, 8388608
        %v1358 = vsub.s32 0, %v1357
        %v1359 = vadd.s32 %v1354, 1
        %vm1360 = vcmp.gt.s32.totalorder %v1359, 0
        %v1361 = vsel %vm1360, %v1359, 0
        %v1362 = vshrl.u32 %v1361, 5
        %v1363 = vand.u32 %v1361, 31
        %v1364 = vsub.s32 32, %v1363
        %v1365 = vshrl.u32 683565275, %v1364
        %v1366 = vshll.u32 683565275, %v1363
        %v1367 = vshrl.u32 2475754826, %v1364
        %v1368 = vor.u32 %v1366, %v1367
        %v1369 = vshll.u32 2475754826, %v1363
        %v1370 = vshrl.u32 2131351028, %v1364
        %v1371 = vor.u32 %v1369, %v1370
        %v1372 = vshll.u32 2131351028, %v1363
        %v1373 = vshrl.u32 2102212464, %v1364
        %v1374 = vor.u32 %v1372, %v1373
        %v1375 = vshll.u32 2102212464, %v1363
        %v1376 = vshrl.u32 920167782, %v1364
        %v1377 = vor.u32 %v1375, %v1376
        %v1378 = vshll.u32 920167782, %v1363
        %v1379 = vshrl.u32 1326507024, %v1364
        %v1380 = vor.u32 %v1378, %v1379
        %vm1381 = vcmp.lt.s32.totalorder %v1362, 1
        %vm1382 = vcmp.lt.s32.totalorder %v1362, 2
        %vm1383 = vcmp.lt.s32.totalorder %v1362, 3
        %vm1384 = vcmp.lt.s32.totalorder %v1362, 4
        %v1385 = vsel %vm1381, %v1365, %v1368
        %v1386 = vsel %vm1384, %v1374, 2102212464
        %v1387 = vsel %vm1383, %v1371, %v1386
        %v1388 = vsel %vm1382, %v1385, %v1387
        %v1389 = vsel %vm1381, %v1368, %v1371
        %v1390 = vsel %vm1384, %v1377, 920167782
        %v1391 = vsel %vm1383, %v1374, %v1390
        %v1392 = vsel %vm1382, %v1389, %v1391
        %v1393 = vsel %vm1381, %v1371, %v1374
        %v1394 = vsel %vm1384, %v1380, 1326507024
        %v1395 = vsel %vm1383, %v1377, %v1394
        %v1396 = vsel %vm1382, %v1393, %v1395
        %v1397 = vshll.u32 %v1357, 8
        %v1398 = vmul.u32.u64.compose %v1397, %v1396
        %v1399 = vextract.low.u32 %v1398
        %v1400 = vextract.high.u32 %v1398
        %v1401 = vmul.u32.u64.compose %v1397, %v1392
        %v1402 = vextract.low.u32 %v1401
        %v1403 = vextract.high.u32 %v1401
        %v1404 = vmul.u32 %v1397, %v1388
        %v1405 = vadd.s32 %v1400, %v1402
        %vm1406 = vc.u32 %v1400, %v1402
        %v1407 = vadd.s32 %v1403, 1
        %v1408 = vsel %vm1406, %v1407, %v1403
        %v1409 = vadd.s32 %v1404, %v1408
        %v1410 = vadd.s32 %v1409, 536870912
        %v1411 = vshrl.u32 %v1410, 30
        %v1412 = vshll.u32 %v1411, 30
        %v1413 = vsub.s32 %v1409, %v1412
        %vm1414 = vcmp.lt.s32.totalorder %v1413, 0
        %v1415 = vsub.s32 0, %v1413
        %v1416 = vsel %vm1414, %v1415, %v1413
        %v1417 = vclz %v1416
        %v1418 = vsub.s32 %v1417, 2
        %vm1419 = vcmp.gt.s32.totalorder 0, %v1418
        %v1420 = vsel %vm1419, 0, %v1418
        %v1421 = vsub.s32 32, %v1420
        %v1422 = vshll.u32 %v1413, %v1420
        %v1423 = vshrl.u32 %v1405, %v1421
        %v1424 = vor.u32 %v1422, %v1423
        %v1425 = vsub.s32 4294967266, %v1420
        %v1426 = vadd.s32 %v1425, 127
        %v1427 = vshll.u32 %v1426, 23
        %v1428 = vor.u32 4788187, %v1427
        %v1429 = vand.u32 2147483647, %v1428
        %v1431 = vcvt.s32.f32 %v1424
        %v1432 = vmul.f32 %v1431, %v1429
        %v1433 = vxor.u32 %v1432, 2147483648
        %v1434 = vsel %vm1351, %v1433, %v1432
        %v1435 = vsub.s32 4, %v1411
        %v1436 = vsel %vm1351, %v1435, %v1411
        %v1437 = vsel %vm1350, %v493, %v1434
        %v1438 = vsel %vm1350, 0, %v1436
        %v1439 = vcosq.f32.pop %v1437
        %v1440 = vsinq.f32.pop %v1437
        %vm1441 = vweird.f32 %v493
        %v1442 = vadd.s32 %v1438, 3
        %v1443 = vand.u32 %v1442, 3
        %vm1444 = vcmp.lt.s32.totalorder %v1443, 2
        %vm1445 = vcmp.eq.s32.totalorder %v1443, 0
        %v1446 = vxor.u32 %v1440, 2147483648
        %v1447 = vsel %vm1445, %v1439, %v1446
        %vm1448 = vcmp.eq.s32.totalorder %v1443, 2
        %v1449 = vxor.u32 %v1439, 2147483648
        %v1450 = vsel %vm1448, %v1449, %v1440
        %v1451 = vsel %vm1444, %v1447, %v1450
        %v1452 = vsel %vm1441, nan, %v1451
        %v1453 = vand.u32 2147483647, %v494
        %vm1454 = vcmp.le.f32.partialorder %v1453, 0.7853982
        %vm1455 = vcmp.lt.s32.totalorder %v494, 0
        %v1456 = vand.u32 %v494, 2139095040
        %v1457 = vshrl.u32 %v1456, 23
        %v1458 = vsub.s32 %v1457, 127
        %v1459 = vand.u32 2147483647, %v494
        %v1460 = vand.u32 %v1459, 8388607
        %v1461 = vor.u32 %v1460, 8388608
        %v1462 = vsub.s32 0, %v1461
        %v1463 = vadd.s32 %v1458, 1
        %vm1464 = vcmp.gt.s32.totalorder %v1463, 0
        %v1465 = vsel %vm1464, %v1463, 0
        %v1466 = vshrl.u32 %v1465, 5
        %v1467 = vand.u32 %v1465, 31
        %v1468 = vsub.s32 32, %v1467
        %v1469 = vshrl.u32 683565275, %v1468
        %v1470 = vshll.u32 683565275, %v1467
        %v1471 = vshrl.u32 2475754826, %v1468
        %v1472 = vor.u32 %v1470, %v1471
        %v1473 = vshll.u32 2475754826, %v1467
        %v1474 = vshrl.u32 2131351028, %v1468
        %v1475 = vor.u32 %v1473, %v1474
        %v1476 = vshll.u32 2131351028, %v1467
        %v1477 = vshrl.u32 2102212464, %v1468
        %v1478 = vor.u32 %v1476, %v1477
        %v1479 = vshll.u32 2102212464, %v1467
        %v1480 = vshrl.u32 920167782, %v1468
        %v1481 = vor.u32 %v1479, %v1480
        %v1482 = vshll.u32 920167782, %v1467
        %v1483 = vshrl.u32 1326507024, %v1468
        %v1484 = vor.u32 %v1482, %v1483
        %vm1485 = vcmp.lt.s32.totalorder %v1466, 1
        %vm1486 = vcmp.lt.s32.totalorder %v1466, 2
        %vm1487 = vcmp.lt.s32.totalorder %v1466, 3
        %vm1488 = vcmp.lt.s32.totalorder %v1466, 4
        %v1489 = vsel %vm1485, %v1469, %v1472
        %v1490 = vsel %vm1488, %v1478, 2102212464
        %v1491 = vsel %vm1487, %v1475, %v1490
        %v1492 = vsel %vm1486, %v1489, %v1491
        %v1493 = vsel %vm1485, %v1472, %v1475
        %v1494 = vsel %vm1488, %v1481, 920167782
        %v1495 = vsel %vm1487, %v1478, %v1494
        %v1496 = vsel %vm1486, %v1493, %v1495
        %v1497 = vsel %vm1485, %v1475, %v1478
        %v1498 = vsel %vm1488, %v1484, 1326507024
        %v1499 = vsel %vm1487, %v1481, %v1498
        %v1500 = vsel %vm1486, %v1497, %v1499
        %v1501 = vshll.u32 %v1461, 8
        %v1502 = vmul.u32.u64.compose %v1501, %v1500
        %v1503 = vextract.low.u32 %v1502
        %v1504 = vextract.high.u32 %v1502
        %v1505 = vmul.u32.u64.compose %v1501, %v1496
        %v1506 = vextract.low.u32 %v1505
        %v1507 = vextract.high.u32 %v1505
        %v1508 = vmul.u32 %v1501, %v1492
        %v1509 = vadd.s32 %v1504, %v1506
        %vm1510 = vc.u32 %v1504, %v1506
        %v1511 = vadd.s32 %v1507, 1
        %v1512 = vsel %vm1510, %v1511, %v1507
        %v1513 = vadd.s32 %v1508, %v1512
        %v1514 = vadd.s32 %v1513, 536870912
        %v1515 = vshrl.u32 %v1514, 30
        %v1516 = vshll.u32 %v1515, 30
        %v1517 = vsub.s32 %v1513, %v1516
        %vm1518 = vcmp.lt.s32.totalorder %v1517, 0
        %v1519 = vsub.s32 0, %v1517
        %v1520 = vsel %vm1518, %v1519, %v1517
        %v1521 = vclz %v1520
        %v1522 = vsub.s32 %v1521, 2
        %vm1523 = vcmp.gt.s32.totalorder 0, %v1522
        %v1524 = vsel %vm1523, 0, %v1522
        %v1525 = vsub.s32 32, %v1524
        %v1526 = vshll.u32 %v1517, %v1524
        %v1527 = vshrl.u32 %v1509, %v1525
        %v1528 = vor.u32 %v1526, %v1527
        %v1529 = vsub.s32 4294967266, %v1524
        %v1530 = vadd.s32 %v1529, 127
        %v1531 = vshll.u32 %v1530, 23
        %v1532 = vor.u32 4788187, %v1531
        %v1533 = vand.u32 2147483647, %v1532
        %v1535 = vcvt.s32.f32 %v1528
        %v1536 = vmul.f32 %v1535, %v1533
        %v1537 = vxor.u32 %v1536, 2147483648
        %v1538 = vsel %vm1455, %v1537, %v1536
        %v1539 = vsub.s32 4, %v1515
        %v1540 = vsel %vm1455, %v1539, %v1515
        %v1541 = vsel %vm1454, %v494, %v1538
        %v1542 = vsel %vm1454, 0, %v1540
        %v1543 = vcosq.f32.pop %v1541
        %v1544 = vsinq.f32.pop %v1541
        %vm1545 = vweird.f32 %v494
        %v1546 = vadd.s32 %v1542, 3
        %v1547 = vand.u32 %v1546, 3
        %vm1548 = vcmp.lt.s32.totalorder %v1547, 2
        %vm1549 = vcmp.eq.s32.totalorder %v1547, 0
        %v1550 = vxor.u32 %v1544, 2147483648
        %v1551 = vsel %vm1549, %v1543, %v1550
        %vm1552 = vcmp.eq.s32.totalorder %v1547, 2
        %v1553 = vxor.u32 %v1543, 2147483648
        %v1554 = vsel %vm1552, %v1553, %v1544
        %v1555 = vsel %vm1548, %v1551, %v1554
        %v1556 = vsel %vm1545, nan, %v1555
        %v1557 = vand.u32 2147483647, %v495
        %vm1558 = vcmp.le.f32.partialorder %v1557, 0.7853982
        %vm1559 = vcmp.lt.s32.totalorder %v495, 0
        %v1560 = vand.u32 %v495, 2139095040
        %v1561 = vshrl.u32 %v1560, 23
        %v1562 = vsub.s32 %v1561, 127
        %v1563 = vand.u32 2147483647, %v495
        %v1564 = vand.u32 %v1563, 8388607
        %v1565 = vor.u32 %v1564, 8388608
        %v1566 = vsub.s32 0, %v1565
        %v1567 = vadd.s32 %v1562, 1
        %vm1568 = vcmp.gt.s32.totalorder %v1567, 0
        %v1569 = vsel %vm1568, %v1567, 0
        %v1570 = vshrl.u32 %v1569, 5
        %v1571 = vand.u32 %v1569, 31
        %v1572 = vsub.s32 32, %v1571
        %v1573 = vshrl.u32 683565275, %v1572
        %v1574 = vshll.u32 683565275, %v1571
        %v1575 = vshrl.u32 2475754826, %v1572
        %v1576 = vor.u32 %v1574, %v1575
        %v1577 = vshll.u32 2475754826, %v1571
        %v1578 = vshrl.u32 2131351028, %v1572
        %v1579 = vor.u32 %v1577, %v1578
        %v1580 = vshll.u32 2131351028, %v1571
        %v1581 = vshrl.u32 2102212464, %v1572
        %v1582 = vor.u32 %v1580, %v1581
        %v1583 = vshll.u32 2102212464, %v1571
        %v1584 = vshrl.u32 920167782, %v1572
        %v1585 = vor.u32 %v1583, %v1584
        %v1586 = vshll.u32 920167782, %v1571
        %v1587 = vshrl.u32 1326507024, %v1572
        %v1588 = vor.u32 %v1586, %v1587
        %vm1589 = vcmp.lt.s32.totalorder %v1570, 1
        %vm1590 = vcmp.lt.s32.totalorder %v1570, 2
        %vm1591 = vcmp.lt.s32.totalorder %v1570, 3
        %vm1592 = vcmp.lt.s32.totalorder %v1570, 4
        %v1593 = vsel %vm1589, %v1573, %v1576
        %v1594 = vsel %vm1592, %v1582, 2102212464
        %v1595 = vsel %vm1591, %v1579, %v1594
        %v1596 = vsel %vm1590, %v1593, %v1595
        %v1597 = vsel %vm1589, %v1576, %v1579
        %v1598 = vsel %vm1592, %v1585, 920167782
        %v1599 = vsel %vm1591, %v1582, %v1598
        %v1600 = vsel %vm1590, %v1597, %v1599
        %v1601 = vsel %vm1589, %v1579, %v1582
        %v1602 = vsel %vm1592, %v1588, 1326507024
        %v1603 = vsel %vm1591, %v1585, %v1602
        %v1604 = vsel %vm1590, %v1601, %v1603
        %v1605 = vshll.u32 %v1565, 8
        %v1606 = vmul.u32.u64.compose %v1605, %v1604
        %v1607 = vextract.low.u32 %v1606
        %v1608 = vextract.high.u32 %v1606
        %v1609 = vmul.u32.u64.compose %v1605, %v1600
        %v1610 = vextract.low.u32 %v1609
        %v1611 = vextract.high.u32 %v1609
        %v1612 = vmul.u32 %v1605, %v1596
        %v1613 = vadd.s32 %v1608, %v1610
        %vm1614 = vc.u32 %v1608, %v1610
        %v1615 = vadd.s32 %v1611, 1
        %v1616 = vsel %vm1614, %v1615, %v1611
        %v1617 = vadd.s32 %v1612, %v1616
        %v1618 = vadd.s32 %v1617, 536870912
        %v1619 = vshrl.u32 %v1618, 30
        %v1620 = vshll.u32 %v1619, 30
        %v1621 = vsub.s32 %v1617, %v1620
        %vm1622 = vcmp.lt.s32.totalorder %v1621, 0
        %v1623 = vsub.s32 0, %v1621
        %v1624 = vsel %vm1622, %v1623, %v1621
        %v1625 = vclz %v1624
        %v1626 = vsub.s32 %v1625, 2
        %vm1627 = vcmp.gt.s32.totalorder 0, %v1626
        %v1628 = vsel %vm1627, 0, %v1626
        %v1629 = vsub.s32 32, %v1628
        %v1630 = vshll.u32 %v1621, %v1628
        %v1631 = vshrl.u32 %v1613, %v1629
        %v1632 = vor.u32 %v1630, %v1631
        %v1633 = vsub.s32 4294967266, %v1628
        %v1634 = vadd.s32 %v1633, 127
        %v1635 = vshll.u32 %v1634, 23
        %v1636 = vor.u32 4788187, %v1635
        %v1637 = vand.u32 2147483647, %v1636
        %v1639 = vcvt.s32.f32 %v1632
        %v1640 = vmul.f32 %v1639, %v1637
        %v1641 = vxor.u32 %v1640, 2147483648
        %v1642 = vsel %vm1559, %v1641, %v1640
        %v1643 = vsub.s32 4, %v1619
        %v1644 = vsel %vm1559, %v1643, %v1619
        %v1645 = vsel %vm1558, %v495, %v1642
        %v1646 = vsel %vm1558, 0, %v1644
        %v1647 = vcosq.f32.pop %v1645
        %v1648 = vsinq.f32.pop %v1645
        %vm1649 = vweird.f32 %v495
        %v1650 = vadd.s32 %v1646, 3
        %v1651 = vand.u32 %v1650, 3
        %vm1652 = vcmp.lt.s32.totalorder %v1651, 2
        %vm1653 = vcmp.eq.s32.totalorder %v1651, 0
        %v1654 = vxor.u32 %v1648, 2147483648
        %v1655 = vsel %vm1653, %v1647, %v1654
        %vm1656 = vcmp.eq.s32.totalorder %v1651, 2
        %v1657 = vxor.u32 %v1647, 2147483648
        %v1658 = vsel %vm1656, %v1657, %v1648
        %v1659 = vsel %vm1652, %v1655, %v1658
        %v1660 = vsel %vm1649, nan, %v1659
        %v1661 = vand.u32 2147483647, %v496
        %vm1662 = vcmp.le.f32.partialorder %v1661, 0.7853982
        %vm1663 = vcmp.lt.s32.totalorder %v496, 0
        %v1664 = vand.u32 %v496, 2139095040
        %v1665 = vshrl.u32 %v1664, 23
        %v1666 = vsub.s32 %v1665, 127
        %v1667 = vand.u32 2147483647, %v496
        %v1668 = vand.u32 %v1667, 8388607
        %v1669 = vor.u32 %v1668, 8388608
        %v1670 = vsub.s32 0, %v1669
        %v1671 = vadd.s32 %v1666, 1
        %vm1672 = vcmp.gt.s32.totalorder %v1671, 0
        %v1673 = vsel %vm1672, %v1671, 0
        %v1674 = vshrl.u32 %v1673, 5
        %v1675 = vand.u32 %v1673, 31
        %v1676 = vsub.s32 32, %v1675
        %v1677 = vshrl.u32 683565275, %v1676
        %v1678 = vshll.u32 683565275, %v1675
        %v1679 = vshrl.u32 2475754826, %v1676
        %v1680 = vor.u32 %v1678, %v1679
        %v1681 = vshll.u32 2475754826, %v1675
        %v1682 = vshrl.u32 2131351028, %v1676
        %v1683 = vor.u32 %v1681, %v1682
        %v1684 = vshll.u32 2131351028, %v1675
        %v1685 = vshrl.u32 2102212464, %v1676
        %v1686 = vor.u32 %v1684, %v1685
        %v1687 = vshll.u32 2102212464, %v1675
        %v1688 = vshrl.u32 920167782, %v1676
        %v1689 = vor.u32 %v1687, %v1688
        %v1690 = vshll.u32 920167782, %v1675
        %v1691 = vshrl.u32 1326507024, %v1676
        %v1692 = vor.u32 %v1690, %v1691
        %vm1693 = vcmp.lt.s32.totalorder %v1674, 1
        %vm1694 = vcmp.lt.s32.totalorder %v1674, 2
        %vm1695 = vcmp.lt.s32.totalorder %v1674, 3
        %vm1696 = vcmp.lt.s32.totalorder %v1674, 4
        %v1697 = vsel %vm1693, %v1677, %v1680
        %v1698 = vsel %vm1696, %v1686, 2102212464
        %v1699 = vsel %vm1695, %v1683, %v1698
        %v1700 = vsel %vm1694, %v1697, %v1699
        %v1701 = vsel %vm1693, %v1680, %v1683
        %v1702 = vsel %vm1696, %v1689, 920167782
        %v1703 = vsel %vm1695, %v1686, %v1702
        %v1704 = vsel %vm1694, %v1701, %v1703
        %v1705 = vsel %vm1693, %v1683, %v1686
        %v1706 = vsel %vm1696, %v1692, 1326507024
        %v1707 = vsel %vm1695, %v1689, %v1706
        %v1708 = vsel %vm1694, %v1705, %v1707
        %v1709 = vshll.u32 %v1669, 8
        %v1710 = vmul.u32.u64.compose %v1709, %v1708
        %v1711 = vextract.low.u32 %v1710
        %v1712 = vextract.high.u32 %v1710
        %v1713 = vmul.u32.u64.compose %v1709, %v1704
        %v1714 = vextract.low.u32 %v1713
        %v1715 = vextract.high.u32 %v1713
        %v1716 = vmul.u32 %v1709, %v1700
        %v1717 = vadd.s32 %v1712, %v1714
        %vm1718 = vc.u32 %v1712, %v1714
        %v1719 = vadd.s32 %v1715, 1
        %v1720 = vsel %vm1718, %v1719, %v1715
        %v1721 = vadd.s32 %v1716, %v1720
        %v1722 = vadd.s32 %v1721, 536870912
        %v1723 = vshrl.u32 %v1722, 30
        %v1724 = vshll.u32 %v1723, 30
        %v1725 = vsub.s32 %v1721, %v1724
        %vm1726 = vcmp.lt.s32.totalorder %v1725, 0
        %v1727 = vsub.s32 0, %v1725
        %v1728 = vsel %vm1726, %v1727, %v1725
        %v1729 = vclz %v1728
        %v1730 = vsub.s32 %v1729, 2
        %vm1731 = vcmp.gt.s32.totalorder 0, %v1730
        %v1732 = vsel %vm1731, 0, %v1730
        %v1733 = vsub.s32 32, %v1732
        %v1734 = vshll.u32 %v1725, %v1732
        %v1735 = vshrl.u32 %v1717, %v1733
        %v1736 = vor.u32 %v1734, %v1735
        %v1737 = vsub.s32 4294967266, %v1732
        %v1738 = vadd.s32 %v1737, 127
        %v1739 = vshll.u32 %v1738, 23
        %v1740 = vor.u32 4788187, %v1739
        %v1741 = vand.u32 2147483647, %v1740
        %v1743 = vcvt.s32.f32 %v1736
        %v1744 = vmul.f32 %v1743, %v1741
        %v1745 = vxor.u32 %v1744, 2147483648
        %v1746 = vsel %vm1663, %v1745, %v1744
        %v1747 = vsub.s32 4, %v1723
        %v1748 = vsel %vm1663, %v1747, %v1723
        %v1749 = vsel %vm1662, %v496, %v1746
        %v1750 = vsel %vm1662, 0, %v1748
        %v1751 = vcosq.f32.pop %v1749
        %v1752 = vsinq.f32.pop %v1749
        %vm1753 = vweird.f32 %v496
        %v1754 = vadd.s32 %v1750, 3
        %v1755 = vand.u32 %v1754, 3
        %vm1756 = vcmp.lt.s32.totalorder %v1755, 2
        %vm1757 = vcmp.eq.s32.totalorder %v1755, 0
        %v1758 = vxor.u32 %v1752, 2147483648
        %v1759 = vsel %vm1757, %v1751, %v1758
        %vm1760 = vcmp.eq.s32.totalorder %v1755, 2
        %v1761 = vxor.u32 %v1751, 2147483648
        %v1762 = vsel %vm1760, %v1761, %v1752
        %v1763 = vsel %vm1756, %v1759, %v1762
        %v1764 = vsel %vm1753, nan, %v1763
        %v1765 = vand.u32 2147483647, %v497
        %vm1766 = vcmp.le.f32.partialorder %v1765, 0.7853982
        %vm1767 = vcmp.lt.s32.totalorder %v497, 0
        %v1768 = vand.u32 %v497, 2139095040
        %v1769 = vshrl.u32 %v1768, 23
        %v1770 = vsub.s32 %v1769, 127
        %v1771 = vand.u32 2147483647, %v497
        %v1772 = vand.u32 %v1771, 8388607
        %v1773 = vor.u32 %v1772, 8388608
        %v1774 = vsub.s32 0, %v1773
        %v1775 = vadd.s32 %v1770, 1
        %vm1776 = vcmp.gt.s32.totalorder %v1775, 0
        %v1777 = vsel %vm1776, %v1775, 0
        %v1778 = vshrl.u32 %v1777, 5
        %v1779 = vand.u32 %v1777, 31
        %v1780 = vsub.s32 32, %v1779
        %v1781 = vshrl.u32 683565275, %v1780
        %v1782 = vshll.u32 683565275, %v1779
        %v1783 = vshrl.u32 2475754826, %v1780
        %v1784 = vor.u32 %v1782, %v1783
        %v1785 = vshll.u32 2475754826, %v1779
        %v1786 = vshrl.u32 2131351028, %v1780
        %v1787 = vor.u32 %v1785, %v1786
        %v1788 = vshll.u32 2131351028, %v1779
        %v1789 = vshrl.u32 2102212464, %v1780
        %v1790 = vor.u32 %v1788, %v1789
        %v1791 = vshll.u32 2102212464, %v1779
        %v1792 = vshrl.u32 920167782, %v1780
        %v1793 = vor.u32 %v1791, %v1792
        %v1794 = vshll.u32 920167782, %v1779
        %v1795 = vshrl.u32 1326507024, %v1780
        %v1796 = vor.u32 %v1794, %v1795
        %vm1797 = vcmp.lt.s32.totalorder %v1778, 1
        %vm1798 = vcmp.lt.s32.totalorder %v1778, 2
        %vm1799 = vcmp.lt.s32.totalorder %v1778, 3
        %vm1800 = vcmp.lt.s32.totalorder %v1778, 4
        %v1801 = vsel %vm1797, %v1781, %v1784
        %v1802 = vsel %vm1800, %v1790, 2102212464
        %v1803 = vsel %vm1799, %v1787, %v1802
        %v1804 = vsel %vm1798, %v1801, %v1803
        %v1805 = vsel %vm1797, %v1784, %v1787
        %v1806 = vsel %vm1800, %v1793, 920167782
        %v1807 = vsel %vm1799, %v1790, %v1806
        %v1808 = vsel %vm1798, %v1805, %v1807
        %v1809 = vsel %vm1797, %v1787, %v1790
        %v1810 = vsel %vm1800, %v1796, 1326507024
        %v1811 = vsel %vm1799, %v1793, %v1810
        %v1812 = vsel %vm1798, %v1809, %v1811
        %v1813 = vshll.u32 %v1773, 8
        %v1814 = vmul.u32.u64.compose %v1813, %v1812
        %v1815 = vextract.low.u32 %v1814
        %v1816 = vextract.high.u32 %v1814
        %v1817 = vmul.u32.u64.compose %v1813, %v1808
        %v1818 = vextract.low.u32 %v1817
        %v1819 = vextract.high.u32 %v1817
        %v1820 = vmul.u32 %v1813, %v1804
        %v1821 = vadd.s32 %v1816, %v1818
        %vm1822 = vc.u32 %v1816, %v1818
        %v1823 = vadd.s32 %v1819, 1
        %v1824 = vsel %vm1822, %v1823, %v1819
        %v1825 = vadd.s32 %v1820, %v1824
        %v1826 = vadd.s32 %v1825, 536870912
        %v1827 = vshrl.u32 %v1826, 30
        %v1828 = vshll.u32 %v1827, 30
        %v1829 = vsub.s32 %v1825, %v1828
        %vm1830 = vcmp.lt.s32.totalorder %v1829, 0
        %v1831 = vsub.s32 0, %v1829
        %v1832 = vsel %vm1830, %v1831, %v1829
        %v1833 = vclz %v1832
        %v1834 = vsub.s32 %v1833, 2
        %vm1835 = vcmp.gt.s32.totalorder 0, %v1834
        %v1836 = vsel %vm1835, 0, %v1834
        %v1837 = vsub.s32 32, %v1836
        %v1838 = vshll.u32 %v1829, %v1836
        %v1839 = vshrl.u32 %v1821, %v1837
        %v1840 = vor.u32 %v1838, %v1839
        %v1841 = vsub.s32 4294967266, %v1836
        %v1842 = vadd.s32 %v1841, 127
        %v1843 = vshll.u32 %v1842, 23
        %v1844 = vor.u32 4788187, %v1843
        %v1845 = vand.u32 2147483647, %v1844
        %v1847 = vcvt.s32.f32 %v1840
        %v1848 = vmul.f32 %v1847, %v1845
        %v1849 = vxor.u32 %v1848, 2147483648
        %v1850 = vsel %vm1767, %v1849, %v1848
        %v1851 = vsub.s32 4, %v1827
        %v1852 = vsel %vm1767, %v1851, %v1827
        %v1853 = vsel %vm1766, %v497, %v1850
        %v1854 = vsel %vm1766, 0, %v1852
        %v1855 = vcosq.f32.pop %v1853
        %v1856 = vsinq.f32.pop %v1853
        %vm1857 = vweird.f32 %v497
        %v1858 = vadd.s32 %v1854, 3
        %v1859 = vand.u32 %v1858, 3
        %vm1860 = vcmp.lt.s32.totalorder %v1859, 2
        %vm1861 = vcmp.eq.s32.totalorder %v1859, 0
        %v1862 = vxor.u32 %v1856, 2147483648
        %v1863 = vsel %vm1861, %v1855, %v1862
        %vm1864 = vcmp.eq.s32.totalorder %v1859, 2
        %v1865 = vxor.u32 %v1855, 2147483648
        %v1866 = vsel %vm1864, %v1865, %v1856
        %v1867 = vsel %vm1860, %v1863, %v1866
        %v1868 = vsel %vm1857, nan, %v1867
        %v1869 = vand.u32 2147483647, %v498
        %vm1870 = vcmp.le.f32.partialorder %v1869, 0.7853982
        %vm1871 = vcmp.lt.s32.totalorder %v498, 0
        %v1872 = vand.u32 %v498, 2139095040
        %v1873 = vshrl.u32 %v1872, 23
        %v1874 = vsub.s32 %v1873, 127
        %v1875 = vand.u32 2147483647, %v498
        %v1876 = vand.u32 %v1875, 8388607
        %v1877 = vor.u32 %v1876, 8388608
        %v1878 = vsub.s32 0, %v1877
        %v1879 = vadd.s32 %v1874, 1
        %vm1880 = vcmp.gt.s32.totalorder %v1879, 0
        %v1881 = vsel %vm1880, %v1879, 0
        %v1882 = vshrl.u32 %v1881, 5
        %v1883 = vand.u32 %v1881, 31
        %v1884 = vsub.s32 32, %v1883
        %v1885 = vshrl.u32 683565275, %v1884
        %v1886 = vshll.u32 683565275, %v1883
        %v1887 = vshrl.u32 2475754826, %v1884
        %v1888 = vor.u32 %v1886, %v1887
        %v1889 = vshll.u32 2475754826, %v1883
        %v1890 = vshrl.u32 2131351028, %v1884
        %v1891 = vor.u32 %v1889, %v1890
        %v1892 = vshll.u32 2131351028, %v1883
        %v1893 = vshrl.u32 2102212464, %v1884
        %v1894 = vor.u32 %v1892, %v1893
        %v1895 = vshll.u32 2102212464, %v1883
        %v1896 = vshrl.u32 920167782, %v1884
        %v1897 = vor.u32 %v1895, %v1896
        %v1898 = vshll.u32 920167782, %v1883
        %v1899 = vshrl.u32 1326507024, %v1884
        %v1900 = vor.u32 %v1898, %v1899
        %vm1901 = vcmp.lt.s32.totalorder %v1882, 1
        %vm1902 = vcmp.lt.s32.totalorder %v1882, 2
        %vm1903 = vcmp.lt.s32.totalorder %v1882, 3
        %vm1904 = vcmp.lt.s32.totalorder %v1882, 4
        %v1905 = vsel %vm1901, %v1885, %v1888
        %v1906 = vsel %vm1904, %v1894, 2102212464
        %v1907 = vsel %vm1903, %v1891, %v1906
        %v1908 = vsel %vm1902, %v1905, %v1907
        %v1909 = vsel %vm1901, %v1888, %v1891
        %v1910 = vsel %vm1904, %v1897, 920167782
        %v1911 = vsel %vm1903, %v1894, %v1910
        %v1912 = vsel %vm1902, %v1909, %v1911
        %v1913 = vsel %vm1901, %v1891, %v1894
        %v1914 = vsel %vm1904, %v1900, 1326507024
        %v1915 = vsel %vm1903, %v1897, %v1914
        %v1916 = vsel %vm1902, %v1913, %v1915
        %v1917 = vshll.u32 %v1877, 8
        %v1918 = vmul.u32.u64.compose %v1917, %v1916
        %v1919 = vextract.low.u32 %v1918
        %v1920 = vextract.high.u32 %v1918
        %v1921 = vmul.u32.u64.compose %v1917, %v1912
        %v1922 = vextract.low.u32 %v1921
        %v1923 = vextract.high.u32 %v1921
        %v1924 = vmul.u32 %v1917, %v1908
        %v1925 = vadd.s32 %v1920, %v1922
        %vm1926 = vc.u32 %v1920, %v1922
        %v1927 = vadd.s32 %v1923, 1
        %v1928 = vsel %vm1926, %v1927, %v1923
        %v1929 = vadd.s32 %v1924, %v1928
        %v1930 = vadd.s32 %v1929, 536870912
        %v1931 = vshrl.u32 %v1930, 30
        %v1932 = vshll.u32 %v1931, 30
        %v1933 = vsub.s32 %v1929, %v1932
        %vm1934 = vcmp.lt.s32.totalorder %v1933, 0
        %v1935 = vsub.s32 0, %v1933
        %v1936 = vsel %vm1934, %v1935, %v1933
        %v1937 = vclz %v1936
        %v1938 = vsub.s32 %v1937, 2
        %vm1939 = vcmp.gt.s32.totalorder 0, %v1938
        %v1940 = vsel %vm1939, 0, %v1938
        %v1941 = vsub.s32 32, %v1940
        %v1942 = vshll.u32 %v1933, %v1940
        %v1943 = vshrl.u32 %v1925, %v1941
        %v1944 = vor.u32 %v1942, %v1943
        %v1945 = vsub.s32 4294967266, %v1940
        %v1946 = vadd.s32 %v1945, 127
        %v1947 = vshll.u32 %v1946, 23
        %v1948 = vor.u32 4788187, %v1947
        %v1949 = vand.u32 2147483647, %v1948
        %v1951 = vcvt.s32.f32 %v1944
        %v1952 = vmul.f32 %v1951, %v1949
        %v1953 = vxor.u32 %v1952, 2147483648
        %v1954 = vsel %vm1871, %v1953, %v1952
        %v1955 = vsub.s32 4, %v1931
        %v1956 = vsel %vm1871, %v1955, %v1931
        %v1957 = vsel %vm1870, %v498, %v1954
        %v1958 = vsel %vm1870, 0, %v1956
        %v1959 = vcosq.f32.pop %v1957
        %v1960 = vsinq.f32.pop %v1957
        %vm1961 = vweird.f32 %v498
        %v1962 = vadd.s32 %v1958, 3
        %v1963 = vand.u32 %v1962, 3
        %vm1964 = vcmp.lt.s32.totalorder %v1963, 2
        %vm1965 = vcmp.eq.s32.totalorder %v1963, 0
        %v1966 = vxor.u32 %v1960, 2147483648
        %v1967 = vsel %vm1965, %v1959, %v1966
        %vm1968 = vcmp.eq.s32.totalorder %v1963, 2
        %v1969 = vxor.u32 %v1959, 2147483648
        %v1970 = vsel %vm1968, %v1969, %v1960
        %v1971 = vsel %vm1964, %v1967, %v1970
        %v1972 = vsel %vm1961, nan, %v1971
        %v1973 = vand.u32 2147483647, %v499
        %vm1974 = vcmp.le.f32.partialorder %v1973, 0.7853982
        %vm1975 = vcmp.lt.s32.totalorder %v499, 0
        %v1976 = vand.u32 %v499, 2139095040
        %v1977 = vshrl.u32 %v1976, 23
        %v1978 = vsub.s32 %v1977, 127
        %v1979 = vand.u32 2147483647, %v499
        %v1980 = vand.u32 %v1979, 8388607
        %v1981 = vor.u32 %v1980, 8388608
        %v1982 = vsub.s32 0, %v1981
        %v1983 = vadd.s32 %v1978, 1
        %vm1984 = vcmp.gt.s32.totalorder %v1983, 0
        %v1985 = vsel %vm1984, %v1983, 0
        %v1986 = vshrl.u32 %v1985, 5
        %v1987 = vand.u32 %v1985, 31
        %v1988 = vsub.s32 32, %v1987
        %v1989 = vshrl.u32 683565275, %v1988
        %v1990 = vshll.u32 683565275, %v1987
        %v1991 = vshrl.u32 2475754826, %v1988
        %v1992 = vor.u32 %v1990, %v1991
        %v1993 = vshll.u32 2475754826, %v1987
        %v1994 = vshrl.u32 2131351028, %v1988
        %v1995 = vor.u32 %v1993, %v1994
        %v1996 = vshll.u32 2131351028, %v1987
        %v1997 = vshrl.u32 2102212464, %v1988
        %v1998 = vor.u32 %v1996, %v1997
        %v1999 = vshll.u32 2102212464, %v1987
        %v2000 = vshrl.u32 920167782, %v1988
        %v2001 = vor.u32 %v1999, %v2000
        %v2002 = vshll.u32 920167782, %v1987
        %v2003 = vshrl.u32 1326507024, %v1988
        %v2004 = vor.u32 %v2002, %v2003
        %vm2005 = vcmp.lt.s32.totalorder %v1986, 1
        %vm2006 = vcmp.lt.s32.totalorder %v1986, 2
        %vm2007 = vcmp.lt.s32.totalorder %v1986, 3
        %vm2008 = vcmp.lt.s32.totalorder %v1986, 4
        %v2009 = vsel %vm2005, %v1989, %v1992
        %v2010 = vsel %vm2008, %v1998, 2102212464
        %v2011 = vsel %vm2007, %v1995, %v2010
        %v2012 = vsel %vm2006, %v2009, %v2011
        %v2013 = vsel %vm2005, %v1992, %v1995
        %v2014 = vsel %vm2008, %v2001, 920167782
        %v2015 = vsel %vm2007, %v1998, %v2014
        %v2016 = vsel %vm2006, %v2013, %v2015
        %v2017 = vsel %vm2005, %v1995, %v1998
        %v2018 = vsel %vm2008, %v2004, 1326507024
        %v2019 = vsel %vm2007, %v2001, %v2018
        %v2020 = vsel %vm2006, %v2017, %v2019
        %v2021 = vshll.u32 %v1981, 8
        %v2022 = vmul.u32.u64.compose %v2021, %v2020
        %v2023 = vextract.low.u32 %v2022
        %v2024 = vextract.high.u32 %v2022
        %v2025 = vmul.u32.u64.compose %v2021, %v2016
        %v2026 = vextract.low.u32 %v2025
        %v2027 = vextract.high.u32 %v2025
        %v2028 = vmul.u32 %v2021, %v2012
        %v2029 = vadd.s32 %v2024, %v2026
        %vm2030 = vc.u32 %v2024, %v2026
        %v2031 = vadd.s32 %v2027, 1
        %v2032 = vsel %vm2030, %v2031, %v2027
        %v2033 = vadd.s32 %v2028, %v2032
        %v2034 = vadd.s32 %v2033, 536870912
        %v2035 = vshrl.u32 %v2034, 30
        %v2036 = vshll.u32 %v2035, 30
        %v2037 = vsub.s32 %v2033, %v2036
        %vm2038 = vcmp.lt.s32.totalorder %v2037, 0
        %v2039 = vsub.s32 0, %v2037
        %v2040 = vsel %vm2038, %v2039, %v2037
        %v2041 = vclz %v2040
        %v2042 = vsub.s32 %v2041, 2
        %vm2043 = vcmp.gt.s32.totalorder 0, %v2042
        %v2044 = vsel %vm2043, 0, %v2042
        %v2045 = vsub.s32 32, %v2044
        %v2046 = vshll.u32 %v2037, %v2044
        %v2047 = vshrl.u32 %v2029, %v2045
        %v2048 = vor.u32 %v2046, %v2047
        %v2049 = vsub.s32 4294967266, %v2044
        %v2050 = vadd.s32 %v2049, 127
        %v2051 = vshll.u32 %v2050, 23
        %v2052 = vor.u32 4788187, %v2051
        %v2053 = vand.u32 2147483647, %v2052
        %v2055 = vcvt.s32.f32 %v2048
        %v2056 = vmul.f32 %v2055, %v2053
        %v2057 = vxor.u32 %v2056, 2147483648
        %v2058 = vsel %vm1975, %v2057, %v2056
        %v2059 = vsub.s32 4, %v2035
        %v2060 = vsel %vm1975, %v2059, %v2035
        %v2061 = vsel %vm1974, %v499, %v2058
        %v2062 = vsel %vm1974, 0, %v2060
        %v2063 = vcosq.f32.pop %v2061
        %v2064 = vsinq.f32.pop %v2061
        %vm2065 = vweird.f32 %v499
        %v2066 = vadd.s32 %v2062, 3
        %v2067 = vand.u32 %v2066, 3
        %vm2068 = vcmp.lt.s32.totalorder %v2067, 2
        %vm2069 = vcmp.eq.s32.totalorder %v2067, 0
        %v2070 = vxor.u32 %v2064, 2147483648
        %v2071 = vsel %vm2069, %v2063, %v2070
        %vm2072 = vcmp.eq.s32.totalorder %v2067, 2
        %v2073 = vxor.u32 %v2063, 2147483648
        %v2074 = vsel %vm2072, %v2073, %v2064
        %v2075 = vsel %vm2068, %v2071, %v2074
        %v2076 = vsel %vm2065, nan, %v2075
        %v2077 = vand.u32 2147483647, %v500
        %vm2078 = vcmp.le.f32.partialorder %v2077, 0.7853982
        %vm2079 = vcmp.lt.s32.totalorder %v500, 0
        %v2080 = vand.u32 %v500, 2139095040
        %v2081 = vshrl.u32 %v2080, 23
        %v2082 = vsub.s32 %v2081, 127
        %v2083 = vand.u32 2147483647, %v500
        %v2084 = vand.u32 %v2083, 8388607
        %v2085 = vor.u32 %v2084, 8388608
        %v2086 = vsub.s32 0, %v2085
        %v2087 = vadd.s32 %v2082, 1
        %vm2088 = vcmp.gt.s32.totalorder %v2087, 0
        %v2089 = vsel %vm2088, %v2087, 0
        %v2090 = vshrl.u32 %v2089, 5
        %v2091 = vand.u32 %v2089, 31
        %v2092 = vsub.s32 32, %v2091
        %v2093 = vshrl.u32 683565275, %v2092
        %v2094 = vshll.u32 683565275, %v2091
        %v2095 = vshrl.u32 2475754826, %v2092
        %v2096 = vor.u32 %v2094, %v2095
        %v2097 = vshll.u32 2475754826, %v2091
        %v2098 = vshrl.u32 2131351028, %v2092
        %v2099 = vor.u32 %v2097, %v2098
        %v2100 = vshll.u32 2131351028, %v2091
        %v2101 = vshrl.u32 2102212464, %v2092
        %v2102 = vor.u32 %v2100, %v2101
        %v2103 = vshll.u32 2102212464, %v2091
        %v2104 = vshrl.u32 920167782, %v2092
        %v2105 = vor.u32 %v2103, %v2104
        %v2106 = vshll.u32 920167782, %v2091
        %v2107 = vshrl.u32 1326507024, %v2092
        %v2108 = vor.u32 %v2106, %v2107
        %vm2109 = vcmp.lt.s32.totalorder %v2090, 1
        %vm2110 = vcmp.lt.s32.totalorder %v2090, 2
        %vm2111 = vcmp.lt.s32.totalorder %v2090, 3
        %vm2112 = vcmp.lt.s32.totalorder %v2090, 4
        %v2113 = vsel %vm2109, %v2093, %v2096
        %v2114 = vsel %vm2112, %v2102, 2102212464
        %v2115 = vsel %vm2111, %v2099, %v2114
        %v2116 = vsel %vm2110, %v2113, %v2115
        %v2117 = vsel %vm2109, %v2096, %v2099
        %v2118 = vsel %vm2112, %v2105, 920167782
        %v2119 = vsel %vm2111, %v2102, %v2118
        %v2120 = vsel %vm2110, %v2117, %v2119
        %v2121 = vsel %vm2109, %v2099, %v2102
        %v2122 = vsel %vm2112, %v2108, 1326507024
        %v2123 = vsel %vm2111, %v2105, %v2122
        %v2124 = vsel %vm2110, %v2121, %v2123
        %v2125 = vshll.u32 %v2085, 8
        %v2126 = vmul.u32.u64.compose %v2125, %v2124
        %v2127 = vextract.low.u32 %v2126
        %v2128 = vextract.high.u32 %v2126
        %v2129 = vmul.u32.u64.compose %v2125, %v2120
        %v2130 = vextract.low.u32 %v2129
        %v2131 = vextract.high.u32 %v2129
        %v2132 = vmul.u32 %v2125, %v2116
        %v2133 = vadd.s32 %v2128, %v2130
        %vm2134 = vc.u32 %v2128, %v2130
        %v2135 = vadd.s32 %v2131, 1
        %v2136 = vsel %vm2134, %v2135, %v2131
        %v2137 = vadd.s32 %v2132, %v2136
        %v2138 = vadd.s32 %v2137, 536870912
        %v2139 = vshrl.u32 %v2138, 30
        %v2140 = vshll.u32 %v2139, 30
        %v2141 = vsub.s32 %v2137, %v2140
        %vm2142 = vcmp.lt.s32.totalorder %v2141, 0
        %v2143 = vsub.s32 0, %v2141
        %v2144 = vsel %vm2142, %v2143, %v2141
        %v2145 = vclz %v2144
        %v2146 = vsub.s32 %v2145, 2
        %vm2147 = vcmp.gt.s32.totalorder 0, %v2146
        %v2148 = vsel %vm2147, 0, %v2146
        %v2149 = vsub.s32 32, %v2148
        %v2150 = vshll.u32 %v2141, %v2148
        %v2151 = vshrl.u32 %v2133, %v2149
        %v2152 = vor.u32 %v2150, %v2151
        %v2153 = vsub.s32 4294967266, %v2148
        %v2154 = vadd.s32 %v2153, 127
        %v2155 = vshll.u32 %v2154, 23
        %v2156 = vor.u32 4788187, %v2155
        %v2157 = vand.u32 2147483647, %v2156
        %v2159 = vcvt.s32.f32 %v2152
        %v2160 = vmul.f32 %v2159, %v2157
        %v2161 = vxor.u32 %v2160, 2147483648
        %v2162 = vsel %vm2079, %v2161, %v2160
        %v2163 = vsub.s32 4, %v2139
        %v2164 = vsel %vm2079, %v2163, %v2139
        %v2165 = vsel %vm2078, %v500, %v2162
        %v2166 = vsel %vm2078, 0, %v2164
        %v2167 = vcosq.f32.pop %v2165
        %v2168 = vsinq.f32.pop %v2165
        %vm2169 = vweird.f32 %v500
        %v2170 = vadd.s32 %v2166, 3
        %v2171 = vand.u32 %v2170, 3
        %vm2172 = vcmp.lt.s32.totalorder %v2171, 2
        %vm2173 = vcmp.eq.s32.totalorder %v2171, 0
        %v2174 = vxor.u32 %v2168, 2147483648
        %v2175 = vsel %vm2173, %v2167, %v2174
        %vm2176 = vcmp.eq.s32.totalorder %v2171, 2
        %v2177 = vxor.u32 %v2167, 2147483648
        %v2178 = vsel %vm2176, %v2177, %v2168
        %v2179 = vsel %vm2172, %v2175, %v2178
        %v2180 = vsel %vm2169, nan, %v2179
        %v2181 = vand.u32 2147483647, %v501
        %vm2182 = vcmp.le.f32.partialorder %v2181, 0.7853982
        %vm2183 = vcmp.lt.s32.totalorder %v501, 0
        %v2184 = vand.u32 %v501, 2139095040
        %v2185 = vshrl.u32 %v2184, 23
        %v2186 = vsub.s32 %v2185, 127
        %v2187 = vand.u32 2147483647, %v501
        %v2188 = vand.u32 %v2187, 8388607
        %v2189 = vor.u32 %v2188, 8388608
        %v2190 = vsub.s32 0, %v2189
        %v2191 = vadd.s32 %v2186, 1
        %vm2192 = vcmp.gt.s32.totalorder %v2191, 0
        %v2193 = vsel %vm2192, %v2191, 0
        %v2194 = vshrl.u32 %v2193, 5
        %v2195 = vand.u32 %v2193, 31
        %v2196 = vsub.s32 32, %v2195
        %v2197 = vshrl.u32 683565275, %v2196
        %v2198 = vshll.u32 683565275, %v2195
        %v2199 = vshrl.u32 2475754826, %v2196
        %v2200 = vor.u32 %v2198, %v2199
        %v2201 = vshll.u32 2475754826, %v2195
        %v2202 = vshrl.u32 2131351028, %v2196
        %v2203 = vor.u32 %v2201, %v2202
        %v2204 = vshll.u32 2131351028, %v2195
        %v2205 = vshrl.u32 2102212464, %v2196
        %v2206 = vor.u32 %v2204, %v2205
        %v2207 = vshll.u32 2102212464, %v2195
        %v2208 = vshrl.u32 920167782, %v2196
        %v2209 = vor.u32 %v2207, %v2208
        %v2210 = vshll.u32 920167782, %v2195
        %v2211 = vshrl.u32 1326507024, %v2196
        %v2212 = vor.u32 %v2210, %v2211
        %vm2213 = vcmp.lt.s32.totalorder %v2194, 1
        %vm2214 = vcmp.lt.s32.totalorder %v2194, 2
        %vm2215 = vcmp.lt.s32.totalorder %v2194, 3
        %vm2216 = vcmp.lt.s32.totalorder %v2194, 4
        %v2217 = vsel %vm2213, %v2197, %v2200
        %v2218 = vsel %vm2216, %v2206, 2102212464
        %v2219 = vsel %vm2215, %v2203, %v2218
        %v2220 = vsel %vm2214, %v2217, %v2219
        %v2221 = vsel %vm2213, %v2200, %v2203
        %v2222 = vsel %vm2216, %v2209, 920167782
        %v2223 = vsel %vm2215, %v2206, %v2222
        %v2224 = vsel %vm2214, %v2221, %v2223
        %v2225 = vsel %vm2213, %v2203, %v2206
        %v2226 = vsel %vm2216, %v2212, 1326507024
        %v2227 = vsel %vm2215, %v2209, %v2226
        %v2228 = vsel %vm2214, %v2225, %v2227
        %v2229 = vshll.u32 %v2189, 8
        %v2230 = vmul.u32.u64.compose %v2229, %v2228
        %v2231 = vextract.low.u32 %v2230
        %v2232 = vextract.high.u32 %v2230
        %v2233 = vmul.u32.u64.compose %v2229, %v2224
        %v2234 = vextract.low.u32 %v2233
        %v2235 = vextract.high.u32 %v2233
        %v2236 = vmul.u32 %v2229, %v2220
        %v2237 = vadd.s32 %v2232, %v2234
        %vm2238 = vc.u32 %v2232, %v2234
        %v2239 = vadd.s32 %v2235, 1
        %v2240 = vsel %vm2238, %v2239, %v2235
        %v2241 = vadd.s32 %v2236, %v2240
        %v2242 = vadd.s32 %v2241, 536870912
        %v2243 = vshrl.u32 %v2242, 30
        %v2244 = vshll.u32 %v2243, 30
        %v2245 = vsub.s32 %v2241, %v2244
        %vm2246 = vcmp.lt.s32.totalorder %v2245, 0
        %v2247 = vsub.s32 0, %v2245
        %v2248 = vsel %vm2246, %v2247, %v2245
        %v2249 = vclz %v2248
        %v2250 = vsub.s32 %v2249, 2
        %vm2251 = vcmp.gt.s32.totalorder 0, %v2250
        %v2252 = vsel %vm2251, 0, %v2250
        %v2253 = vsub.s32 32, %v2252
        %v2254 = vshll.u32 %v2245, %v2252
        %v2255 = vshrl.u32 %v2237, %v2253
        %v2256 = vor.u32 %v2254, %v2255
        %v2257 = vsub.s32 4294967266, %v2252
        %v2258 = vadd.s32 %v2257, 127
        %v2259 = vshll.u32 %v2258, 23
        %v2260 = vor.u32 4788187, %v2259
        %v2261 = vand.u32 2147483647, %v2260
        %v2263 = vcvt.s32.f32 %v2256
        %v2264 = vmul.f32 %v2263, %v2261
        %v2265 = vxor.u32 %v2264, 2147483648
        %v2266 = vsel %vm2183, %v2265, %v2264
        %v2267 = vsub.s32 4, %v2243
        %v2268 = vsel %vm2183, %v2267, %v2243
        %v2269 = vsel %vm2182, %v501, %v2266
        %v2270 = vsel %vm2182, 0, %v2268
        %v2271 = vcosq.f32.pop %v2269
        %v2272 = vsinq.f32.pop %v2269
        %vm2273 = vweird.f32 %v501
        %v2274 = vadd.s32 %v2270, 3
        %v2275 = vand.u32 %v2274, 3
        %vm2276 = vcmp.lt.s32.totalorder %v2275, 2
        %vm2277 = vcmp.eq.s32.totalorder %v2275, 0
        %v2278 = vxor.u32 %v2272, 2147483648
        %v2279 = vsel %vm2277, %v2271, %v2278
        %vm2280 = vcmp.eq.s32.totalorder %v2275, 2
        %v2281 = vxor.u32 %v2271, 2147483648
        %v2282 = vsel %vm2280, %v2281, %v2272
        %v2283 = vsel %vm2276, %v2279, %v2282
        %v2284 = vsel %vm2273, nan, %v2283
        %v2285 = vand.u32 2147483647, %v502
        %vm2286 = vcmp.le.f32.partialorder %v2285, 0.7853982
        %vm2287 = vcmp.lt.s32.totalorder %v502, 0
        %v2288 = vand.u32 %v502, 2139095040
        %v2289 = vshrl.u32 %v2288, 23
        %v2290 = vsub.s32 %v2289, 127
        %v2291 = vand.u32 2147483647, %v502
        %v2292 = vand.u32 %v2291, 8388607
        %v2293 = vor.u32 %v2292, 8388608
        %v2294 = vsub.s32 0, %v2293
        %v2295 = vadd.s32 %v2290, 1
        %vm2296 = vcmp.gt.s32.totalorder %v2295, 0
        %v2297 = vsel %vm2296, %v2295, 0
        %v2298 = vshrl.u32 %v2297, 5
        %v2299 = vand.u32 %v2297, 31
        %v2300 = vsub.s32 32, %v2299
        %v2301 = vshrl.u32 683565275, %v2300
        %v2302 = vshll.u32 683565275, %v2299
        %v2303 = vshrl.u32 2475754826, %v2300
        %v2304 = vor.u32 %v2302, %v2303
        %v2305 = vshll.u32 2475754826, %v2299
        %v2306 = vshrl.u32 2131351028, %v2300
        %v2307 = vor.u32 %v2305, %v2306
        %v2308 = vshll.u32 2131351028, %v2299
        %v2309 = vshrl.u32 2102212464, %v2300
        %v2310 = vor.u32 %v2308, %v2309
        %v2311 = vshll.u32 2102212464, %v2299
        %v2312 = vshrl.u32 920167782, %v2300
        %v2313 = vor.u32 %v2311, %v2312
        %v2314 = vshll.u32 920167782, %v2299
        %v2315 = vshrl.u32 1326507024, %v2300
        %v2316 = vor.u32 %v2314, %v2315
        %vm2317 = vcmp.lt.s32.totalorder %v2298, 1
        %vm2318 = vcmp.lt.s32.totalorder %v2298, 2
        %vm2319 = vcmp.lt.s32.totalorder %v2298, 3
        %vm2320 = vcmp.lt.s32.totalorder %v2298, 4
        %v2321 = vsel %vm2317, %v2301, %v2304
        %v2322 = vsel %vm2320, %v2310, 2102212464
        %v2323 = vsel %vm2319, %v2307, %v2322
        %v2324 = vsel %vm2318, %v2321, %v2323
        %v2325 = vsel %vm2317, %v2304, %v2307
        %v2326 = vsel %vm2320, %v2313, 920167782
        %v2327 = vsel %vm2319, %v2310, %v2326
        %v2328 = vsel %vm2318, %v2325, %v2327
        %v2329 = vsel %vm2317, %v2307, %v2310
        %v2330 = vsel %vm2320, %v2316, 1326507024
        %v2331 = vsel %vm2319, %v2313, %v2330
        %v2332 = vsel %vm2318, %v2329, %v2331
        %v2333 = vshll.u32 %v2293, 8
        %v2334 = vmul.u32.u64.compose %v2333, %v2332
        %v2335 = vextract.low.u32 %v2334
        %v2336 = vextract.high.u32 %v2334
        %v2337 = vmul.u32.u64.compose %v2333, %v2328
        %v2338 = vextract.low.u32 %v2337
        %v2339 = vextract.high.u32 %v2337
        %v2340 = vmul.u32 %v2333, %v2324
        %v2341 = vadd.s32 %v2336, %v2338
        %vm2342 = vc.u32 %v2336, %v2338
        %v2343 = vadd.s32 %v2339, 1
        %v2344 = vsel %vm2342, %v2343, %v2339
        %v2345 = vadd.s32 %v2340, %v2344
        %v2346 = vadd.s32 %v2345, 536870912
        %v2347 = vshrl.u32 %v2346, 30
        %v2348 = vshll.u32 %v2347, 30
        %v2349 = vsub.s32 %v2345, %v2348
        %vm2350 = vcmp.lt.s32.totalorder %v2349, 0
        %v2351 = vsub.s32 0, %v2349
        %v2352 = vsel %vm2350, %v2351, %v2349
        %v2353 = vclz %v2352
        %v2354 = vsub.s32 %v2353, 2
        %vm2355 = vcmp.gt.s32.totalorder 0, %v2354
        %v2356 = vsel %vm2355, 0, %v2354
        %v2357 = vsub.s32 32, %v2356
        %v2358 = vshll.u32 %v2349, %v2356
        %v2359 = vshrl.u32 %v2341, %v2357
        %v2360 = vor.u32 %v2358, %v2359
        %v2361 = vsub.s32 4294967266, %v2356
        %v2362 = vadd.s32 %v2361, 127
        %v2363 = vshll.u32 %v2362, 23
        %v2364 = vor.u32 4788187, %v2363
        %v2365 = vand.u32 2147483647, %v2364
        %v2367 = vcvt.s32.f32 %v2360
        %v2368 = vmul.f32 %v2367, %v2365
        %v2369 = vxor.u32 %v2368, 2147483648
        %v2370 = vsel %vm2287, %v2369, %v2368
        %v2371 = vsub.s32 4, %v2347
        %v2372 = vsel %vm2287, %v2371, %v2347
        %v2373 = vsel %vm2286, %v502, %v2370
        %v2374 = vsel %vm2286, 0, %v2372
        %v2375 = vcosq.f32.pop %v2373
        %v2376 = vsinq.f32.pop %v2373
        %vm2377 = vweird.f32 %v502
        %v2378 = vadd.s32 %v2374, 3
        %v2379 = vand.u32 %v2378, 3
        %vm2380 = vcmp.lt.s32.totalorder %v2379, 2
        %vm2381 = vcmp.eq.s32.totalorder %v2379, 0
        %v2382 = vxor.u32 %v2376, 2147483648
        %v2383 = vsel %vm2381, %v2375, %v2382
        %vm2384 = vcmp.eq.s32.totalorder %v2379, 2
        %v2385 = vxor.u32 %v2375, 2147483648
        %v2386 = vsel %vm2384, %v2385, %v2376
        %v2387 = vsel %vm2380, %v2383, %v2386
        %v2388 = vsel %vm2377, nan, %v2387
        %v2389 = vand.u32 2147483647, %v503
        %vm2390 = vcmp.le.f32.partialorder %v2389, 0.7853982
        %vm2391 = vcmp.lt.s32.totalorder %v503, 0
        %v2392 = vand.u32 %v503, 2139095040
        %v2393 = vshrl.u32 %v2392, 23
        %v2394 = vsub.s32 %v2393, 127
        %v2395 = vand.u32 2147483647, %v503
        %v2396 = vand.u32 %v2395, 8388607
        %v2397 = vor.u32 %v2396, 8388608
        %v2398 = vsub.s32 0, %v2397
        %v2399 = vadd.s32 %v2394, 1
        %vm2400 = vcmp.gt.s32.totalorder %v2399, 0
        %v2401 = vsel %vm2400, %v2399, 0
        %v2402 = vshrl.u32 %v2401, 5
        %v2403 = vand.u32 %v2401, 31
        %v2404 = vsub.s32 32, %v2403
        %v2405 = vshrl.u32 683565275, %v2404
        %v2406 = vshll.u32 683565275, %v2403
        %v2407 = vshrl.u32 2475754826, %v2404
        %v2408 = vor.u32 %v2406, %v2407
        %v2409 = vshll.u32 2475754826, %v2403
        %v2410 = vshrl.u32 2131351028, %v2404
        %v2411 = vor.u32 %v2409, %v2410
        %v2412 = vshll.u32 2131351028, %v2403
        %v2413 = vshrl.u32 2102212464, %v2404
        %v2414 = vor.u32 %v2412, %v2413
        %v2415 = vshll.u32 2102212464, %v2403
        %v2416 = vshrl.u32 920167782, %v2404
        %v2417 = vor.u32 %v2415, %v2416
        %v2418 = vshll.u32 920167782, %v2403
        %v2419 = vshrl.u32 1326507024, %v2404
        %v2420 = vor.u32 %v2418, %v2419
        %vm2421 = vcmp.lt.s32.totalorder %v2402, 1
        %vm2422 = vcmp.lt.s32.totalorder %v2402, 2
        %vm2423 = vcmp.lt.s32.totalorder %v2402, 3
        %vm2424 = vcmp.lt.s32.totalorder %v2402, 4
        %v2425 = vsel %vm2421, %v2405, %v2408
        %v2426 = vsel %vm2424, %v2414, 2102212464
        %v2427 = vsel %vm2423, %v2411, %v2426
        %v2428 = vsel %vm2422, %v2425, %v2427
        %v2429 = vsel %vm2421, %v2408, %v2411
        %v2430 = vsel %vm2424, %v2417, 920167782
        %v2431 = vsel %vm2423, %v2414, %v2430
        %v2432 = vsel %vm2422, %v2429, %v2431
        %v2433 = vsel %vm2421, %v2411, %v2414
        %v2434 = vsel %vm2424, %v2420, 1326507024
        %v2435 = vsel %vm2423, %v2417, %v2434
        %v2436 = vsel %vm2422, %v2433, %v2435
        %v2437 = vshll.u32 %v2397, 8
        %v2438 = vmul.u32.u64.compose %v2437, %v2436
        %v2439 = vextract.low.u32 %v2438
        %v2440 = vextract.high.u32 %v2438
        %v2441 = vmul.u32.u64.compose %v2437, %v2432
        %v2442 = vextract.low.u32 %v2441
        %v2443 = vextract.high.u32 %v2441
        %v2444 = vmul.u32 %v2437, %v2428
        %v2445 = vadd.s32 %v2440, %v2442
        %vm2446 = vc.u32 %v2440, %v2442
        %v2447 = vadd.s32 %v2443, 1
        %v2448 = vsel %vm2446, %v2447, %v2443
        %v2449 = vadd.s32 %v2444, %v2448
        %v2450 = vadd.s32 %v2449, 536870912
        %v2451 = vshrl.u32 %v2450, 30
        %v2452 = vshll.u32 %v2451, 30
        %v2453 = vsub.s32 %v2449, %v2452
        %vm2454 = vcmp.lt.s32.totalorder %v2453, 0
        %v2455 = vsub.s32 0, %v2453
        %v2456 = vsel %vm2454, %v2455, %v2453
        %v2457 = vclz %v2456
        %v2458 = vsub.s32 %v2457, 2
        %vm2459 = vcmp.gt.s32.totalorder 0, %v2458
        %v2460 = vsel %vm2459, 0, %v2458
        %v2461 = vsub.s32 32, %v2460
        %v2462 = vshll.u32 %v2453, %v2460
        %v2463 = vshrl.u32 %v2445, %v2461
        %v2464 = vor.u32 %v2462, %v2463
        %v2465 = vsub.s32 4294967266, %v2460
        %v2466 = vadd.s32 %v2465, 127
        %v2467 = vshll.u32 %v2466, 23
        %v2468 = vor.u32 4788187, %v2467
        %v2469 = vand.u32 2147483647, %v2468
        %v2471 = vcvt.s32.f32 %v2464
        %v2472 = vmul.f32 %v2471, %v2469
        %v2473 = vxor.u32 %v2472, 2147483648
        %v2474 = vsel %vm2391, %v2473, %v2472
        %v2475 = vsub.s32 4, %v2451
        %v2476 = vsel %vm2391, %v2475, %v2451
        %v2477 = vsel %vm2390, %v503, %v2474
        %v2478 = vsel %vm2390, 0, %v2476
        %v2479 = vcosq.f32.pop %v2477
        %v2480 = vsinq.f32.pop %v2477
        %vm2481 = vweird.f32 %v503
        %v2482 = vadd.s32 %v2478, 3
        %v2483 = vand.u32 %v2482, 3
        %vm2484 = vcmp.lt.s32.totalorder %v2483, 2
        %vm2485 = vcmp.eq.s32.totalorder %v2483, 0
        %v2486 = vxor.u32 %v2480, 2147483648
        %v2487 = vsel %vm2485, %v2479, %v2486
        %vm2488 = vcmp.eq.s32.totalorder %v2483, 2
        %v2489 = vxor.u32 %v2479, 2147483648
        %v2490 = vsel %vm2488, %v2489, %v2480
        %v2491 = vsel %vm2484, %v2487, %v2490
        %v2492 = vsel %vm2481, nan, %v2491
        %v2493 = vand.u32 2147483647, %v504
        %vm2494 = vcmp.le.f32.partialorder %v2493, 0.7853982
        %vm2495 = vcmp.lt.s32.totalorder %v504, 0
        %v2496 = vand.u32 %v504, 2139095040
        %v2497 = vshrl.u32 %v2496, 23
        %v2498 = vsub.s32 %v2497, 127
        %v2499 = vand.u32 2147483647, %v504
        %v2500 = vand.u32 %v2499, 8388607
        %v2501 = vor.u32 %v2500, 8388608
        %v2502 = vsub.s32 0, %v2501
        %v2503 = vadd.s32 %v2498, 1
        %vm2504 = vcmp.gt.s32.totalorder %v2503, 0
        %v2505 = vsel %vm2504, %v2503, 0
        %v2506 = vshrl.u32 %v2505, 5
        %v2507 = vand.u32 %v2505, 31
        %v2508 = vsub.s32 32, %v2507
        %v2509 = vshrl.u32 683565275, %v2508
        %v2510 = vshll.u32 683565275, %v2507
        %v2511 = vshrl.u32 2475754826, %v2508
        %v2512 = vor.u32 %v2510, %v2511
        %v2513 = vshll.u32 2475754826, %v2507
        %v2514 = vshrl.u32 2131351028, %v2508
        %v2515 = vor.u32 %v2513, %v2514
        %v2516 = vshll.u32 2131351028, %v2507
        %v2517 = vshrl.u32 2102212464, %v2508
        %v2518 = vor.u32 %v2516, %v2517
        %v2519 = vshll.u32 2102212464, %v2507
        %v2520 = vshrl.u32 920167782, %v2508
        %v2521 = vor.u32 %v2519, %v2520
        %v2522 = vshll.u32 920167782, %v2507
        %v2523 = vshrl.u32 1326507024, %v2508
        %v2524 = vor.u32 %v2522, %v2523
        %vm2525 = vcmp.lt.s32.totalorder %v2506, 1
        %vm2526 = vcmp.lt.s32.totalorder %v2506, 2
        %vm2527 = vcmp.lt.s32.totalorder %v2506, 3
        %vm2528 = vcmp.lt.s32.totalorder %v2506, 4
        %v2529 = vsel %vm2525, %v2509, %v2512
        %v2530 = vsel %vm2528, %v2518, 2102212464
        %v2531 = vsel %vm2527, %v2515, %v2530
        %v2532 = vsel %vm2526, %v2529, %v2531
        %v2533 = vsel %vm2525, %v2512, %v2515
        %v2534 = vsel %vm2528, %v2521, 920167782
        %v2535 = vsel %vm2527, %v2518, %v2534
        %v2536 = vsel %vm2526, %v2533, %v2535
        %v2537 = vsel %vm2525, %v2515, %v2518
        %v2538 = vsel %vm2528, %v2524, 1326507024
        %v2539 = vsel %vm2527, %v2521, %v2538
        %v2540 = vsel %vm2526, %v2537, %v2539
        %v2541 = vshll.u32 %v2501, 8
        %v2542 = vmul.u32.u64.compose %v2541, %v2540
        %v2543 = vextract.low.u32 %v2542
        %v2544 = vextract.high.u32 %v2542
        %v2545 = vmul.u32.u64.compose %v2541, %v2536
        %v2546 = vextract.low.u32 %v2545
        %v2547 = vextract.high.u32 %v2545
        %v2548 = vmul.u32 %v2541, %v2532
        %v2549 = vadd.s32 %v2544, %v2546
        %vm2550 = vc.u32 %v2544, %v2546
        %v2551 = vadd.s32 %v2547, 1
        %v2552 = vsel %vm2550, %v2551, %v2547
        %v2553 = vadd.s32 %v2548, %v2552
        %v2554 = vadd.s32 %v2553, 536870912
        %v2555 = vshrl.u32 %v2554, 30
        %v2556 = vshll.u32 %v2555, 30
        %v2557 = vsub.s32 %v2553, %v2556
        %vm2558 = vcmp.lt.s32.totalorder %v2557, 0
        %v2559 = vsub.s32 0, %v2557
        %v2560 = vsel %vm2558, %v2559, %v2557
        %v2561 = vclz %v2560
        %v2562 = vsub.s32 %v2561, 2
        %vm2563 = vcmp.gt.s32.totalorder 0, %v2562
        %v2564 = vsel %vm2563, 0, %v2562
        %v2565 = vsub.s32 32, %v2564
        %v2566 = vshll.u32 %v2557, %v2564
        %v2567 = vshrl.u32 %v2549, %v2565
        %v2568 = vor.u32 %v2566, %v2567
        %v2569 = vsub.s32 4294967266, %v2564
        %v2570 = vadd.s32 %v2569, 127
        %v2571 = vshll.u32 %v2570, 23
        %v2572 = vor.u32 4788187, %v2571
        %v2573 = vand.u32 2147483647, %v2572
        %v2575 = vcvt.s32.f32 %v2568
        %v2576 = vmul.f32 %v2575, %v2573
        %v2577 = vxor.u32 %v2576, 2147483648
        %v2578 = vsel %vm2495, %v2577, %v2576
        %v2579 = vsub.s32 4, %v2555
        %v2580 = vsel %vm2495, %v2579, %v2555
        %v2581 = vsel %vm2494, %v504, %v2578
        %v2582 = vsel %vm2494, 0, %v2580
        %v2583 = vcosq.f32.pop %v2581
        %v2584 = vsinq.f32.pop %v2581
        %vm2585 = vweird.f32 %v504
        %v2586 = vadd.s32 %v2582, 3
        %v2587 = vand.u32 %v2586, 3
        %vm2588 = vcmp.lt.s32.totalorder %v2587, 2
        %vm2589 = vcmp.eq.s32.totalorder %v2587, 0
        %v2590 = vxor.u32 %v2584, 2147483648
        %v2591 = vsel %vm2589, %v2583, %v2590
        %vm2592 = vcmp.eq.s32.totalorder %v2587, 2
        %v2593 = vxor.u32 %v2583, 2147483648
        %v2594 = vsel %vm2592, %v2593, %v2584
        %v2595 = vsel %vm2588, %v2591, %v2594
        %v2596 = vsel %vm2585, nan, %v2595
        %v2597 = vand.u32 2147483647, %v505
        %vm2598 = vcmp.le.f32.partialorder %v2597, 0.7853982
        %vm2599 = vcmp.lt.s32.totalorder %v505, 0
        %v2600 = vand.u32 %v505, 2139095040
        %v2601 = vshrl.u32 %v2600, 23
        %v2602 = vsub.s32 %v2601, 127
        %v2603 = vand.u32 2147483647, %v505
        %v2604 = vand.u32 %v2603, 8388607
        %v2605 = vor.u32 %v2604, 8388608
        %v2606 = vsub.s32 0, %v2605
        %v2607 = vadd.s32 %v2602, 1
        %vm2608 = vcmp.gt.s32.totalorder %v2607, 0
        %v2609 = vsel %vm2608, %v2607, 0
        %v2610 = vshrl.u32 %v2609, 5
        %v2611 = vand.u32 %v2609, 31
        %v2612 = vsub.s32 32, %v2611
        %v2613 = vshrl.u32 683565275, %v2612
        %v2614 = vshll.u32 683565275, %v2611
        %v2615 = vshrl.u32 2475754826, %v2612
        %v2616 = vor.u32 %v2614, %v2615
        %v2617 = vshll.u32 2475754826, %v2611
        %v2618 = vshrl.u32 2131351028, %v2612
        %v2619 = vor.u32 %v2617, %v2618
        %v2620 = vshll.u32 2131351028, %v2611
        %v2621 = vshrl.u32 2102212464, %v2612
        %v2622 = vor.u32 %v2620, %v2621
        %v2623 = vshll.u32 2102212464, %v2611
        %v2624 = vshrl.u32 920167782, %v2612
        %v2625 = vor.u32 %v2623, %v2624
        %v2626 = vshll.u32 920167782, %v2611
        %v2627 = vshrl.u32 1326507024, %v2612
        %v2628 = vor.u32 %v2626, %v2627
        %vm2629 = vcmp.lt.s32.totalorder %v2610, 1
        %vm2630 = vcmp.lt.s32.totalorder %v2610, 2
        %vm2631 = vcmp.lt.s32.totalorder %v2610, 3
        %vm2632 = vcmp.lt.s32.totalorder %v2610, 4
        %v2633 = vsel %vm2629, %v2613, %v2616
        %v2634 = vsel %vm2632, %v2622, 2102212464
        %v2635 = vsel %vm2631, %v2619, %v2634
        %v2636 = vsel %vm2630, %v2633, %v2635
        %v2637 = vsel %vm2629, %v2616, %v2619
        %v2638 = vsel %vm2632, %v2625, 920167782
        %v2639 = vsel %vm2631, %v2622, %v2638
        %v2640 = vsel %vm2630, %v2637, %v2639
        %v2641 = vsel %vm2629, %v2619, %v2622
        %v2642 = vsel %vm2632, %v2628, 1326507024
        %v2643 = vsel %vm2631, %v2625, %v2642
        %v2644 = vsel %vm2630, %v2641, %v2643
        %v2645 = vshll.u32 %v2605, 8
        %v2646 = vmul.u32.u64.compose %v2645, %v2644
        %v2647 = vextract.low.u32 %v2646
        %v2648 = vextract.high.u32 %v2646
        %v2649 = vmul.u32.u64.compose %v2645, %v2640
        %v2650 = vextract.low.u32 %v2649
        %v2651 = vextract.high.u32 %v2649
        %v2652 = vmul.u32 %v2645, %v2636
        %v2653 = vadd.s32 %v2648, %v2650
        %vm2654 = vc.u32 %v2648, %v2650
        %v2655 = vadd.s32 %v2651, 1
        %v2656 = vsel %vm2654, %v2655, %v2651
        %v2657 = vadd.s32 %v2652, %v2656
        %v2658 = vadd.s32 %v2657, 536870912
        %v2659 = vshrl.u32 %v2658, 30
        %v2660 = vshll.u32 %v2659, 30
        %v2661 = vsub.s32 %v2657, %v2660
        %vm2662 = vcmp.lt.s32.totalorder %v2661, 0
        %v2663 = vsub.s32 0, %v2661
        %v2664 = vsel %vm2662, %v2663, %v2661
        %v2665 = vclz %v2664
        %v2666 = vsub.s32 %v2665, 2
        %vm2667 = vcmp.gt.s32.totalorder 0, %v2666
        %v2668 = vsel %vm2667, 0, %v2666
        %v2669 = vsub.s32 32, %v2668
        %v2670 = vshll.u32 %v2661, %v2668
        %v2671 = vshrl.u32 %v2653, %v2669
        %v2672 = vor.u32 %v2670, %v2671
        %v2673 = vsub.s32 4294967266, %v2668
        %v2674 = vadd.s32 %v2673, 127
        %v2675 = vshll.u32 %v2674, 23
        %v2676 = vor.u32 4788187, %v2675
        %v2677 = vand.u32 2147483647, %v2676
        %v2679 = vcvt.s32.f32 %v2672
        %v2680 = vmul.f32 %v2679, %v2677
        %v2681 = vxor.u32 %v2680, 2147483648
        %v2682 = vsel %vm2599, %v2681, %v2680
        %v2683 = vsub.s32 4, %v2659
        %v2684 = vsel %vm2599, %v2683, %v2659
        %v2685 = vsel %vm2598, %v505, %v2682
        %v2686 = vsel %vm2598, 0, %v2684
        %v2687 = vcosq.f32.pop %v2685
        %v2688 = vsinq.f32.pop %v2685
        %vm2689 = vweird.f32 %v505
        %v2690 = vadd.s32 %v2686, 3
        %v2691 = vand.u32 %v2690, 3
        %vm2692 = vcmp.lt.s32.totalorder %v2691, 2
        %vm2693 = vcmp.eq.s32.totalorder %v2691, 0
        %v2694 = vxor.u32 %v2688, 2147483648
        %v2695 = vsel %vm2693, %v2687, %v2694
        %vm2696 = vcmp.eq.s32.totalorder %v2691, 2
        %v2697 = vxor.u32 %v2687, 2147483648
        %v2698 = vsel %vm2696, %v2697, %v2688
        %v2699 = vsel %vm2692, %v2695, %v2698
        %v2700 = vsel %vm2689, nan, %v2699
        %v2701 = vand.u32 2147483647, %v506
        %vm2702 = vcmp.le.f32.partialorder %v2701, 0.7853982
        %vm2703 = vcmp.lt.s32.totalorder %v506, 0
        %v2704 = vand.u32 %v506, 2139095040
        %v2705 = vshrl.u32 %v2704, 23
        %v2706 = vsub.s32 %v2705, 127
        %v2707 = vand.u32 2147483647, %v506
        %v2708 = vand.u32 %v2707, 8388607
        %v2709 = vor.u32 %v2708, 8388608
        %v2710 = vsub.s32 0, %v2709
        %v2711 = vadd.s32 %v2706, 1
        %vm2712 = vcmp.gt.s32.totalorder %v2711, 0
        %v2713 = vsel %vm2712, %v2711, 0
        %v2714 = vshrl.u32 %v2713, 5
        %v2715 = vand.u32 %v2713, 31
        %v2716 = vsub.s32 32, %v2715
        %v2717 = vshrl.u32 683565275, %v2716
        %v2718 = vshll.u32 683565275, %v2715
        %v2719 = vshrl.u32 2475754826, %v2716
        %v2720 = vor.u32 %v2718, %v2719
        %v2721 = vshll.u32 2475754826, %v2715
        %v2722 = vshrl.u32 2131351028, %v2716
        %v2723 = vor.u32 %v2721, %v2722
        %v2724 = vshll.u32 2131351028, %v2715
        %v2725 = vshrl.u32 2102212464, %v2716
        %v2726 = vor.u32 %v2724, %v2725
        %v2727 = vshll.u32 2102212464, %v2715
        %v2728 = vshrl.u32 920167782, %v2716
        %v2729 = vor.u32 %v2727, %v2728
        %v2730 = vshll.u32 920167782, %v2715
        %v2731 = vshrl.u32 1326507024, %v2716
        %v2732 = vor.u32 %v2730, %v2731
        %vm2733 = vcmp.lt.s32.totalorder %v2714, 1
        %vm2734 = vcmp.lt.s32.totalorder %v2714, 2
        %vm2735 = vcmp.lt.s32.totalorder %v2714, 3
        %vm2736 = vcmp.lt.s32.totalorder %v2714, 4
        %v2737 = vsel %vm2733, %v2717, %v2720
        %v2738 = vsel %vm2736, %v2726, 2102212464
        %v2739 = vsel %vm2735, %v2723, %v2738
        %v2740 = vsel %vm2734, %v2737, %v2739
        %v2741 = vsel %vm2733, %v2720, %v2723
        %v2742 = vsel %vm2736, %v2729, 920167782
        %v2743 = vsel %vm2735, %v2726, %v2742
        %v2744 = vsel %vm2734, %v2741, %v2743
        %v2745 = vsel %vm2733, %v2723, %v2726
        %v2746 = vsel %vm2736, %v2732, 1326507024
        %v2747 = vsel %vm2735, %v2729, %v2746
        %v2748 = vsel %vm2734, %v2745, %v2747
        %v2749 = vshll.u32 %v2709, 8
        %v2750 = vmul.u32.u64.compose %v2749, %v2748
        %v2751 = vextract.low.u32 %v2750
        %v2752 = vextract.high.u32 %v2750
        %v2753 = vmul.u32.u64.compose %v2749, %v2744
        %v2754 = vextract.low.u32 %v2753
        %v2755 = vextract.high.u32 %v2753
        %v2756 = vmul.u32 %v2749, %v2740
        %v2757 = vadd.s32 %v2752, %v2754
        %vm2758 = vc.u32 %v2752, %v2754
        %v2759 = vadd.s32 %v2755, 1
        %v2760 = vsel %vm2758, %v2759, %v2755
        %v2761 = vadd.s32 %v2756, %v2760
        %v2762 = vadd.s32 %v2761, 536870912
        %v2763 = vshrl.u32 %v2762, 30
        %v2764 = vshll.u32 %v2763, 30
        %v2765 = vsub.s32 %v2761, %v2764
        %vm2766 = vcmp.lt.s32.totalorder %v2765, 0
        %v2767 = vsub.s32 0, %v2765
        %v2768 = vsel %vm2766, %v2767, %v2765
        %v2769 = vclz %v2768
        %v2770 = vsub.s32 %v2769, 2
        %vm2771 = vcmp.gt.s32.totalorder 0, %v2770
        %v2772 = vsel %vm2771, 0, %v2770
        %v2773 = vsub.s32 32, %v2772
        %v2774 = vshll.u32 %v2765, %v2772
        %v2775 = vshrl.u32 %v2757, %v2773
        %v2776 = vor.u32 %v2774, %v2775
        %v2777 = vsub.s32 4294967266, %v2772
        %v2778 = vadd.s32 %v2777, 127
        %v2779 = vshll.u32 %v2778, 23
        %v2780 = vor.u32 4788187, %v2779
        %v2781 = vand.u32 2147483647, %v2780
        %v2783 = vcvt.s32.f32 %v2776
        %v2784 = vmul.f32 %v2783, %v2781
        %v2785 = vxor.u32 %v2784, 2147483648
        %v2786 = vsel %vm2703, %v2785, %v2784
        %v2787 = vsub.s32 4, %v2763
        %v2788 = vsel %vm2703, %v2787, %v2763
        %v2789 = vsel %vm2702, %v506, %v2786
        %v2790 = vsel %vm2702, 0, %v2788
        %v2791 = vcosq.f32.pop %v2789
        %v2792 = vsinq.f32.pop %v2789
        %vm2793 = vweird.f32 %v506
        %v2794 = vadd.s32 %v2790, 3
        %v2795 = vand.u32 %v2794, 3
        %vm2796 = vcmp.lt.s32.totalorder %v2795, 2
        %vm2797 = vcmp.eq.s32.totalorder %v2795, 0
        %v2798 = vxor.u32 %v2792, 2147483648
        %v2799 = vsel %vm2797, %v2791, %v2798
        %vm2800 = vcmp.eq.s32.totalorder %v2795, 2
        %v2801 = vxor.u32 %v2791, 2147483648
        %v2802 = vsel %vm2800, %v2801, %v2792
        %v2803 = vsel %vm2796, %v2799, %v2802
        %v2804 = vsel %vm2793, nan, %v2803
        %v2805 = vand.u32 2147483647, %v507
        %vm2806 = vcmp.le.f32.partialorder %v2805, 0.7853982
        %vm2807 = vcmp.lt.s32.totalorder %v507, 0
        %v2808 = vand.u32 %v507, 2139095040
        %v2809 = vshrl.u32 %v2808, 23
        %v2810 = vsub.s32 %v2809, 127
        %v2811 = vand.u32 2147483647, %v507
        %v2812 = vand.u32 %v2811, 8388607
        %v2813 = vor.u32 %v2812, 8388608
        %v2814 = vsub.s32 0, %v2813
        %v2815 = vadd.s32 %v2810, 1
        %vm2816 = vcmp.gt.s32.totalorder %v2815, 0
        %v2817 = vsel %vm2816, %v2815, 0
        %v2818 = vshrl.u32 %v2817, 5
        %v2819 = vand.u32 %v2817, 31
        %v2820 = vsub.s32 32, %v2819
        %v2821 = vshrl.u32 683565275, %v2820
        %v2822 = vshll.u32 683565275, %v2819
        %v2823 = vshrl.u32 2475754826, %v2820
        %v2824 = vor.u32 %v2822, %v2823
        %v2825 = vshll.u32 2475754826, %v2819
        %v2826 = vshrl.u32 2131351028, %v2820
        %v2827 = vor.u32 %v2825, %v2826
        %v2828 = vshll.u32 2131351028, %v2819
        %v2829 = vshrl.u32 2102212464, %v2820
        %v2830 = vor.u32 %v2828, %v2829
        %v2831 = vshll.u32 2102212464, %v2819
        %v2832 = vshrl.u32 920167782, %v2820
        %v2833 = vor.u32 %v2831, %v2832
        %v2834 = vshll.u32 920167782, %v2819
        %v2835 = vshrl.u32 1326507024, %v2820
        %v2836 = vor.u32 %v2834, %v2835
        %vm2837 = vcmp.lt.s32.totalorder %v2818, 1
        %vm2838 = vcmp.lt.s32.totalorder %v2818, 2
        %vm2839 = vcmp.lt.s32.totalorder %v2818, 3
        %vm2840 = vcmp.lt.s32.totalorder %v2818, 4
        %v2841 = vsel %vm2837, %v2821, %v2824
        %v2842 = vsel %vm2840, %v2830, 2102212464
        %v2843 = vsel %vm2839, %v2827, %v2842
        %v2844 = vsel %vm2838, %v2841, %v2843
        %v2845 = vsel %vm2837, %v2824, %v2827
        %v2846 = vsel %vm2840, %v2833, 920167782
        %v2847 = vsel %vm2839, %v2830, %v2846
        %v2848 = vsel %vm2838, %v2845, %v2847
        %v2849 = vsel %vm2837, %v2827, %v2830
        %v2850 = vsel %vm2840, %v2836, 1326507024
        %v2851 = vsel %vm2839, %v2833, %v2850
        %v2852 = vsel %vm2838, %v2849, %v2851
        %v2853 = vshll.u32 %v2813, 8
        %v2854 = vmul.u32.u64.compose %v2853, %v2852
        %v2855 = vextract.low.u32 %v2854
        %v2856 = vextract.high.u32 %v2854
        %v2857 = vmul.u32.u64.compose %v2853, %v2848
        %v2858 = vextract.low.u32 %v2857
        %v2859 = vextract.high.u32 %v2857
        %v2860 = vmul.u32 %v2853, %v2844
        %v2861 = vadd.s32 %v2856, %v2858
        %vm2862 = vc.u32 %v2856, %v2858
        %v2863 = vadd.s32 %v2859, 1
        %v2864 = vsel %vm2862, %v2863, %v2859
        %v2865 = vadd.s32 %v2860, %v2864
        %v2866 = vadd.s32 %v2865, 536870912
        %v2867 = vshrl.u32 %v2866, 30
        %v2868 = vshll.u32 %v2867, 30
        %v2869 = vsub.s32 %v2865, %v2868
        %vm2870 = vcmp.lt.s32.totalorder %v2869, 0
        %v2871 = vsub.s32 0, %v2869
        %v2872 = vsel %vm2870, %v2871, %v2869
        %v2873 = vclz %v2872
        %v2874 = vsub.s32 %v2873, 2
        %vm2875 = vcmp.gt.s32.totalorder 0, %v2874
        %v2876 = vsel %vm2875, 0, %v2874
        %v2877 = vsub.s32 32, %v2876
        %v2878 = vshll.u32 %v2869, %v2876
        %v2879 = vshrl.u32 %v2861, %v2877
        %v2880 = vor.u32 %v2878, %v2879
        %v2881 = vsub.s32 4294967266, %v2876
        %v2882 = vadd.s32 %v2881, 127
        %v2883 = vshll.u32 %v2882, 23
        %v2884 = vor.u32 4788187, %v2883
        %v2885 = vand.u32 2147483647, %v2884
        %v2887 = vcvt.s32.f32 %v2880
        %v2888 = vmul.f32 %v2887, %v2885
        %v2889 = vxor.u32 %v2888, 2147483648
        %v2890 = vsel %vm2807, %v2889, %v2888
        %v2891 = vsub.s32 4, %v2867
        %v2892 = vsel %vm2807, %v2891, %v2867
        %v2893 = vsel %vm2806, %v507, %v2890
        %v2894 = vsel %vm2806, 0, %v2892
        %v2895 = vcosq.f32.pop %v2893
        %v2896 = vsinq.f32.pop %v2893
        %vm2897 = vweird.f32 %v507
        %v2898 = vadd.s32 %v2894, 3
        %v2899 = vand.u32 %v2898, 3
        %vm2900 = vcmp.lt.s32.totalorder %v2899, 2
        %vm2901 = vcmp.eq.s32.totalorder %v2899, 0
        %v2902 = vxor.u32 %v2896, 2147483648
        %v2903 = vsel %vm2901, %v2895, %v2902
        %vm2904 = vcmp.eq.s32.totalorder %v2899, 2
        %v2905 = vxor.u32 %v2895, 2147483648
        %v2906 = vsel %vm2904, %v2905, %v2896
        %v2907 = vsel %vm2900, %v2903, %v2906
        %v2908 = vsel %vm2897, nan, %v2907
        %v2909 = vand.u32 2147483647, %v508
        %vm2910 = vcmp.le.f32.partialorder %v2909, 0.7853982
        %vm2911 = vcmp.lt.s32.totalorder %v508, 0
        %v2912 = vand.u32 %v508, 2139095040
        %v2913 = vshrl.u32 %v2912, 23
        %v2914 = vsub.s32 %v2913, 127
        %v2915 = vand.u32 2147483647, %v508
        %v2916 = vand.u32 %v2915, 8388607
        %v2917 = vor.u32 %v2916, 8388608
        %v2918 = vsub.s32 0, %v2917
        %v2919 = vadd.s32 %v2914, 1
        %vm2920 = vcmp.gt.s32.totalorder %v2919, 0
        %v2921 = vsel %vm2920, %v2919, 0
        %v2922 = vshrl.u32 %v2921, 5
        %v2923 = vand.u32 %v2921, 31
        %v2924 = vsub.s32 32, %v2923
        %v2925 = vshrl.u32 683565275, %v2924
        %v2926 = vshll.u32 683565275, %v2923
        %v2927 = vshrl.u32 2475754826, %v2924
        %v2928 = vor.u32 %v2926, %v2927
        %v2929 = vshll.u32 2475754826, %v2923
        %v2930 = vshrl.u32 2131351028, %v2924
        %v2931 = vor.u32 %v2929, %v2930
        %v2932 = vshll.u32 2131351028, %v2923
        %v2933 = vshrl.u32 2102212464, %v2924
        %v2934 = vor.u32 %v2932, %v2933
        %v2935 = vshll.u32 2102212464, %v2923
        %v2936 = vshrl.u32 920167782, %v2924
        %v2937 = vor.u32 %v2935, %v2936
        %v2938 = vshll.u32 920167782, %v2923
        %v2939 = vshrl.u32 1326507024, %v2924
        %v2940 = vor.u32 %v2938, %v2939
        %vm2941 = vcmp.lt.s32.totalorder %v2922, 1
        %vm2942 = vcmp.lt.s32.totalorder %v2922, 2
        %vm2943 = vcmp.lt.s32.totalorder %v2922, 3
        %vm2944 = vcmp.lt.s32.totalorder %v2922, 4
        %v2945 = vsel %vm2941, %v2925, %v2928
        %v2946 = vsel %vm2944, %v2934, 2102212464
        %v2947 = vsel %vm2943, %v2931, %v2946
        %v2948 = vsel %vm2942, %v2945, %v2947
        %v2949 = vsel %vm2941, %v2928, %v2931
        %v2950 = vsel %vm2944, %v2937, 920167782
        %v2951 = vsel %vm2943, %v2934, %v2950
        %v2952 = vsel %vm2942, %v2949, %v2951
        %v2953 = vsel %vm2941, %v2931, %v2934
        %v2954 = vsel %vm2944, %v2940, 1326507024
        %v2955 = vsel %vm2943, %v2937, %v2954
        %v2956 = vsel %vm2942, %v2953, %v2955
        %v2957 = vshll.u32 %v2917, 8
        %v2958 = vmul.u32.u64.compose %v2957, %v2956
        %v2959 = vextract.low.u32 %v2958
        %v2960 = vextract.high.u32 %v2958
        %v2961 = vmul.u32.u64.compose %v2957, %v2952
        %v2962 = vextract.low.u32 %v2961
        %v2963 = vextract.high.u32 %v2961
        %v2964 = vmul.u32 %v2957, %v2948
        %v2965 = vadd.s32 %v2960, %v2962
        %vm2966 = vc.u32 %v2960, %v2962
        %v2967 = vadd.s32 %v2963, 1
        %v2968 = vsel %vm2966, %v2967, %v2963
        %v2969 = vadd.s32 %v2964, %v2968
        %v2970 = vadd.s32 %v2969, 536870912
        %v2971 = vshrl.u32 %v2970, 30
        %v2972 = vshll.u32 %v2971, 30
        %v2973 = vsub.s32 %v2969, %v2972
        %vm2974 = vcmp.lt.s32.totalorder %v2973, 0
        %v2975 = vsub.s32 0, %v2973
        %v2976 = vsel %vm2974, %v2975, %v2973
        %v2977 = vclz %v2976
        %v2978 = vsub.s32 %v2977, 2
        %vm2979 = vcmp.gt.s32.totalorder 0, %v2978
        %v2980 = vsel %vm2979, 0, %v2978
        %v2981 = vsub.s32 32, %v2980
        %v2982 = vshll.u32 %v2973, %v2980
        %v2983 = vshrl.u32 %v2965, %v2981
        %v2984 = vor.u32 %v2982, %v2983
        %v2985 = vsub.s32 4294967266, %v2980
        %v2986 = vadd.s32 %v2985, 127
        %v2987 = vshll.u32 %v2986, 23
        %v2988 = vor.u32 4788187, %v2987
        %v2989 = vand.u32 2147483647, %v2988
        %v2991 = vcvt.s32.f32 %v2984
        %v2992 = vmul.f32 %v2991, %v2989
        %v2993 = vxor.u32 %v2992, 2147483648
        %v2994 = vsel %vm2911, %v2993, %v2992
        %v2995 = vsub.s32 4, %v2971
        %v2996 = vsel %vm2911, %v2995, %v2971
        %v2997 = vsel %vm2910, %v508, %v2994
        %v2998 = vsel %vm2910, 0, %v2996
        %v2999 = vcosq.f32.pop %v2997
        %v3000 = vsinq.f32.pop %v2997
        %vm3001 = vweird.f32 %v508
        %v3002 = vadd.s32 %v2998, 3
        %v3003 = vand.u32 %v3002, 3
        %vm3004 = vcmp.lt.s32.totalorder %v3003, 2
        %vm3005 = vcmp.eq.s32.totalorder %v3003, 0
        %v3006 = vxor.u32 %v3000, 2147483648
        %v3007 = vsel %vm3005, %v2999, %v3006
        %vm3008 = vcmp.eq.s32.totalorder %v3003, 2
        %v3009 = vxor.u32 %v2999, 2147483648
        %v3010 = vsel %vm3008, %v3009, %v3000
        %v3011 = vsel %vm3004, %v3007, %v3010
        %v3012 = vsel %vm3001, nan, %v3011
        %v3013 = vand.u32 2147483647, %v509
        %vm3014 = vcmp.le.f32.partialorder %v3013, 0.7853982
        %vm3015 = vcmp.lt.s32.totalorder %v509, 0
        %v3016 = vand.u32 %v509, 2139095040
        %v3017 = vshrl.u32 %v3016, 23
        %v3018 = vsub.s32 %v3017, 127
        %v3019 = vand.u32 2147483647, %v509
        %v3020 = vand.u32 %v3019, 8388607
        %v3021 = vor.u32 %v3020, 8388608
        %v3022 = vsub.s32 0, %v3021
        %v3023 = vadd.s32 %v3018, 1
        %vm3024 = vcmp.gt.s32.totalorder %v3023, 0
        %v3025 = vsel %vm3024, %v3023, 0
        %v3026 = vshrl.u32 %v3025, 5
        %v3027 = vand.u32 %v3025, 31
        %v3028 = vsub.s32 32, %v3027
        %v3029 = vshrl.u32 683565275, %v3028
        %v3030 = vshll.u32 683565275, %v3027
        %v3031 = vshrl.u32 2475754826, %v3028
        %v3032 = vor.u32 %v3030, %v3031
        %v3033 = vshll.u32 2475754826, %v3027
        %v3034 = vshrl.u32 2131351028, %v3028
        %v3035 = vor.u32 %v3033, %v3034
        %v3036 = vshll.u32 2131351028, %v3027
        %v3037 = vshrl.u32 2102212464, %v3028
        %v3038 = vor.u32 %v3036, %v3037
        %v3039 = vshll.u32 2102212464, %v3027
        %v3040 = vshrl.u32 920167782, %v3028
        %v3041 = vor.u32 %v3039, %v3040
        %v3042 = vshll.u32 920167782, %v3027
        %v3043 = vshrl.u32 1326507024, %v3028
        %v3044 = vor.u32 %v3042, %v3043
        %vm3045 = vcmp.lt.s32.totalorder %v3026, 1
        %vm3046 = vcmp.lt.s32.totalorder %v3026, 2
        %vm3047 = vcmp.lt.s32.totalorder %v3026, 3
        %vm3048 = vcmp.lt.s32.totalorder %v3026, 4
        %v3049 = vsel %vm3045, %v3029, %v3032
        %v3050 = vsel %vm3048, %v3038, 2102212464
        %v3051 = vsel %vm3047, %v3035, %v3050
        %v3052 = vsel %vm3046, %v3049, %v3051
        %v3053 = vsel %vm3045, %v3032, %v3035
        %v3054 = vsel %vm3048, %v3041, 920167782
        %v3055 = vsel %vm3047, %v3038, %v3054
        %v3056 = vsel %vm3046, %v3053, %v3055
        %v3057 = vsel %vm3045, %v3035, %v3038
        %v3058 = vsel %vm3048, %v3044, 1326507024
        %v3059 = vsel %vm3047, %v3041, %v3058
        %v3060 = vsel %vm3046, %v3057, %v3059
        %v3061 = vshll.u32 %v3021, 8
        %v3062 = vmul.u32.u64.compose %v3061, %v3060
        %v3063 = vextract.low.u32 %v3062
        %v3064 = vextract.high.u32 %v3062
        %v3065 = vmul.u32.u64.compose %v3061, %v3056
        %v3066 = vextract.low.u32 %v3065
        %v3067 = vextract.high.u32 %v3065
        %v3068 = vmul.u32 %v3061, %v3052
        %v3069 = vadd.s32 %v3064, %v3066
        %vm3070 = vc.u32 %v3064, %v3066
        %v3071 = vadd.s32 %v3067, 1
        %v3072 = vsel %vm3070, %v3071, %v3067
        %v3073 = vadd.s32 %v3068, %v3072
        %v3074 = vadd.s32 %v3073, 536870912
        %v3075 = vshrl.u32 %v3074, 30
        %v3076 = vshll.u32 %v3075, 30
        %v3077 = vsub.s32 %v3073, %v3076
        %vm3078 = vcmp.lt.s32.totalorder %v3077, 0
        %v3079 = vsub.s32 0, %v3077
        %v3080 = vsel %vm3078, %v3079, %v3077
        %v3081 = vclz %v3080
        %v3082 = vsub.s32 %v3081, 2
        %vm3083 = vcmp.gt.s32.totalorder 0, %v3082
        %v3084 = vsel %vm3083, 0, %v3082
        %v3085 = vsub.s32 32, %v3084
        %v3086 = vshll.u32 %v3077, %v3084
        %v3087 = vshrl.u32 %v3069, %v3085
        %v3088 = vor.u32 %v3086, %v3087
        %v3089 = vsub.s32 4294967266, %v3084
        %v3090 = vadd.s32 %v3089, 127
        %v3091 = vshll.u32 %v3090, 23
        %v3092 = vor.u32 4788187, %v3091
        %v3093 = vand.u32 2147483647, %v3092
        %v3095 = vcvt.s32.f32 %v3088
        %v3096 = vmul.f32 %v3095, %v3093
        %v3097 = vxor.u32 %v3096, 2147483648
        %v3098 = vsel %vm3015, %v3097, %v3096
        %v3099 = vsub.s32 4, %v3075
        %v3100 = vsel %vm3015, %v3099, %v3075
        %v3101 = vsel %vm3014, %v509, %v3098
        %v3102 = vsel %vm3014, 0, %v3100
        %v3103 = vcosq.f32.pop %v3101
        %v3104 = vsinq.f32.pop %v3101
        %vm3105 = vweird.f32 %v509
        %v3106 = vadd.s32 %v3102, 3
        %v3107 = vand.u32 %v3106, 3
        %vm3108 = vcmp.lt.s32.totalorder %v3107, 2
        %vm3109 = vcmp.eq.s32.totalorder %v3107, 0
        %v3110 = vxor.u32 %v3104, 2147483648
        %v3111 = vsel %vm3109, %v3103, %v3110
        %vm3112 = vcmp.eq.s32.totalorder %v3107, 2
        %v3113 = vxor.u32 %v3103, 2147483648
        %v3114 = vsel %vm3112, %v3113, %v3104
        %v3115 = vsel %vm3108, %v3111, %v3114
        %v3116 = vsel %vm3105, nan, %v3115
        %v3117 = vand.u32 2147483647, %v510
        %vm3118 = vcmp.le.f32.partialorder %v3117, 0.7853982
        %vm3119 = vcmp.lt.s32.totalorder %v510, 0
        %v3120 = vand.u32 %v510, 2139095040
        %v3121 = vshrl.u32 %v3120, 23
        %v3122 = vsub.s32 %v3121, 127
        %v3123 = vand.u32 2147483647, %v510
        %v3124 = vand.u32 %v3123, 8388607
        %v3125 = vor.u32 %v3124, 8388608
        %v3126 = vsub.s32 0, %v3125
        %v3127 = vadd.s32 %v3122, 1
        %vm3128 = vcmp.gt.s32.totalorder %v3127, 0
        %v3129 = vsel %vm3128, %v3127, 0
        %v3130 = vshrl.u32 %v3129, 5
        %v3131 = vand.u32 %v3129, 31
        %v3132 = vsub.s32 32, %v3131
        %v3133 = vshrl.u32 683565275, %v3132
        %v3134 = vshll.u32 683565275, %v3131
        %v3135 = vshrl.u32 2475754826, %v3132
        %v3136 = vor.u32 %v3134, %v3135
        %v3137 = vshll.u32 2475754826, %v3131
        %v3138 = vshrl.u32 2131351028, %v3132
        %v3139 = vor.u32 %v3137, %v3138
        %v3140 = vshll.u32 2131351028, %v3131
        %v3141 = vshrl.u32 2102212464, %v3132
        %v3142 = vor.u32 %v3140, %v3141
        %v3143 = vshll.u32 2102212464, %v3131
        %v3144 = vshrl.u32 920167782, %v3132
        %v3145 = vor.u32 %v3143, %v3144
        %v3146 = vshll.u32 920167782, %v3131
        %v3147 = vshrl.u32 1326507024, %v3132
        %v3148 = vor.u32 %v3146, %v3147
        %vm3149 = vcmp.lt.s32.totalorder %v3130, 1
        %vm3150 = vcmp.lt.s32.totalorder %v3130, 2
        %vm3151 = vcmp.lt.s32.totalorder %v3130, 3
        %vm3152 = vcmp.lt.s32.totalorder %v3130, 4
        %v3153 = vsel %vm3149, %v3133, %v3136
        %v3154 = vsel %vm3152, %v3142, 2102212464
        %v3155 = vsel %vm3151, %v3139, %v3154
        %v3156 = vsel %vm3150, %v3153, %v3155
        %v3157 = vsel %vm3149, %v3136, %v3139
        %v3158 = vsel %vm3152, %v3145, 920167782
        %v3159 = vsel %vm3151, %v3142, %v3158
        %v3160 = vsel %vm3150, %v3157, %v3159
        %v3161 = vsel %vm3149, %v3139, %v3142
        %v3162 = vsel %vm3152, %v3148, 1326507024
        %v3163 = vsel %vm3151, %v3145, %v3162
        %v3164 = vsel %vm3150, %v3161, %v3163
        %v3165 = vshll.u32 %v3125, 8
        %v3166 = vmul.u32.u64.compose %v3165, %v3164
        %v3167 = vextract.low.u32 %v3166
        %v3168 = vextract.high.u32 %v3166
        %v3169 = vmul.u32.u64.compose %v3165, %v3160
        %v3170 = vextract.low.u32 %v3169
        %v3171 = vextract.high.u32 %v3169
        %v3172 = vmul.u32 %v3165, %v3156
        %v3173 = vadd.s32 %v3168, %v3170
        %vm3174 = vc.u32 %v3168, %v3170
        %v3175 = vadd.s32 %v3171, 1
        %v3176 = vsel %vm3174, %v3175, %v3171
        %v3177 = vadd.s32 %v3172, %v3176
        %v3178 = vadd.s32 %v3177, 536870912
        %v3179 = vshrl.u32 %v3178, 30
        %v3180 = vshll.u32 %v3179, 30
        %v3181 = vsub.s32 %v3177, %v3180
        %vm3182 = vcmp.lt.s32.totalorder %v3181, 0
        %v3183 = vsub.s32 0, %v3181
        %v3184 = vsel %vm3182, %v3183, %v3181
        %v3185 = vclz %v3184
        %v3186 = vsub.s32 %v3185, 2
        %vm3187 = vcmp.gt.s32.totalorder 0, %v3186
        %v3188 = vsel %vm3187, 0, %v3186
        %v3189 = vsub.s32 32, %v3188
        %v3190 = vshll.u32 %v3181, %v3188
        %v3191 = vshrl.u32 %v3173, %v3189
        %v3192 = vor.u32 %v3190, %v3191
        %v3193 = vsub.s32 4294967266, %v3188
        %v3194 = vadd.s32 %v3193, 127
        %v3195 = vshll.u32 %v3194, 23
        %v3196 = vor.u32 4788187, %v3195
        %v3197 = vand.u32 2147483647, %v3196
        %v3199 = vcvt.s32.f32 %v3192
        %v3200 = vmul.f32 %v3199, %v3197
        %v3201 = vxor.u32 %v3200, 2147483648
        %v3202 = vsel %vm3119, %v3201, %v3200
        %v3203 = vsub.s32 4, %v3179
        %v3204 = vsel %vm3119, %v3203, %v3179
        %v3205 = vsel %vm3118, %v510, %v3202
        %v3206 = vsel %vm3118, 0, %v3204
        %v3207 = vcosq.f32.pop %v3205
        %v3208 = vsinq.f32.pop %v3205
        %vm3209 = vweird.f32 %v510
        %v3210 = vadd.s32 %v3206, 3
        %v3211 = vand.u32 %v3210, 3
        %vm3212 = vcmp.lt.s32.totalorder %v3211, 2
        %vm3213 = vcmp.eq.s32.totalorder %v3211, 0
        %v3214 = vxor.u32 %v3208, 2147483648
        %v3215 = vsel %vm3213, %v3207, %v3214
        %vm3216 = vcmp.eq.s32.totalorder %v3211, 2
        %v3217 = vxor.u32 %v3207, 2147483648
        %v3218 = vsel %vm3216, %v3217, %v3208
        %v3219 = vsel %vm3212, %v3215, %v3218
        %v3220 = vsel %vm3209, nan, %v3219
        %v3221 = vand.u32 2147483647, %v511
        %vm3222 = vcmp.le.f32.partialorder %v3221, 0.7853982
        %vm3223 = vcmp.lt.s32.totalorder %v511, 0
        %v3224 = vand.u32 %v511, 2139095040
        %v3225 = vshrl.u32 %v3224, 23
        %v3226 = vsub.s32 %v3225, 127
        %v3227 = vand.u32 2147483647, %v511
        %v3228 = vand.u32 %v3227, 8388607
        %v3229 = vor.u32 %v3228, 8388608
        %v3230 = vsub.s32 0, %v3229
        %v3231 = vadd.s32 %v3226, 1
        %vm3232 = vcmp.gt.s32.totalorder %v3231, 0
        %v3233 = vsel %vm3232, %v3231, 0
        %v3234 = vshrl.u32 %v3233, 5
        %v3235 = vand.u32 %v3233, 31
        %v3236 = vsub.s32 32, %v3235
        %v3237 = vshrl.u32 683565275, %v3236
        %v3238 = vshll.u32 683565275, %v3235
        %v3239 = vshrl.u32 2475754826, %v3236
        %v3240 = vor.u32 %v3238, %v3239
        %v3241 = vshll.u32 2475754826, %v3235
        %v3242 = vshrl.u32 2131351028, %v3236
        %v3243 = vor.u32 %v3241, %v3242
        %v3244 = vshll.u32 2131351028, %v3235
        %v3245 = vshrl.u32 2102212464, %v3236
        %v3246 = vor.u32 %v3244, %v3245
        %v3247 = vshll.u32 2102212464, %v3235
        %v3248 = vshrl.u32 920167782, %v3236
        %v3249 = vor.u32 %v3247, %v3248
        %v3250 = vshll.u32 920167782, %v3235
        %v3251 = vshrl.u32 1326507024, %v3236
        %v3252 = vor.u32 %v3250, %v3251
        %vm3253 = vcmp.lt.s32.totalorder %v3234, 1
        %vm3254 = vcmp.lt.s32.totalorder %v3234, 2
        %vm3255 = vcmp.lt.s32.totalorder %v3234, 3
        %vm3256 = vcmp.lt.s32.totalorder %v3234, 4
        %v3257 = vsel %vm3253, %v3237, %v3240
        %v3258 = vsel %vm3256, %v3246, 2102212464
        %v3259 = vsel %vm3255, %v3243, %v3258
        %v3260 = vsel %vm3254, %v3257, %v3259
        %v3261 = vsel %vm3253, %v3240, %v3243
        %v3262 = vsel %vm3256, %v3249, 920167782
        %v3263 = vsel %vm3255, %v3246, %v3262
        %v3264 = vsel %vm3254, %v3261, %v3263
        %v3265 = vsel %vm3253, %v3243, %v3246
        %v3266 = vsel %vm3256, %v3252, 1326507024
        %v3267 = vsel %vm3255, %v3249, %v3266
        %v3268 = vsel %vm3254, %v3265, %v3267
        %v3269 = vshll.u32 %v3229, 8
        %v3270 = vmul.u32.u64.compose %v3269, %v3268
        %v3271 = vextract.low.u32 %v3270
        %v3272 = vextract.high.u32 %v3270
        %v3273 = vmul.u32.u64.compose %v3269, %v3264
        %v3274 = vextract.low.u32 %v3273
        %v3275 = vextract.high.u32 %v3273
        %v3276 = vmul.u32 %v3269, %v3260
        %v3277 = vadd.s32 %v3272, %v3274
        %vm3278 = vc.u32 %v3272, %v3274
        %v3279 = vadd.s32 %v3275, 1
        %v3280 = vsel %vm3278, %v3279, %v3275
        %v3281 = vadd.s32 %v3276, %v3280
        %v3282 = vadd.s32 %v3281, 536870912
        %v3283 = vshrl.u32 %v3282, 30
        %v3284 = vshll.u32 %v3283, 30
        %v3285 = vsub.s32 %v3281, %v3284
        %vm3286 = vcmp.lt.s32.totalorder %v3285, 0
        %v3287 = vsub.s32 0, %v3285
        %v3288 = vsel %vm3286, %v3287, %v3285
        %v3289 = vclz %v3288
        %v3290 = vsub.s32 %v3289, 2
        %vm3291 = vcmp.gt.s32.totalorder 0, %v3290
        %v3292 = vsel %vm3291, 0, %v3290
        %v3293 = vsub.s32 32, %v3292
        %v3294 = vshll.u32 %v3285, %v3292
        %v3295 = vshrl.u32 %v3277, %v3293
        %v3296 = vor.u32 %v3294, %v3295
        %v3297 = vsub.s32 4294967266, %v3292
        %v3298 = vadd.s32 %v3297, 127
        %v3299 = vshll.u32 %v3298, 23
        %v3300 = vor.u32 4788187, %v3299
        %v3301 = vand.u32 2147483647, %v3300
        %v3303 = vcvt.s32.f32 %v3296
        %v3304 = vmul.f32 %v3303, %v3301
        %v3305 = vxor.u32 %v3304, 2147483648
        %v3306 = vsel %vm3223, %v3305, %v3304
        %v3307 = vsub.s32 4, %v3283
        %v3308 = vsel %vm3223, %v3307, %v3283
        %v3309 = vsel %vm3222, %v511, %v3306
        %v3310 = vsel %vm3222, 0, %v3308
        %v3311 = vcosq.f32.pop %v3309
        %v3312 = vsinq.f32.pop %v3309
        %vm3313 = vweird.f32 %v511
        %v3314 = vadd.s32 %v3310, 3
        %v3315 = vand.u32 %v3314, 3
        %vm3316 = vcmp.lt.s32.totalorder %v3315, 2
        %vm3317 = vcmp.eq.s32.totalorder %v3315, 0
        %v3318 = vxor.u32 %v3312, 2147483648
        %v3319 = vsel %vm3317, %v3311, %v3318
        %vm3320 = vcmp.eq.s32.totalorder %v3315, 2
        %v3321 = vxor.u32 %v3311, 2147483648
        %v3322 = vsel %vm3320, %v3321, %v3312
        %v3323 = vsel %vm3316, %v3319, %v3322
        %v3324 = vsel %vm3313, nan, %v3323
        %v3325 = vand.u32 2147483647, %v512
        %vm3326 = vcmp.le.f32.partialorder %v3325, 0.7853982
        %vm3327 = vcmp.lt.s32.totalorder %v512, 0
        %v3328 = vand.u32 %v512, 2139095040
        %v3329 = vshrl.u32 %v3328, 23
        %v3330 = vsub.s32 %v3329, 127
        %v3331 = vand.u32 2147483647, %v512
        %v3332 = vand.u32 %v3331, 8388607
        %v3333 = vor.u32 %v3332, 8388608
        %v3334 = vsub.s32 0, %v3333
        %v3335 = vadd.s32 %v3330, 1
        %vm3336 = vcmp.gt.s32.totalorder %v3335, 0
        %v3337 = vsel %vm3336, %v3335, 0
        %v3338 = vshrl.u32 %v3337, 5
        %v3339 = vand.u32 %v3337, 31
        %v3340 = vsub.s32 32, %v3339
        %v3341 = vshrl.u32 683565275, %v3340
        %v3342 = vshll.u32 683565275, %v3339
        %v3343 = vshrl.u32 2475754826, %v3340
        %v3344 = vor.u32 %v3342, %v3343
        %v3345 = vshll.u32 2475754826, %v3339
        %v3346 = vshrl.u32 2131351028, %v3340
        %v3347 = vor.u32 %v3345, %v3346
        %v3348 = vshll.u32 2131351028, %v3339
        %v3349 = vshrl.u32 2102212464, %v3340
        %v3350 = vor.u32 %v3348, %v3349
        %v3351 = vshll.u32 2102212464, %v3339
        %v3352 = vshrl.u32 920167782, %v3340
        %v3353 = vor.u32 %v3351, %v3352
        %v3354 = vshll.u32 920167782, %v3339
        %v3355 = vshrl.u32 1326507024, %v3340
        %v3356 = vor.u32 %v3354, %v3355
        %vm3357 = vcmp.lt.s32.totalorder %v3338, 1
        %vm3358 = vcmp.lt.s32.totalorder %v3338, 2
        %vm3359 = vcmp.lt.s32.totalorder %v3338, 3
        %vm3360 = vcmp.lt.s32.totalorder %v3338, 4
        %v3361 = vsel %vm3357, %v3341, %v3344
        %v3362 = vsel %vm3360, %v3350, 2102212464
        %v3363 = vsel %vm3359, %v3347, %v3362
        %v3364 = vsel %vm3358, %v3361, %v3363
        %v3365 = vsel %vm3357, %v3344, %v3347
        %v3366 = vsel %vm3360, %v3353, 920167782
        %v3367 = vsel %vm3359, %v3350, %v3366
        %v3368 = vsel %vm3358, %v3365, %v3367
        %v3369 = vsel %vm3357, %v3347, %v3350
        %v3370 = vsel %vm3360, %v3356, 1326507024
        %v3371 = vsel %vm3359, %v3353, %v3370
        %v3372 = vsel %vm3358, %v3369, %v3371
        %v3373 = vshll.u32 %v3333, 8
        %v3374 = vmul.u32.u64.compose %v3373, %v3372
        %v3375 = vextract.low.u32 %v3374
        %v3376 = vextract.high.u32 %v3374
        %v3377 = vmul.u32.u64.compose %v3373, %v3368
        %v3378 = vextract.low.u32 %v3377
        %v3379 = vextract.high.u32 %v3377
        %v3380 = vmul.u32 %v3373, %v3364
        %v3381 = vadd.s32 %v3376, %v3378
        %vm3382 = vc.u32 %v3376, %v3378
        %v3383 = vadd.s32 %v3379, 1
        %v3384 = vsel %vm3382, %v3383, %v3379
        %v3385 = vadd.s32 %v3380, %v3384
        %v3386 = vadd.s32 %v3385, 536870912
        %v3387 = vshrl.u32 %v3386, 30
        %v3388 = vshll.u32 %v3387, 30
        %v3389 = vsub.s32 %v3385, %v3388
        %vm3390 = vcmp.lt.s32.totalorder %v3389, 0
        %v3391 = vsub.s32 0, %v3389
        %v3392 = vsel %vm3390, %v3391, %v3389
        %v3393 = vclz %v3392
        %v3394 = vsub.s32 %v3393, 2
        %vm3395 = vcmp.gt.s32.totalorder 0, %v3394
        %v3396 = vsel %vm3395, 0, %v3394
        %v3397 = vsub.s32 32, %v3396
        %v3398 = vshll.u32 %v3389, %v3396
        %v3399 = vshrl.u32 %v3381, %v3397
        %v3400 = vor.u32 %v3398, %v3399
        %v3401 = vsub.s32 4294967266, %v3396
        %v3402 = vadd.s32 %v3401, 127
        %v3403 = vshll.u32 %v3402, 23
        %v3404 = vor.u32 4788187, %v3403
        %v3405 = vand.u32 2147483647, %v3404
        %v3407 = vcvt.s32.f32 %v3400
        %v3408 = vmul.f32 %v3407, %v3405
        %v3409 = vxor.u32 %v3408, 2147483648
        %v3410 = vsel %vm3327, %v3409, %v3408
        %v3411 = vsub.s32 4, %v3387
        %v3412 = vsel %vm3327, %v3411, %v3387
        %v3413 = vsel %vm3326, %v512, %v3410
        %v3414 = vsel %vm3326, 0, %v3412
        %v3415 = vcosq.f32.pop %v3413
        %v3416 = vsinq.f32.pop %v3413
        %vm3417 = vweird.f32 %v512
        %v3418 = vadd.s32 %v3414, 3
        %v3419 = vand.u32 %v3418, 3
        %vm3420 = vcmp.lt.s32.totalorder %v3419, 2
        %vm3421 = vcmp.eq.s32.totalorder %v3419, 0
        %v3422 = vxor.u32 %v3416, 2147483648
        %v3423 = vsel %vm3421, %v3415, %v3422
        %vm3424 = vcmp.eq.s32.totalorder %v3419, 2
        %v3425 = vxor.u32 %v3415, 2147483648
        %v3426 = vsel %vm3424, %v3425, %v3416
        %v3427 = vsel %vm3420, %v3423, %v3426
        %v3428 = vsel %vm3417, nan, %v3427
        %v3429 = vand.u32 2147483647, %v513
        %vm3430 = vcmp.le.f32.partialorder %v3429, 0.7853982
        %vm3431 = vcmp.lt.s32.totalorder %v513, 0
        %v3432 = vand.u32 %v513, 2139095040
        %v3433 = vshrl.u32 %v3432, 23
        %v3434 = vsub.s32 %v3433, 127
        %v3435 = vand.u32 2147483647, %v513
        %v3436 = vand.u32 %v3435, 8388607
        %v3437 = vor.u32 %v3436, 8388608
        %v3438 = vsub.s32 0, %v3437
        %v3439 = vadd.s32 %v3434, 1
        %vm3440 = vcmp.gt.s32.totalorder %v3439, 0
        %v3441 = vsel %vm3440, %v3439, 0
        %v3442 = vshrl.u32 %v3441, 5
        %v3443 = vand.u32 %v3441, 31
        %v3444 = vsub.s32 32, %v3443
        %v3445 = vshrl.u32 683565275, %v3444
        %v3446 = vshll.u32 683565275, %v3443
        %v3447 = vshrl.u32 2475754826, %v3444
        %v3448 = vor.u32 %v3446, %v3447
        %v3449 = vshll.u32 2475754826, %v3443
        %v3450 = vshrl.u32 2131351028, %v3444
        %v3451 = vor.u32 %v3449, %v3450
        %v3452 = vshll.u32 2131351028, %v3443
        %v3453 = vshrl.u32 2102212464, %v3444
        %v3454 = vor.u32 %v3452, %v3453
        %v3455 = vshll.u32 2102212464, %v3443
        %v3456 = vshrl.u32 920167782, %v3444
        %v3457 = vor.u32 %v3455, %v3456
        %v3458 = vshll.u32 920167782, %v3443
        %v3459 = vshrl.u32 1326507024, %v3444
        %v3460 = vor.u32 %v3458, %v3459
        %vm3461 = vcmp.lt.s32.totalorder %v3442, 1
        %vm3462 = vcmp.lt.s32.totalorder %v3442, 2
        %vm3463 = vcmp.lt.s32.totalorder %v3442, 3
        %vm3464 = vcmp.lt.s32.totalorder %v3442, 4
        %v3465 = vsel %vm3461, %v3445, %v3448
        %v3466 = vsel %vm3464, %v3454, 2102212464
        %v3467 = vsel %vm3463, %v3451, %v3466
        %v3468 = vsel %vm3462, %v3465, %v3467
        %v3469 = vsel %vm3461, %v3448, %v3451
        %v3470 = vsel %vm3464, %v3457, 920167782
        %v3471 = vsel %vm3463, %v3454, %v3470
        %v3472 = vsel %vm3462, %v3469, %v3471
        %v3473 = vsel %vm3461, %v3451, %v3454
        %v3474 = vsel %vm3464, %v3460, 1326507024
        %v3475 = vsel %vm3463, %v3457, %v3474
        %v3476 = vsel %vm3462, %v3473, %v3475
        %v3477 = vshll.u32 %v3437, 8
        %v3478 = vmul.u32.u64.compose %v3477, %v3476
        %v3479 = vextract.low.u32 %v3478
        %v3480 = vextract.high.u32 %v3478
        %v3481 = vmul.u32.u64.compose %v3477, %v3472
        %v3482 = vextract.low.u32 %v3481
        %v3483 = vextract.high.u32 %v3481
        %v3484 = vmul.u32 %v3477, %v3468
        %v3485 = vadd.s32 %v3480, %v3482
        %vm3486 = vc.u32 %v3480, %v3482
        %v3487 = vadd.s32 %v3483, 1
        %v3488 = vsel %vm3486, %v3487, %v3483
        %v3489 = vadd.s32 %v3484, %v3488
        %v3490 = vadd.s32 %v3489, 536870912
        %v3491 = vshrl.u32 %v3490, 30
        %v3492 = vshll.u32 %v3491, 30
        %v3493 = vsub.s32 %v3489, %v3492
        %vm3494 = vcmp.lt.s32.totalorder %v3493, 0
        %v3495 = vsub.s32 0, %v3493
        %v3496 = vsel %vm3494, %v3495, %v3493
        %v3497 = vclz %v3496
        %v3498 = vsub.s32 %v3497, 2
        %vm3499 = vcmp.gt.s32.totalorder 0, %v3498
        %v3500 = vsel %vm3499, 0, %v3498
        %v3501 = vsub.s32 32, %v3500
        %v3502 = vshll.u32 %v3493, %v3500
        %v3503 = vshrl.u32 %v3485, %v3501
        %v3504 = vor.u32 %v3502, %v3503
        %v3505 = vsub.s32 4294967266, %v3500
        %v3506 = vadd.s32 %v3505, 127
        %v3507 = vshll.u32 %v3506, 23
        %v3508 = vor.u32 4788187, %v3507
        %v3509 = vand.u32 2147483647, %v3508
        %v3511 = vcvt.s32.f32 %v3504
        %v3512 = vmul.f32 %v3511, %v3509
        %v3513 = vxor.u32 %v3512, 2147483648
        %v3514 = vsel %vm3431, %v3513, %v3512
        %v3515 = vsub.s32 4, %v3491
        %v3516 = vsel %vm3431, %v3515, %v3491
        %v3517 = vsel %vm3430, %v513, %v3514
        %v3518 = vsel %vm3430, 0, %v3516
        %v3519 = vcosq.f32.pop %v3517
        %v3520 = vsinq.f32.pop %v3517
        %vm3521 = vweird.f32 %v513
        %v3522 = vadd.s32 %v3518, 3
        %v3523 = vand.u32 %v3522, 3
        %vm3524 = vcmp.lt.s32.totalorder %v3523, 2
        %vm3525 = vcmp.eq.s32.totalorder %v3523, 0
        %v3526 = vxor.u32 %v3520, 2147483648
        %v3527 = vsel %vm3525, %v3519, %v3526
        %vm3528 = vcmp.eq.s32.totalorder %v3523, 2
        %v3529 = vxor.u32 %v3519, 2147483648
        %v3530 = vsel %vm3528, %v3529, %v3520
        %v3531 = vsel %vm3524, %v3527, %v3530
        %v3532 = vsel %vm3521, nan, %v3531
        %v3533 = vand.u32 2147483647, %v514
        %vm3534 = vcmp.le.f32.partialorder %v3533, 0.7853982
        %vm3535 = vcmp.lt.s32.totalorder %v514, 0
        %v3536 = vand.u32 %v514, 2139095040
        %v3537 = vshrl.u32 %v3536, 23
        %v3538 = vsub.s32 %v3537, 127
        %v3539 = vand.u32 2147483647, %v514
        %v3540 = vand.u32 %v3539, 8388607
        %v3541 = vor.u32 %v3540, 8388608
        %v3542 = vsub.s32 0, %v3541
        %v3543 = vadd.s32 %v3538, 1
        %vm3544 = vcmp.gt.s32.totalorder %v3543, 0
        %v3545 = vsel %vm3544, %v3543, 0
        %v3546 = vshrl.u32 %v3545, 5
        %v3547 = vand.u32 %v3545, 31
        %v3548 = vsub.s32 32, %v3547
        %v3549 = vshrl.u32 683565275, %v3548
        %v3550 = vshll.u32 683565275, %v3547
        %v3551 = vshrl.u32 2475754826, %v3548
        %v3552 = vor.u32 %v3550, %v3551
        %v3553 = vshll.u32 2475754826, %v3547
        %v3554 = vshrl.u32 2131351028, %v3548
        %v3555 = vor.u32 %v3553, %v3554
        %v3556 = vshll.u32 2131351028, %v3547
        %v3557 = vshrl.u32 2102212464, %v3548
        %v3558 = vor.u32 %v3556, %v3557
        %v3559 = vshll.u32 2102212464, %v3547
        %v3560 = vshrl.u32 920167782, %v3548
        %v3561 = vor.u32 %v3559, %v3560
        %v3562 = vshll.u32 920167782, %v3547
        %v3563 = vshrl.u32 1326507024, %v3548
        %v3564 = vor.u32 %v3562, %v3563
        %vm3565 = vcmp.lt.s32.totalorder %v3546, 1
        %vm3566 = vcmp.lt.s32.totalorder %v3546, 2
        %vm3567 = vcmp.lt.s32.totalorder %v3546, 3
        %vm3568 = vcmp.lt.s32.totalorder %v3546, 4
        %v3569 = vsel %vm3565, %v3549, %v3552
        %v3570 = vsel %vm3568, %v3558, 2102212464
        %v3571 = vsel %vm3567, %v3555, %v3570
        %v3572 = vsel %vm3566, %v3569, %v3571
        %v3573 = vsel %vm3565, %v3552, %v3555
        %v3574 = vsel %vm3568, %v3561, 920167782
        %v3575 = vsel %vm3567, %v3558, %v3574
        %v3576 = vsel %vm3566, %v3573, %v3575
        %v3577 = vsel %vm3565, %v3555, %v3558
        %v3578 = vsel %vm3568, %v3564, 1326507024
        %v3579 = vsel %vm3567, %v3561, %v3578
        %v3580 = vsel %vm3566, %v3577, %v3579
        %v3581 = vshll.u32 %v3541, 8
        %v3582 = vmul.u32.u64.compose %v3581, %v3580
        %v3583 = vextract.low.u32 %v3582
        %v3584 = vextract.high.u32 %v3582
        %v3585 = vmul.u32.u64.compose %v3581, %v3576
        %v3586 = vextract.low.u32 %v3585
        %v3587 = vextract.high.u32 %v3585
        %v3588 = vmul.u32 %v3581, %v3572
        %v3589 = vadd.s32 %v3584, %v3586
        %vm3590 = vc.u32 %v3584, %v3586
        %v3591 = vadd.s32 %v3587, 1
        %v3592 = vsel %vm3590, %v3591, %v3587
        %v3593 = vadd.s32 %v3588, %v3592
        %v3594 = vadd.s32 %v3593, 536870912
        %v3595 = vshrl.u32 %v3594, 30
        %v3596 = vshll.u32 %v3595, 30
        %v3597 = vsub.s32 %v3593, %v3596
        %vm3598 = vcmp.lt.s32.totalorder %v3597, 0
        %v3599 = vsub.s32 0, %v3597
        %v3600 = vsel %vm3598, %v3599, %v3597
        %v3601 = vclz %v3600
        %v3602 = vsub.s32 %v3601, 2
        %vm3603 = vcmp.gt.s32.totalorder 0, %v3602
        %v3604 = vsel %vm3603, 0, %v3602
        %v3605 = vsub.s32 32, %v3604
        %v3606 = vshll.u32 %v3597, %v3604
        %v3607 = vshrl.u32 %v3589, %v3605
        %v3608 = vor.u32 %v3606, %v3607
        %v3609 = vsub.s32 4294967266, %v3604
        %v3610 = vadd.s32 %v3609, 127
        %v3611 = vshll.u32 %v3610, 23
        %v3612 = vor.u32 4788187, %v3611
        %v3613 = vand.u32 2147483647, %v3612
        %v3615 = vcvt.s32.f32 %v3608
        %v3616 = vmul.f32 %v3615, %v3613
        %v3617 = vxor.u32 %v3616, 2147483648
        %v3618 = vsel %vm3535, %v3617, %v3616
        %v3619 = vsub.s32 4, %v3595
        %v3620 = vsel %vm3535, %v3619, %v3595
        %v3621 = vsel %vm3534, %v514, %v3618
        %v3622 = vsel %vm3534, 0, %v3620
        %v3623 = vcosq.f32.pop %v3621
        %v3624 = vsinq.f32.pop %v3621
        %vm3625 = vweird.f32 %v514
        %v3626 = vadd.s32 %v3622, 3
        %v3627 = vand.u32 %v3626, 3
        %vm3628 = vcmp.lt.s32.totalorder %v3627, 2
        %vm3629 = vcmp.eq.s32.totalorder %v3627, 0
        %v3630 = vxor.u32 %v3624, 2147483648
        %v3631 = vsel %vm3629, %v3623, %v3630
        %vm3632 = vcmp.eq.s32.totalorder %v3627, 2
        %v3633 = vxor.u32 %v3623, 2147483648
        %v3634 = vsel %vm3632, %v3633, %v3624
        %v3635 = vsel %vm3628, %v3631, %v3634
        %v3636 = vsel %vm3625, nan, %v3635
        %v3637 = vand.u32 2147483647, %v515
        %vm3638 = vcmp.le.f32.partialorder %v3637, 0.7853982
        %vm3639 = vcmp.lt.s32.totalorder %v515, 0
        %v3640 = vand.u32 %v515, 2139095040
        %v3641 = vshrl.u32 %v3640, 23
        %v3642 = vsub.s32 %v3641, 127
        %v3643 = vand.u32 2147483647, %v515
        %v3644 = vand.u32 %v3643, 8388607
        %v3645 = vor.u32 %v3644, 8388608
        %v3646 = vsub.s32 0, %v3645
        %v3647 = vadd.s32 %v3642, 1
        %vm3648 = vcmp.gt.s32.totalorder %v3647, 0
        %v3649 = vsel %vm3648, %v3647, 0
        %v3650 = vshrl.u32 %v3649, 5
        %v3651 = vand.u32 %v3649, 31
        %v3652 = vsub.s32 32, %v3651
        %v3653 = vshrl.u32 683565275, %v3652
        %v3654 = vshll.u32 683565275, %v3651
        %v3655 = vshrl.u32 2475754826, %v3652
        %v3656 = vor.u32 %v3654, %v3655
        %v3657 = vshll.u32 2475754826, %v3651
        %v3658 = vshrl.u32 2131351028, %v3652
        %v3659 = vor.u32 %v3657, %v3658
        %v3660 = vshll.u32 2131351028, %v3651
        %v3661 = vshrl.u32 2102212464, %v3652
        %v3662 = vor.u32 %v3660, %v3661
        %v3663 = vshll.u32 2102212464, %v3651
        %v3664 = vshrl.u32 920167782, %v3652
        %v3665 = vor.u32 %v3663, %v3664
        %v3666 = vshll.u32 920167782, %v3651
        %v3667 = vshrl.u32 1326507024, %v3652
        %v3668 = vor.u32 %v3666, %v3667
        %vm3669 = vcmp.lt.s32.totalorder %v3650, 1
        %vm3670 = vcmp.lt.s32.totalorder %v3650, 2
        %vm3671 = vcmp.lt.s32.totalorder %v3650, 3
        %vm3672 = vcmp.lt.s32.totalorder %v3650, 4
        %v3673 = vsel %vm3669, %v3653, %v3656
        %v3674 = vsel %vm3672, %v3662, 2102212464
        %v3675 = vsel %vm3671, %v3659, %v3674
        %v3676 = vsel %vm3670, %v3673, %v3675
        %v3677 = vsel %vm3669, %v3656, %v3659
        %v3678 = vsel %vm3672, %v3665, 920167782
        %v3679 = vsel %vm3671, %v3662, %v3678
        %v3680 = vsel %vm3670, %v3677, %v3679
        %v3681 = vsel %vm3669, %v3659, %v3662
        %v3682 = vsel %vm3672, %v3668, 1326507024
        %v3683 = vsel %vm3671, %v3665, %v3682
        %v3684 = vsel %vm3670, %v3681, %v3683
        %v3685 = vshll.u32 %v3645, 8
        %v3686 = vmul.u32.u64.compose %v3685, %v3684
        %v3687 = vextract.low.u32 %v3686
        %v3688 = vextract.high.u32 %v3686
        %v3689 = vmul.u32.u64.compose %v3685, %v3680
        %v3690 = vextract.low.u32 %v3689
        %v3691 = vextract.high.u32 %v3689
        %v3692 = vmul.u32 %v3685, %v3676
        %v3693 = vadd.s32 %v3688, %v3690
        %vm3694 = vc.u32 %v3688, %v3690
        %v3695 = vadd.s32 %v3691, 1
        %v3696 = vsel %vm3694, %v3695, %v3691
        %v3697 = vadd.s32 %v3692, %v3696
        %v3698 = vadd.s32 %v3697, 536870912
        %v3699 = vshrl.u32 %v3698, 30
        %v3700 = vshll.u32 %v3699, 30
        %v3701 = vsub.s32 %v3697, %v3700
        %vm3702 = vcmp.lt.s32.totalorder %v3701, 0
        %v3703 = vsub.s32 0, %v3701
        %v3704 = vsel %vm3702, %v3703, %v3701
        %v3705 = vclz %v3704
        %v3706 = vsub.s32 %v3705, 2
        %vm3707 = vcmp.gt.s32.totalorder 0, %v3706
        %v3708 = vsel %vm3707, 0, %v3706
        %v3709 = vsub.s32 32, %v3708
        %v3710 = vshll.u32 %v3701, %v3708
        %v3711 = vshrl.u32 %v3693, %v3709
        %v3712 = vor.u32 %v3710, %v3711
        %v3713 = vsub.s32 4294967266, %v3708
        %v3714 = vadd.s32 %v3713, 127
        %v3715 = vshll.u32 %v3714, 23
        %v3716 = vor.u32 4788187, %v3715
        %v3717 = vand.u32 2147483647, %v3716
        %v3719 = vcvt.s32.f32 %v3712
        %v3720 = vmul.f32 %v3719, %v3717
        %v3721 = vxor.u32 %v3720, 2147483648
        %v3722 = vsel %vm3639, %v3721, %v3720
        %v3723 = vsub.s32 4, %v3699
        %v3724 = vsel %vm3639, %v3723, %v3699
        %v3725 = vsel %vm3638, %v515, %v3722
        %v3726 = vsel %vm3638, 0, %v3724
        %v3727 = vcosq.f32.pop %v3725
        %v3728 = vsinq.f32.pop %v3725
        %vm3729 = vweird.f32 %v515
        %v3730 = vadd.s32 %v3726, 3
        %v3731 = vand.u32 %v3730, 3
        %vm3732 = vcmp.lt.s32.totalorder %v3731, 2
        %vm3733 = vcmp.eq.s32.totalorder %v3731, 0
        %v3734 = vxor.u32 %v3728, 2147483648
        %v3735 = vsel %vm3733, %v3727, %v3734
        %vm3736 = vcmp.eq.s32.totalorder %v3731, 2
        %v3737 = vxor.u32 %v3727, 2147483648
        %v3738 = vsel %vm3736, %v3737, %v3728
        %v3739 = vsel %vm3732, %v3735, %v3738
        %v3740 = vsel %vm3729, nan, %v3739
        %v3741 = vand.u32 2147483647, %v516
        %vm3742 = vcmp.le.f32.partialorder %v3741, 0.7853982
        %vm3743 = vcmp.lt.s32.totalorder %v516, 0
        %v3744 = vand.u32 %v516, 2139095040
        %v3745 = vshrl.u32 %v3744, 23
        %v3746 = vsub.s32 %v3745, 127
        %v3747 = vand.u32 2147483647, %v516
        %v3748 = vand.u32 %v3747, 8388607
        %v3749 = vor.u32 %v3748, 8388608
        %v3750 = vsub.s32 0, %v3749
        %v3751 = vadd.s32 %v3746, 1
        %vm3752 = vcmp.gt.s32.totalorder %v3751, 0
        %v3753 = vsel %vm3752, %v3751, 0
        %v3754 = vshrl.u32 %v3753, 5
        %v3755 = vand.u32 %v3753, 31
        %v3756 = vsub.s32 32, %v3755
        %v3757 = vshrl.u32 683565275, %v3756
        %v3758 = vshll.u32 683565275, %v3755
        %v3759 = vshrl.u32 2475754826, %v3756
        %v3760 = vor.u32 %v3758, %v3759
        %v3761 = vshll.u32 2475754826, %v3755
        %v3762 = vshrl.u32 2131351028, %v3756
        %v3763 = vor.u32 %v3761, %v3762
        %v3764 = vshll.u32 2131351028, %v3755
        %v3765 = vshrl.u32 2102212464, %v3756
        %v3766 = vor.u32 %v3764, %v3765
        %v3767 = vshll.u32 2102212464, %v3755
        %v3768 = vshrl.u32 920167782, %v3756
        %v3769 = vor.u32 %v3767, %v3768
        %v3770 = vshll.u32 920167782, %v3755
        %v3771 = vshrl.u32 1326507024, %v3756
        %v3772 = vor.u32 %v3770, %v3771
        %vm3773 = vcmp.lt.s32.totalorder %v3754, 1
        %vm3774 = vcmp.lt.s32.totalorder %v3754, 2
        %vm3775 = vcmp.lt.s32.totalorder %v3754, 3
        %vm3776 = vcmp.lt.s32.totalorder %v3754, 4
        %v3777 = vsel %vm3773, %v3757, %v3760
        %v3778 = vsel %vm3776, %v3766, 2102212464
        %v3779 = vsel %vm3775, %v3763, %v3778
        %v3780 = vsel %vm3774, %v3777, %v3779
        %v3781 = vsel %vm3773, %v3760, %v3763
        %v3782 = vsel %vm3776, %v3769, 920167782
        %v3783 = vsel %vm3775, %v3766, %v3782
        %v3784 = vsel %vm3774, %v3781, %v3783
        %v3785 = vsel %vm3773, %v3763, %v3766
        %v3786 = vsel %vm3776, %v3772, 1326507024
        %v3787 = vsel %vm3775, %v3769, %v3786
        %v3788 = vsel %vm3774, %v3785, %v3787
        %v3789 = vshll.u32 %v3749, 8
        %v3790 = vmul.u32.u64.compose %v3789, %v3788
        %v3791 = vextract.low.u32 %v3790
        %v3792 = vextract.high.u32 %v3790
        %v3793 = vmul.u32.u64.compose %v3789, %v3784
        %v3794 = vextract.low.u32 %v3793
        %v3795 = vextract.high.u32 %v3793
        %v3796 = vmul.u32 %v3789, %v3780
        %v3797 = vadd.s32 %v3792, %v3794
        %vm3798 = vc.u32 %v3792, %v3794
        %v3799 = vadd.s32 %v3795, 1
        %v3800 = vsel %vm3798, %v3799, %v3795
        %v3801 = vadd.s32 %v3796, %v3800
        %v3802 = vadd.s32 %v3801, 536870912
        %v3803 = vshrl.u32 %v3802, 30
        %v3804 = vshll.u32 %v3803, 30
        %v3805 = vsub.s32 %v3801, %v3804
        %vm3806 = vcmp.lt.s32.totalorder %v3805, 0
        %v3807 = vsub.s32 0, %v3805
        %v3808 = vsel %vm3806, %v3807, %v3805
        %v3809 = vclz %v3808
        %v3810 = vsub.s32 %v3809, 2
        %vm3811 = vcmp.gt.s32.totalorder 0, %v3810
        %v3812 = vsel %vm3811, 0, %v3810
        %v3813 = vsub.s32 32, %v3812
        %v3814 = vshll.u32 %v3805, %v3812
        %v3815 = vshrl.u32 %v3797, %v3813
        %v3816 = vor.u32 %v3814, %v3815
        %v3817 = vsub.s32 4294967266, %v3812
        %v3818 = vadd.s32 %v3817, 127
        %v3819 = vshll.u32 %v3818, 23
        %v3820 = vor.u32 4788187, %v3819
        %v3821 = vand.u32 2147483647, %v3820
        %v3823 = vcvt.s32.f32 %v3816
        %v3824 = vmul.f32 %v3823, %v3821
        %v3825 = vxor.u32 %v3824, 2147483648
        %v3826 = vsel %vm3743, %v3825, %v3824
        %v3827 = vsub.s32 4, %v3803
        %v3828 = vsel %vm3743, %v3827, %v3803
        %v3829 = vsel %vm3742, %v516, %v3826
        %v3830 = vsel %vm3742, 0, %v3828
        %v3831 = vcosq.f32.pop %v3829
        %v3832 = vsinq.f32.pop %v3829
        %vm3833 = vweird.f32 %v516
        %v3834 = vadd.s32 %v3830, 3
        %v3835 = vand.u32 %v3834, 3
        %vm3836 = vcmp.lt.s32.totalorder %v3835, 2
        %vm3837 = vcmp.eq.s32.totalorder %v3835, 0
        %v3838 = vxor.u32 %v3832, 2147483648
        %v3839 = vsel %vm3837, %v3831, %v3838
        %vm3840 = vcmp.eq.s32.totalorder %v3835, 2
        %v3841 = vxor.u32 %v3831, 2147483648
        %v3842 = vsel %vm3840, %v3841, %v3832
        %v3843 = vsel %vm3836, %v3839, %v3842
        %v3844 = vsel %vm3833, nan, %v3843
        %3845 = vst [vmem:[%s226] sm:$0xff] %v620
        %3846 = vst [vmem:[%s226 + $0x8] sm:$0xff] %v724
        %3847 = vst [vmem:[%s226 + $0x10] sm:$0xff] %v828
        %3848 = vst [vmem:[%s226 + $0x18] sm:$0xff] %v932
        %3849 = vst [vmem:[%s226 + $0x20] sm:$0xff] %v1036
        %3850 = vst [vmem:[%s226 + $0x28] sm:$0xff] %v1140
        %3851 = vst [vmem:[%s226 + $0x30] sm:$0xff] %v1244
        %3852 = vst [vmem:[%s226 + $0x38] sm:$0xff] %v1348
        %3853 = vst [vmem:[%s226 + $0x40] sm:$0xff] %v1452
        %3854 = vst [vmem:[%s226 + $0x48] sm:$0xff] %v1556
        %3855 = vst [vmem:[%s226 + $0x50] sm:$0xff] %v1660
        %3856 = vst [vmem:[%s226 + $0x58] sm:$0xff] %v1764
        %3857 = vst [vmem:[%s226 + $0x60] sm:$0xff] %v1868
        %3858 = vst [vmem:[%s226 + $0x68] sm:$0xff] %v1972
        %3859 = vst [vmem:[%s226 + $0x70] sm:$0xff] %v2076
        %3860 = vst [vmem:[%s226 + $0x78] sm:$0xff] %v2180
        %3861 = vst [vmem:[%s226 + $0x80] sm:$0xff] %v2284
        %3862 = vst [vmem:[%s226 + $0x88] sm:$0xff] %v2388
        %3863 = vst [vmem:[%s226 + $0x90] sm:$0xff] %v2492
        %3864 = vst [vmem:[%s226 + $0x98] sm:$0xff] %v2596
        %3865 = vst [vmem:[%s226 + $0xa0] sm:$0xff] %v2700
        %3866 = vst [vmem:[%s226 + $0xa8] sm:$0xff] %v2804
        %3867 = vst [vmem:[%s226 + $0xb0] sm:$0xff] %v2908
        %3868 = vst [vmem:[%s226 + $0xb8] sm:$0xff] %v3012
        %3869 = vst [vmem:[%s226 + $0xc0] sm:$0xff] %v3116
        %3870 = vst [vmem:[%s226 + $0xc8] sm:$0xff] %v3220
        %3871 = vst [vmem:[%s226 + $0xd0] sm:$0xff] %v3324
        %3872 = vst [vmem:[%s226 + $0xd8] sm:$0xff] %v3428
        %3873 = vst [vmem:[%s226 + $0xe0] sm:$0xff] %v3532
        %3874 = vst [vmem:[%s226 + $0xe8] sm:$0xff] %v3636
        %3875 = vst [vmem:[%s226 + $0xf0] sm:$0xff] %v3740
        %3876 = vst [vmem:[%s226 + $0xf8] sm:$0xff] %v3844
        %s3877 = sand.u32 %s128, 1
        %s3878 = scalar_lea.sflag [#allocation3], %s3877
        %s3879 = sand.u32 %s128, 1
        %s3880 = smul.addr %s3879, 256
        %s3881 = scalar_lea.vmem [#allocation2], %s3880
        // Predicated region
        $region33: #{tpu_custom_call.1} parent=31 // pred_check
          %p3882 = pneg %p138
        $region34: #{tpu_custom_call.1} parent=31 // pred_check_branch
          %3884 = sbr.rel (%p3882) target = $region36
        $region35: #{tpu_custom_call.1} parent=31 // pred_region
          %s3885 = sadd.s32 %s23, %s24
          %s3886 = smul.u32 16, %s3885
          %s3888 = ssub.s32 4096, 4096
          %3889 = vsyncadd %s3878, %s3888
          %s3890 = smul.addr %s3886, 2
          %s3891 = smul.addr %s22, 64
          %s3892 = sadd.s32 %s3890, %s3891
          %s3893 = smul.addr %s3892, 128
          %s3894 = scalar_lea.hbm %s3, %s3893
          %s3895 = sshll.u32 %s3881, 4
          %s3896 = int_to_ptr.vmem [resolvable:$true] %s3895
          %3901 = dma.vmem_to_hbm [thread:$0]  %s3896, 4096, %s3894, %s3878, 256, 256, 16
        $region36: #{tpu_custom_call.1} parent=31 // pred_fallthru
          _
      $region32: #{tpu_custom_call.1} parent=5 // pred_fallthru
        _
      %p3902 = scmp.le.s32.totalorder 2, %s12
      // Predicated region
      $region37: #{tpu_custom_call.1} parent=5 // pred_check
        %p3903 = pneg %p3902
      $region38: #{tpu_custom_call.1} parent=5 // pred_check_branch
        %3905 = sbr.rel (%p3903) target = $region40
      $region39: #{tpu_custom_call.1} parent=5 // pred_region
        %s3906 = ssub.s32 %s12, 2
        // Predicated region
        $region41: #{tpu_custom_call.1} parent=39 // pred_check
          %p3907 = pneg %p144
        $region42: #{tpu_custom_call.1} parent=39 // pred_check_branch
          %3909 = sbr.rel (%p3907) target = $region44
        $region43: #{tpu_custom_call.1} parent=39 // pred_region
          %s3910 = sand.u32 %s129, 1
          %s3911 = scalar_lea.sflag [#allocation3], %s3910
          %s3912 = sand.u32 %s129, 1
          %s3913 = smul.addr %s3912, 256
          %s3914 = scalar_lea.vmem [#allocation2], %s3913
          %3915 = dma.done %s3911, 4096
        $region44: #{tpu_custom_call.1} parent=39 // pred_fallthru
          _
      $region40: #{tpu_custom_call.1} parent=5 // pred_fallthru
        _
    $region6: #{tpu_custom_call.1} parent=1 // loop_footer
      %s16 = sadd.s32 1, %s12
    $region7: #{tpu_custom_call.1} parent=1 // loop_footer_branch
      %11 = sbr.rel target = $region3
    $region8: #{tpu_custom_call.1} parent=1 // loop_exit
      _
    %3916 = vsyncpa [#allocation3], 1
    %s3917 = scalar_lea.sflag [#allocation3], 1
    %3918 = vsyncpa %s3917, 1

</llo_original>
